<compile_context>
chip_gen: v6e
topology: v6e:2x2x1
jax: 0.10.0
libtpu: 0.0.40
codegen_flags: <defaults>
</compile_context>

<pallas_src>
import functools

import numpy as np
import jax
import jax.numpy as jnp
from jax import lax
from jax.experimental import pallas as pl
from jax.experimental.pallas import tpu as pltpu


class Config:
    EMBEDDINGS_SIZE = 32
    TRANSFORMER_KEY_DIM = 16
    NUM_TRANSFORMER_ENCODERS = 2
    NUM_HEADS_PER_TRANSFORMER = 2
    TRANSFORMER_DROP_OUT_PROBA = 0.1  # inference: dropout is identity
    TRANSFORMER_FF_EXPANSION_RATE = 2


SEG = 128  # lane-aligned segment width for each (head, q|k|v') slice


def _round_up(n, m):
    return (n + m - 1) // m * m


def _layer_norm(x, g, b, eps=1e-5):
    mu = jnp.mean(x, axis=-1, keepdims=True)
    var = jnp.mean((x - mu) ** 2, axis=-1, keepdims=True)
    return (x - mu) * lax.rsqrt(var + eps) * g + b


def _softmax_approx(x):
    # internal transformer softmaxes: approx reciprocal -> EUP slot (free)
    m = jnp.max(x, axis=-1, keepdims=True)
    e = jnp.exp(x - m)
    return e * pl.reciprocal(jnp.sum(e, axis=-1, keepdims=True), approx=True)


def testmodel_kernel(L, H, K, B, S, E, F, V,
                     idx_ref, ids_ref, wide_ref, nar_ref, out_ref):
    BS = B * S
    off2 = _round_up(BS, 8)                 # x2 ids start (sublane-aligned)
    off3 = off2 + _round_up(B, 8)           # x3 ids start (sublane-aligned)
    N = ids_ref.shape[0]
    wrows = E + 8                           # wide-slab rows per layer
    lrows = E + F + 8                       # narrow-slab rows per layer

    # ---- fused embedding gather: one-hot(ids) @ table on the MXU ----
    ids = ids_ref[...]                                              # (N, 1) int32
    emb = nar_ref[0:V, 0:E]                                         # (V, E)
    vocab = lax.broadcasted_iota(jnp.int32, (N, V), 1)
    onehot = (ids == vocab).astype(jnp.float32)                     # (N, V)
    emb_all = jnp.dot(onehot, emb, preferred_element_type=jnp.float32)

    x = emb_all[:BS, :]                                             # (B*S, E)
    x2e = emb_all[off2:off2 + B, :]                                 # (B, E)
    x3e = emb_all[off3:off3 + B, :]                                 # (B, E)

    # ---- transformer encoder stack ----
    for l in range(L):
        wb = l * wrows
        w = wide_ref[wb:wb + E, :]                                  # (E, 3*H*SEG)
        bqk = wide_ref[wb + E:wb + E + 1, :]                        # (1, 3*H*SEG)
        # single fused projection; every head segment is 128-lane aligned and
        # zero-padded, so 128-wide contractions == the true 16/32-wide ones.
        qkv = (jnp.dot(x, w, preferred_element_type=jnp.float32) + bqk
               ).reshape(B, S, 3 * H * SEG)

        o = None
        for h in range(H):                                          # H=2, unrolled
            qh = qkv[:, :, h * SEG:(h + 1) * SEG]                   # (B,S,128)
            kh = qkv[:, :, (H + h) * SEG:(H + h + 1) * SEG]
            vh = qkv[:, :, (2 * H + h) * SEG:(2 * H + h + 1) * SEG]  # v' = v @ Wo_h
            sc = jnp.einsum('bqd,bkd->bqk', qh, kh,
                            preferred_element_type=jnp.float32)     # scale folded in Wq
            attn = _softmax_approx(sc)
            ctx = jnp.einsum('bqk,bkd->bqd', attn, vh,
                             preferred_element_type=jnp.float32)    # (B,S,128)
            o = ctx if o is None else o + ctx                       # head-sum (Wo folded)
        o = o.reshape(BS, SEG)[:, :E]                               # lane-0 slice

        nbase = V + l * lrows
        w1 = nar_ref[nbase:nbase + E, 0:F]                          # (E, F)
        w2 = nar_ref[nbase + E:nbase + E + F, 0:E]                  # (F, E)
        vb = nbase + E + F
        b1 = nar_ref[vb + 0:vb + 1, 0:F]
        bout = nar_ref[vb + 1:vb + 2, 0:E]                          # bo + sum_h bv_h@Wo_h
        ln1g = nar_ref[vb + 2:vb + 3, 0:E]
        ln1b = nar_ref[vb + 3:vb + 4, 0:E]
        b2 = nar_ref[vb + 4:vb + 5, 0:E]
        ln2g = nar_ref[vb + 5:vb + 6, 0:E]
        ln2b = nar_ref[vb + 6:vb + 7, 0:E]

        x = _layer_norm(x + o + bout, ln1g, ln1b)
        ff = jnp.maximum(jnp.dot(x, w1, preferred_element_type=jnp.float32) + b1, 0.0)
        ff = jnp.dot(ff, w2, preferred_element_type=jnp.float32) + b2
        x = _layer_norm(x + ff, ln2g, ln2b)

    # ---- external attention on the selected query row only, WITHOUT building
    # y = cat([x3, x], dim=1): scores are computed vs x3 and vs x separately,
    # softmax'd jointly, and recombined (identical to attention + index_select
    # since softmax rows are independent). ----
    fb = V + L * lrows
    ng = nar_ref[fb:fb + 1, 0:E]
    nbeta = nar_ref[fb + 1:fb + 2, 0:E]

    idx = idx_ref[0]
    x_bse = x.reshape(B, S, E)
    x3u = x3e[:, None, :]                                           # (B,1,E)

    # selected query row: x3 token if idx == 0 else transformed token idx-1
    pos = lax.broadcasted_iota(jnp.int32, (B, 1, S), 2)
    selx = (pos == (idx - 1)).astype(jnp.float32)                   # (B,1,S)
    q_from_x = jnp.einsum('bqs,bse->bqe', selx, x_bse,
                          preferred_element_type=jnp.float32)       # 0 if idx == 0
    is0 = (idx == 0).astype(jnp.float32)
    qs = (is0 * x3u + q_from_x) * (1.0 / (E ** 0.5))                # scale on query path

    sc1 = jnp.einsum('bqe,bke->bqk', qs, x_bse,
                     preferred_element_type=jnp.float32)            # (B,1,S)
    sc0 = jnp.sum(qs * x3u, axis=-1, keepdims=True)                 # (B,1,1)
    m = jnp.maximum(jnp.max(sc1, axis=-1, keepdims=True), sc0)
    e0 = jnp.exp(sc0 - m)
    e1 = jnp.exp(sc1 - m)
    den = e0 + jnp.sum(e1, axis=-1, keepdims=True)
    num = e0 * x3u + jnp.einsum('bqk,bke->bqe', e1, x_bse,
                                preferred_element_type=jnp.float32)
    z = (num / den)[:, 0, :]                                        # exact final softmax

    # ---- residual + LayerNorm, then MatMul2D(transpose_b=True) -> scalar ----
    r = _layer_norm(z + x3e, ng, nbeta)                             # (B, E)
    out_ref[...] = jnp.sum(x2e * r, axis=-1, keepdims=True)         # (B, 1)


def build_params(key, config, num_embeddings):
    """Semantic (unfused) parameters of the PyTorch module."""
    E = config.EMBEDDINGS_SIZE
    K = config.TRANSFORMER_KEY_DIM
    H = config.NUM_HEADS_PER_TRANSFORMER
    L = config.NUM_TRANSFORMER_ENCODERS
    F = E * config.TRANSFORMER_FF_EXPANSION_RATE
    HK = H * K
    keys = jax.random.split(key, 8)

    def u(k, shape, scale):
        return jax.random.uniform(k, shape, jnp.float32, -scale, scale)

    return dict(
        emb=u(keys[0], (num_embeddings, E), 0.05),  # nn.init.uniform_(-0.05, 0.05)
        wq=u(keys[1], (L, E, HK), 0.1), bq=jnp.zeros((L, HK), jnp.float32),
        wk=u(keys[2], (L, E, HK), 0.1), bk=jnp.zeros((L, HK), jnp.float32),
        wv=u(keys[3], (L, E, HK), 0.1), bv=jnp.zeros((L, HK), jnp.float32),
        wo=u(keys[4], (L, HK, E), 0.1), bo=jnp.zeros((L, E), jnp.float32),
        ln1g=jnp.ones((L, E), jnp.float32), ln1b=jnp.zeros((L, E), jnp.float32),
        w1=u(keys[5], (L, E, F), 0.1), b1=jnp.zeros((L, F), jnp.float32),
        w2=u(keys[6], (L, F, E), 0.1), b2=jnp.zeros((L, E), jnp.float32),
        ln2g=jnp.ones((L, E), jnp.float32), ln2b=jnp.zeros((L, E), jnp.float32),
        ng=jnp.ones((E,), jnp.float32), nb=jnp.zeros((E,), jnp.float32),
    )


def pack_params(params, config):
    """Host-side packing into two contiguous f32 slabs (2 input DMAs total).

    Wide slab (L*(E+8), 6*128):   per-layer fused [Q | K | V'] projection with
      each head segment 128-lane aligned and zero-padded; 1/sqrt(K) folded into
      the Q columns/bias; Wo folded into the value path (V'_h = Wv_h @ Wo_h).
    Narrow slab (rows, max(E,F)): embedding table, FFN weights, and all
      bias / LayerNorm vectors, one parameter per 8-aligned row block.
    """
    E = config.EMBEDDINGS_SIZE
    K = config.TRANSFORMER_KEY_DIM
    H = config.NUM_HEADS_PER_TRANSFORMER
    L = config.NUM_TRANSFORMER_ENCODERS
    F = E * config.TRANSFORMER_FF_EXPANSION_RATE
    V = params['emb'].shape[0]
    p = jax.tree_util.tree_map(np.asarray, params)
    qscale = 1.0 / np.sqrt(K)

    wide = np.zeros((L * (E + 8), 3 * H * SEG), np.float32)
    for l in range(L):
        wb = l * (E + 8)
        for h in range(H):
            cq, ck, cv = h * SEG, (H + h) * SEG, (2 * H + h) * SEG
            wide[wb:wb + E, cq:cq + K] = p['wq'][l][:, h * K:(h + 1) * K] * qscale
            wide[wb:wb + E, ck:ck + K] = p['wk'][l][:, h * K:(h + 1) * K]
            wide[wb:wb + E, cv:cv + E] = (p['wv'][l][:, h * K:(h + 1) * K]
                                          @ p['wo'][l][h * K:(h + 1) * K, :])
            wide[wb + E, cq:cq + K] = p['bq'][l][h * K:(h + 1) * K] * qscale
            wide[wb + E, ck:ck + K] = p['bk'][l][h * K:(h + 1) * K]

    nw = max(E, F)
    nrows = V + L * (E + F + 8) + 8
    nar = np.zeros((nrows, nw), np.float32)
    nar[0:V, 0:E] = p['emb']
    for l in range(L):
        base = V + l * (E + F + 8)
        nar[base:base + E, 0:F] = p['w1'][l]
        nar[base + E:base + E + F, 0:E] = p['w2'][l]
        vb = base + E + F
        nar[vb + 0, 0:F] = p['b1'][l]
        bout = p['bo'][l].copy()
        for h in range(H):        # value bias passes through attention unchanged
            bout = bout + p['bv'][l][h * K:(h + 1) * K] @ p['wo'][l][h * K:(h + 1) * K, :]
        nar[vb + 1, 0:E] = bout
        nar[vb + 2, 0:E] = p['ln1g'][l]
        nar[vb + 3, 0:E] = p['ln1b'][l]
        nar[vb + 4, 0:E] = p['b2'][l]
        nar[vb + 5, 0:E] = p['ln2g'][l]
        nar[vb + 6, 0:E] = p['ln2b'][l]
    fb = V + L * (E + F + 8)
    nar[fb, 0:E] = p['ng']
    nar[fb + 1, 0:E] = p['nb']

    return jnp.asarray(wide), jnp.asarray(nar)


def _pack_ids(x1, x2, x3):
    """Pack all token ids into one column vector with 8-row-aligned sections."""
    B, S = x1.shape
    off2 = _round_up(B * S, 8)
    off3 = off2 + _round_up(B, 8)
    total = off3 + _round_up(B, 8)
    ids = jnp.zeros((total,), jnp.int32)
    ids = ids.at[:B * S].set(x1.reshape(-1).astype(jnp.int32))
    ids = ids.at[off2:off2 + B].set(x2.astype(jnp.int32))
    ids = ids.at[off3:off3 + B].set(x3.astype(jnp.int32))
    return ids[:, None]                       # (total, 1)


def test_model_forward(params, x1, x2, x3, index_select_aux, config):
    B, S = x1.shape
    E = config.EMBEDDINGS_SIZE
    F = E * config.TRANSFORMER_FF_EXPANSION_RATE
    V = params['emb'].shape[0]

    ids = _pack_ids(x1, x2, x3)
    wide, nar = pack_params(params, config)

    kernel = functools.partial(
        testmodel_kernel,
        config.NUM_TRANSFORMER_ENCODERS,
        config.NUM_HEADS_PER_TRANSFORMER,
        config.TRANSFORMER_KEY_DIM,
        B, S, E, F, V,
    )

    vmem = pl.BlockSpec(memory_space=pltpu.MemorySpace.VMEM)
    smem = pl.BlockSpec(memory_space=pltpu.MemorySpace.SMEM)

    # advisory cost hint so XLA can overlap this tiny, latency-bound call
    bytes_accessed = int(ids.size * 4 + wide.size * 4 + nar.size * 4 + B * 4 + 4)
    cost = pl.CostEstimate(flops=3_000_000, transcendentals=700,
                           bytes_accessed=bytes_accessed)

    # No grid / no tiling: whole problem (< 1 MiB) runs in one invocation.
    out = pl.pallas_call(
        kernel,
        out_shape=jax.ShapeDtypeStruct((B, 1), jnp.float32),
        in_specs=[smem, vmem, vmem, vmem],
        out_specs=vmem,
        cost_estimate=cost,
    )(index_select_aux.astype(jnp.int32), ids, wide, nar)

    return out[:, 0]   # matches .squeeze(2).squeeze(1) -> shape (B,)


if __name__ == "__main__":
    cfg = Config()
    num_embeddings = 64
    B, S = 2, 8

    key = jax.random.PRNGKey(0)
    kp, k1, k2, k3 = jax.random.split(key, 4)
    params = build_params(kp, cfg, num_embeddings)

    x1 = jax.random.randint(k1, (B, S), 0, num_embeddings, dtype=jnp.int32)
    x2 = jax.random.randint(k2, (B,), 0, num_embeddings, dtype=jnp.int32)
    x3 = jax.random.randint(k3, (B,), 0, num_embeddings, dtype=jnp.int32)
    index_select_aux = jnp.array([0], dtype=jnp.int32)  # select the x3 token

    out = test_model_forward(params, x1, x2, x3, index_select_aux, cfg)
    jax.block_until_ready(out)
    assert out.shape == (B,) and out.dtype == jnp.float32
    assert bool(jnp.all(jnp.isfinite(out)))
    print("KERNEL_OK")
</pallas_src>

<mosaic_0001>
module attributes {stable_mosaic.version = 11 : i64} {
  func.func @testmodel_kernel(%arg0: memref<1xi32, #tpu.memory_space<smem>>, %arg1: memref<32x1xi32, #tpu.memory_space<vmem>>, %arg2: memref<80x768xf32, #tpu.memory_space<vmem>>, %arg3: memref<280x64xf32, #tpu.memory_space<vmem>>, %arg4: memref<2x1xf32, #tpu.memory_space<vmem>>) attributes {dimension_semantics = [], scalar_prefetch = 0 : i64, scratch_operands = 0 : i64, tpu.core_type = #tpu.core_type<tc>} {
    %c0 = arith.constant 0 : index
    %c0_0 = arith.constant 0 : index
    %0 = vector.load %arg1[%c0, %c0_0] : memref<32x1xi32, #tpu.memory_space<vmem>>, vector<32x1xi32>
    %c0_1 = arith.constant 0 : index
    %c0_2 = arith.constant 0 : index
    %1 = vector.load %arg3[%c0_1, %c0_2] : memref<280x64xf32, #tpu.memory_space<vmem>>, vector<64x32xf32>
    %2 = tpu.iota {dimensions = array<i32: 1>} : vector<32x64xi32>
    %3 = vector.broadcast %0 : vector<32x1xi32> to vector<32x64xi32>
    %4 = arith.cmpi eq, %3, %2 : vector<32x64xi32>
    %5 = arith.extui %4 : vector<32x64xi1> to vector<32x64xi32>
    %6 = arith.sitofp %5 : vector<32x64xi32> to vector<32x64xf32>
    %cst = arith.constant dense<0.000000e+00> : vector<32x32xf32>
    %7 = tpu.matmul %6, %1, %cst {dimension_numbers = #tpu.dot_dimension_numbers<[1], [0], [0], [1], [0, 0, 1, 1], [], []>} : vector<32x64xf32>, vector<64x32xf32>, vector<32x32xf32> -> vector<32x32xf32>
    %8 = vector.extract_strided_slice %7 {offsets = [0, 0], sizes = [16, 32], strides = [1, 1]} : vector<32x32xf32> to vector<16x32xf32>
    %9 = vector.extract_strided_slice %7 {offsets = [16, 0], sizes = [2, 32], strides = [1, 1]} : vector<32x32xf32> to vector<2x32xf32>
    %10 = vector.extract_strided_slice %7 {offsets = [24, 0], sizes = [2, 32], strides = [1, 1]} : vector<32x32xf32> to vector<2x32xf32>
    %c0_3 = arith.constant 0 : index
    %c0_4 = arith.constant 0 : index
    %11 = vector.load %arg2[%c0_3, %c0_4] : memref<80x768xf32, #tpu.memory_space<vmem>>, vector<32x768xf32>
    %c32 = arith.constant 32 : index
    %c0_5 = arith.constant 0 : index
    %12 = vector.load %arg2[%c32, %c0_5] : memref<80x768xf32, #tpu.memory_space<vmem>>, vector<1x768xf32>
    %cst_6 = arith.constant dense<0.000000e+00> : vector<16x768xf32>
    %13 = tpu.matmul %8, %11, %cst_6 {dimension_numbers = #tpu.dot_dimension_numbers<[1], [0], [0], [1], [0, 0, 1, 1], [], []>} : vector<16x32xf32>, vector<32x768xf32>, vector<16x768xf32> -> vector<16x768xf32>
    %14 = vector.broadcast %12 : vector<1x768xf32> to vector<16x768xf32>
    %15 = arith.addf %13, %14 : vector<16x768xf32>
    %16 = vector.shape_cast %15 : vector<16x768xf32> to vector<2x8x768xf32>
    %17 = vector.extract_strided_slice %16 {offsets = [0, 0, 0], sizes = [2, 8, 128], strides = [1, 1, 1]} : vector<2x8x768xf32> to vector<2x8x128xf32>
    %18 = vector.extract_strided_slice %16 {offsets = [0, 0, 256], sizes = [2, 8, 128], strides = [1, 1, 1]} : vector<2x8x768xf32> to vector<2x8x128xf32>
    %19 = vector.extract_strided_slice %16 {offsets = [0, 0, 512], sizes = [2, 8, 128], strides = [1, 1, 1]} : vector<2x8x768xf32> to vector<2x8x128xf32>
    "tpu.trace_start"() <{level = 10 : i32, message = "bqd,bkd->bqk"}> : () -> ()
    %cst_7 = arith.constant dense<0.000000e+00> : vector<2x8x8xf32>
    %20 = tpu.matmul %17, %18, %cst_7 {dimension_numbers = #tpu.dot_dimension_numbers<[2], [2], [1], [1], [0, 0, 0, 1, 1, 1], [0], [0]>} : vector<2x8x128xf32>, vector<2x8x128xf32>, vector<2x8x8xf32> -> vector<2x8x8xf32>
    "tpu.trace_stop"() : () -> ()
    %cst_8 = arith.constant dense<0xFF800000> : vector<2x8xf32>
    %21 = vector.multi_reduction <maximumf>, %20, %cst_8 [2] : vector<2x8x8xf32> to vector<2x8xf32>
    %22 = vector.shape_cast %21 : vector<2x8xf32> to vector<2x8x1xf32>
    %23 = vector.broadcast %22 : vector<2x8x1xf32> to vector<2x8x8xf32>
    %24 = arith.subf %20, %23 : vector<2x8x8xf32>
    %25 = math.exp %24 : vector<2x8x8xf32>
    %cst_9 = arith.constant dense<0.000000e+00> : vector<2x8xf32>
    %26 = vector.multi_reduction <add>, %25, %cst_9 [2] : vector<2x8x8xf32> to vector<2x8xf32>
    %27 = vector.shape_cast %26 : vector<2x8xf32> to vector<2x8x1xf32>
    %28 = tpu.reciprocal %27 {approx = true} : vector<2x8x1xf32> -> vector<2x8x1xf32>
    %29 = vector.broadcast %28 : vector<2x8x1xf32> to vector<2x8x8xf32>
    %30 = arith.mulf %25, %29 : vector<2x8x8xf32>
    "tpu.trace_start"() <{level = 10 : i32, message = "bqk,bkd->bqd"}> : () -> ()
    %cst_10 = arith.constant dense<0.000000e+00> : vector<2x8x128xf32>
    %31 = tpu.matmul %30, %19, %cst_10 {dimension_numbers = #tpu.dot_dimension_numbers<[2], [1], [1], [2], [0, 0, 0, 1, 1, 2], [0], [0]>} : vector<2x8x8xf32>, vector<2x8x128xf32>, vector<2x8x128xf32> -> vector<2x8x128xf32>
    "tpu.trace_stop"() : () -> ()
    %32 = vector.extract_strided_slice %16 {offsets = [0, 0, 128], sizes = [2, 8, 128], strides = [1, 1, 1]} : vector<2x8x768xf32> to vector<2x8x128xf32>
    %33 = vector.extract_strided_slice %16 {offsets = [0, 0, 384], sizes = [2, 8, 128], strides = [1, 1, 1]} : vector<2x8x768xf32> to vector<2x8x128xf32>
    %34 = vector.extract_strided_slice %16 {offsets = [0, 0, 640], sizes = [2, 8, 128], strides = [1, 1, 1]} : vector<2x8x768xf32> to vector<2x8x128xf32>
    "tpu.trace_start"() <{level = 10 : i32, message = "bqd,bkd->bqk"}> : () -> ()
    %cst_11 = arith.constant dense<0.000000e+00> : vector<2x8x8xf32>
    %35 = tpu.matmul %32, %33, %cst_11 {dimension_numbers = #tpu.dot_dimension_numbers<[2], [2], [1], [1], [0, 0, 0, 1, 1, 1], [0], [0]>} : vector<2x8x128xf32>, vector<2x8x128xf32>, vector<2x8x8xf32> -> vector<2x8x8xf32>
    "tpu.trace_stop"() : () -> ()
    %cst_12 = arith.constant dense<0xFF800000> : vector<2x8xf32>
    %36 = vector.multi_reduction <maximumf>, %35, %cst_12 [2] : vector<2x8x8xf32> to vector<2x8xf32>
    %37 = vector.shape_cast %36 : vector<2x8xf32> to vector<2x8x1xf32>
    %38 = vector.broadcast %37 : vector<2x8x1xf32> to vector<2x8x8xf32>
    %39 = arith.subf %35, %38 : vector<2x8x8xf32>
    %40 = math.exp %39 : vector<2x8x8xf32>
    %cst_13 = arith.constant dense<0.000000e+00> : vector<2x8xf32>
    %41 = vector.multi_reduction <add>, %40, %cst_13 [2] : vector<2x8x8xf32> to vector<2x8xf32>
    %42 = vector.shape_cast %41 : vector<2x8xf32> to vector<2x8x1xf32>
    %43 = tpu.reciprocal %42 {approx = true} : vector<2x8x1xf32> -> vector<2x8x1xf32>
    %44 = vector.broadcast %43 : vector<2x8x1xf32> to vector<2x8x8xf32>
    %45 = arith.mulf %40, %44 : vector<2x8x8xf32>
    "tpu.trace_start"() <{level = 10 : i32, message = "bqk,bkd->bqd"}> : () -> ()
    %cst_14 = arith.constant dense<0.000000e+00> : vector<2x8x128xf32>
    %46 = tpu.matmul %45, %34, %cst_14 {dimension_numbers = #tpu.dot_dimension_numbers<[2], [1], [1], [2], [0, 0, 0, 1, 1, 2], [0], [0]>} : vector<2x8x8xf32>, vector<2x8x128xf32>, vector<2x8x128xf32> -> vector<2x8x128xf32>
    "tpu.trace_stop"() : () -> ()
    %47 = arith.addf %31, %46 : vector<2x8x128xf32>
    %48 = vector.shape_cast %47 : vector<2x8x128xf32> to vector<16x128xf32>
    %49 = vector.extract_strided_slice %48 {offsets = [0, 0], sizes = [16, 32], strides = [1, 1]} : vector<16x128xf32> to vector<16x32xf32>
    %c64 = arith.constant 64 : index
    %c0_15 = arith.constant 0 : index
    %50 = vector.load %arg3[%c64, %c0_15] : memref<280x64xf32, #tpu.memory_space<vmem>>, vector<32x64xf32>
    %c96 = arith.constant 96 : index
    %c0_16 = arith.constant 0 : index
    %51 = vector.load %arg3[%c96, %c0_16] : memref<280x64xf32, #tpu.memory_space<vmem>>, vector<64x32xf32>
    %c160 = arith.constant 160 : index
    %c0_17 = arith.constant 0 : index
    %52 = vector.load %arg3[%c160, %c0_17] : memref<280x64xf32, #tpu.memory_space<vmem>>, vector<1x64xf32>
    %c161 = arith.constant 161 : index
    %c0_18 = arith.constant 0 : index
    %53 = vector.load %arg3[%c161, %c0_18] : memref<280x64xf32, #tpu.memory_space<vmem>>, vector<1x32xf32>
    %c162 = arith.constant 162 : index
    %c0_19 = arith.constant 0 : index
    %54 = vector.load %arg3[%c162, %c0_19] : memref<280x64xf32, #tpu.memory_space<vmem>>, vector<1x32xf32>
    %c163 = arith.constant 163 : index
    %c0_20 = arith.constant 0 : index
    %55 = vector.load %arg3[%c163, %c0_20] : memref<280x64xf32, #tpu.memory_space<vmem>>, vector<1x32xf32>
    %c164 = arith.constant 164 : index
    %c0_21 = arith.constant 0 : index
    %56 = vector.load %arg3[%c164, %c0_21] : memref<280x64xf32, #tpu.memory_space<vmem>>, vector<1x32xf32>
    %c165 = arith.constant 165 : index
    %c0_22 = arith.constant 0 : index
    %57 = vector.load %arg3[%c165, %c0_22] : memref<280x64xf32, #tpu.memory_space<vmem>>, vector<1x32xf32>
    %c166 = arith.constant 166 : index
    %c0_23 = arith.constant 0 : index
    %58 = vector.load %arg3[%c166, %c0_23] : memref<280x64xf32, #tpu.memory_space<vmem>>, vector<1x32xf32>
    %59 = arith.addf %8, %49 : vector<16x32xf32>
    %60 = vector.broadcast %53 : vector<1x32xf32> to vector<16x32xf32>
    %61 = arith.addf %59, %60 : vector<16x32xf32>
    %cst_24 = arith.constant dense<0.000000e+00> : vector<16xf32>
    %62 = vector.multi_reduction <add>, %61, %cst_24 [1] : vector<16x32xf32> to vector<16xf32>
    %63 = vector.shape_cast %62 : vector<16xf32> to vector<16x1xf32>
    %cst_25 = arith.constant 3.200000e+01 : f32
    %64 = vector.broadcast %cst_25 : f32 to vector<16x1xf32>
    %65 = arith.divf %63, %64 : vector<16x1xf32>
    %66 = vector.broadcast %65 : vector<16x1xf32> to vector<16x32xf32>
    %67 = arith.subf %61, %66 : vector<16x32xf32>
    %68 = arith.mulf %67, %67 : vector<16x32xf32>
    %cst_26 = arith.constant dense<0.000000e+00> : vector<16xf32>
    %69 = vector.multi_reduction <add>, %68, %cst_26 [1] : vector<16x32xf32> to vector<16xf32>
    %70 = vector.shape_cast %69 : vector<16xf32> to vector<16x1xf32>
    %cst_27 = arith.constant 3.200000e+01 : f32
    %71 = vector.broadcast %cst_27 : f32 to vector<16x1xf32>
    %72 = arith.divf %70, %71 : vector<16x1xf32>
    %73 = vector.broadcast %65 : vector<16x1xf32> to vector<16x32xf32>
    %74 = arith.subf %61, %73 : vector<16x32xf32>
    %cst_28 = arith.constant 9.99999974E-6 : f32
    %75 = vector.broadcast %cst_28 : f32 to vector<16x1xf32>
    %76 = arith.addf %72, %75 : vector<16x1xf32>
    %77 = math.rsqrt %76 : vector<16x1xf32>
    %78 = vector.broadcast %77 : vector<16x1xf32> to vector<16x32xf32>
    %79 = arith.mulf %74, %78 : vector<16x32xf32>
    %80 = vector.broadcast %54 : vector<1x32xf32> to vector<16x32xf32>
    %81 = arith.mulf %79, %80 : vector<16x32xf32>
    %82 = vector.broadcast %55 : vector<1x32xf32> to vector<16x32xf32>
    %83 = arith.addf %81, %82 : vector<16x32xf32>
    %cst_29 = arith.constant dense<0.000000e+00> : vector<16x64xf32>
    %84 = tpu.matmul %83, %50, %cst_29 {dimension_numbers = #tpu.dot_dimension_numbers<[1], [0], [0], [1], [0, 0, 1, 1], [], []>} : vector<16x32xf32>, vector<32x64xf32>, vector<16x64xf32> -> vector<16x64xf32>
    %85 = vector.broadcast %52 : vector<1x64xf32> to vector<16x64xf32>
    %86 = arith.addf %84, %85 : vector<16x64xf32>
    %cst_30 = arith.constant 0.000000e+00 : f32
    %87 = vector.broadcast %cst_30 : f32 to vector<16x64xf32>
    %88 = arith.maximumf %86, %87 : vector<16x64xf32>
    %cst_31 = arith.constant dense<0.000000e+00> : vector<16x32xf32>
    %89 = tpu.matmul %88, %51, %cst_31 {dimension_numbers = #tpu.dot_dimension_numbers<[1], [0], [0], [1], [0, 0, 1, 1], [], []>} : vector<16x64xf32>, vector<64x32xf32>, vector<16x32xf32> -> vector<16x32xf32>
    %90 = vector.broadcast %56 : vector<1x32xf32> to vector<16x32xf32>
    %91 = arith.addf %89, %90 : vector<16x32xf32>
    %92 = arith.addf %83, %91 : vector<16x32xf32>
    %cst_32 = arith.constant dense<0.000000e+00> : vector<16xf32>
    %93 = vector.multi_reduction <add>, %92, %cst_32 [1] : vector<16x32xf32> to vector<16xf32>
    %94 = vector.shape_cast %93 : vector<16xf32> to vector<16x1xf32>
    %cst_33 = arith.constant 3.200000e+01 : f32
    %95 = vector.broadcast %cst_33 : f32 to vector<16x1xf32>
    %96 = arith.divf %94, %95 : vector<16x1xf32>
    %97 = vector.broadcast %96 : vector<16x1xf32> to vector<16x32xf32>
    %98 = arith.subf %92, %97 : vector<16x32xf32>
    %99 = arith.mulf %98, %98 : vector<16x32xf32>
    %cst_34 = arith.constant dense<0.000000e+00> : vector<16xf32>
    %100 = vector.multi_reduction <add>, %99, %cst_34 [1] : vector<16x32xf32> to vector<16xf32>
    %101 = vector.shape_cast %100 : vector<16xf32> to vector<16x1xf32>
    %cst_35 = arith.constant 3.200000e+01 : f32
    %102 = vector.broadcast %cst_35 : f32 to vector<16x1xf32>
    %103 = arith.divf %101, %102 : vector<16x1xf32>
    %104 = vector.broadcast %96 : vector<16x1xf32> to vector<16x32xf32>
    %105 = arith.subf %92, %104 : vector<16x32xf32>
    %cst_36 = arith.constant 9.99999974E-6 : f32
    %106 = vector.broadcast %cst_36 : f32 to vector<16x1xf32>
    %107 = arith.addf %103, %106 : vector<16x1xf32>
    %108 = math.rsqrt %107 : vector<16x1xf32>
    %109 = vector.broadcast %108 : vector<16x1xf32> to vector<16x32xf32>
    %110 = arith.mulf %105, %109 : vector<16x32xf32>
    %111 = vector.broadcast %57 : vector<1x32xf32> to vector<16x32xf32>
    %112 = arith.mulf %110, %111 : vector<16x32xf32>
    %113 = vector.broadcast %58 : vector<1x32xf32> to vector<16x32xf32>
    %114 = arith.addf %112, %113 : vector<16x32xf32>
    %c40 = arith.constant 40 : index
    %c0_37 = arith.constant 0 : index
    %115 = vector.load %arg2[%c40, %c0_37] : memref<80x768xf32, #tpu.memory_space<vmem>>, vector<32x768xf32>
    %c72 = arith.constant 72 : index
    %c0_38 = arith.constant 0 : index
    %116 = vector.load %arg2[%c72, %c0_38] : memref<80x768xf32, #tpu.memory_space<vmem>>, vector<1x768xf32>
    %cst_39 = arith.constant dense<0.000000e+00> : vector<16x768xf32>
    %117 = tpu.matmul %114, %115, %cst_39 {dimension_numbers = #tpu.dot_dimension_numbers<[1], [0], [0], [1], [0, 0, 1, 1], [], []>} : vector<16x32xf32>, vector<32x768xf32>, vector<16x768xf32> -> vector<16x768xf32>
    %118 = vector.broadcast %116 : vector<1x768xf32> to vector<16x768xf32>
    %119 = arith.addf %117, %118 : vector<16x768xf32>
    %120 = vector.shape_cast %119 : vector<16x768xf32> to vector<2x8x768xf32>
    %121 = vector.extract_strided_slice %120 {offsets = [0, 0, 0], sizes = [2, 8, 128], strides = [1, 1, 1]} : vector<2x8x768xf32> to vector<2x8x128xf32>
    %122 = vector.extract_strided_slice %120 {offsets = [0, 0, 256], sizes = [2, 8, 128], strides = [1, 1, 1]} : vector<2x8x768xf32> to vector<2x8x128xf32>
    %123 = vector.extract_strided_slice %120 {offsets = [0, 0, 512], sizes = [2, 8, 128], strides = [1, 1, 1]} : vector<2x8x768xf32> to vector<2x8x128xf32>
    "tpu.trace_start"() <{level = 10 : i32, message = "bqd,bkd->bqk"}> : () -> ()
    %cst_40 = arith.constant dense<0.000000e+00> : vector<2x8x8xf32>
    %124 = tpu.matmul %121, %122, %cst_40 {dimension_numbers = #tpu.dot_dimension_numbers<[2], [2], [1], [1], [0, 0, 0, 1, 1, 1], [0], [0]>} : vector<2x8x128xf32>, vector<2x8x128xf32>, vector<2x8x8xf32> -> vector<2x8x8xf32>
    "tpu.trace_stop"() : () -> ()
    %cst_41 = arith.constant dense<0xFF800000> : vector<2x8xf32>
    %125 = vector.multi_reduction <maximumf>, %124, %cst_41 [2] : vector<2x8x8xf32> to vector<2x8xf32>
    %126 = vector.shape_cast %125 : vector<2x8xf32> to vector<2x8x1xf32>
    %127 = vector.broadcast %126 : vector<2x8x1xf32> to vector<2x8x8xf32>
    %128 = arith.subf %124, %127 : vector<2x8x8xf32>
    %129 = math.exp %128 : vector<2x8x8xf32>
    %cst_42 = arith.constant dense<0.000000e+00> : vector<2x8xf32>
    %130 = vector.multi_reduction <add>, %129, %cst_42 [2] : vector<2x8x8xf32> to vector<2x8xf32>
    %131 = vector.shape_cast %130 : vector<2x8xf32> to vector<2x8x1xf32>
    %132 = tpu.reciprocal %131 {approx = true} : vector<2x8x1xf32> -> vector<2x8x1xf32>
    %133 = vector.broadcast %132 : vector<2x8x1xf32> to vector<2x8x8xf32>
    %134 = arith.mulf %129, %133 : vector<2x8x8xf32>
    "tpu.trace_start"() <{level = 10 : i32, message = "bqk,bkd->bqd"}> : () -> ()
    %cst_43 = arith.constant dense<0.000000e+00> : vector<2x8x128xf32>
    %135 = tpu.matmul %134, %123, %cst_43 {dimension_numbers = #tpu.dot_dimension_numbers<[2], [1], [1], [2], [0, 0, 0, 1, 1, 2], [0], [0]>} : vector<2x8x8xf32>, vector<2x8x128xf32>, vector<2x8x128xf32> -> vector<2x8x128xf32>
    "tpu.trace_stop"() : () -> ()
    %136 = vector.extract_strided_slice %120 {offsets = [0, 0, 128], sizes = [2, 8, 128], strides = [1, 1, 1]} : vector<2x8x768xf32> to vector<2x8x128xf32>
    %137 = vector.extract_strided_slice %120 {offsets = [0, 0, 384], sizes = [2, 8, 128], strides = [1, 1, 1]} : vector<2x8x768xf32> to vector<2x8x128xf32>
    %138 = vector.extract_strided_slice %120 {offsets = [0, 0, 640], sizes = [2, 8, 128], strides = [1, 1, 1]} : vector<2x8x768xf32> to vector<2x8x128xf32>
    "tpu.trace_start"() <{level = 10 : i32, message = "bqd,bkd->bqk"}> : () -> ()
    %cst_44 = arith.constant dense<0.000000e+00> : vector<2x8x8xf32>
    %139 = tpu.matmul %136, %137, %cst_44 {dimension_numbers = #tpu.dot_dimension_numbers<[2], [2], [1], [1], [0, 0, 0, 1, 1, 1], [0], [0]>} : vector<2x8x128xf32>, vector<2x8x128xf32>, vector<2x8x8xf32> -> vector<2x8x8xf32>
    "tpu.trace_stop"() : () -> ()
    %cst_45 = arith.constant dense<0xFF800000> : vector<2x8xf32>
    %140 = vector.multi_reduction <maximumf>, %139, %cst_45 [2] : vector<2x8x8xf32> to vector<2x8xf32>
    %141 = vector.shape_cast %140 : vector<2x8xf32> to vector<2x8x1xf32>
    %142 = vector.broadcast %141 : vector<2x8x1xf32> to vector<2x8x8xf32>
    %143 = arith.subf %139, %142 : vector<2x8x8xf32>
    %144 = math.exp %143 : vector<2x8x8xf32>
    %cst_46 = arith.constant dense<0.000000e+00> : vector<2x8xf32>
    %145 = vector.multi_reduction <add>, %144, %cst_46 [2] : vector<2x8x8xf32> to vector<2x8xf32>
    %146 = vector.shape_cast %145 : vector<2x8xf32> to vector<2x8x1xf32>
    %147 = tpu.reciprocal %146 {approx = true} : vector<2x8x1xf32> -> vector<2x8x1xf32>
    %148 = vector.broadcast %147 : vector<2x8x1xf32> to vector<2x8x8xf32>
    %149 = arith.mulf %144, %148 : vector<2x8x8xf32>
    "tpu.trace_start"() <{level = 10 : i32, message = "bqk,bkd->bqd"}> : () -> ()
    %cst_47 = arith.constant dense<0.000000e+00> : vector<2x8x128xf32>
    %150 = tpu.matmul %149, %138, %cst_47 {dimension_numbers = #tpu.dot_dimension_numbers<[2], [1], [1], [2], [0, 0, 0, 1, 1, 2], [0], [0]>} : vector<2x8x8xf32>, vector<2x8x128xf32>, vector<2x8x128xf32> -> vector<2x8x128xf32>
    "tpu.trace_stop"() : () -> ()
    %151 = arith.addf %135, %150 : vector<2x8x128xf32>
    %152 = vector.shape_cast %151 : vector<2x8x128xf32> to vector<16x128xf32>
    %153 = vector.extract_strided_slice %152 {offsets = [0, 0], sizes = [16, 32], strides = [1, 1]} : vector<16x128xf32> to vector<16x32xf32>
    %c168 = arith.constant 168 : index
    %c0_48 = arith.constant 0 : index
    %154 = vector.load %arg3[%c168, %c0_48] : memref<280x64xf32, #tpu.memory_space<vmem>>, vector<32x64xf32>
    %c200 = arith.constant 200 : index
    %c0_49 = arith.constant 0 : index
    %155 = vector.load %arg3[%c200, %c0_49] : memref<280x64xf32, #tpu.memory_space<vmem>>, vector<64x32xf32>
    %c264 = arith.constant 264 : index
    %c0_50 = arith.constant 0 : index
    %156 = vector.load %arg3[%c264, %c0_50] : memref<280x64xf32, #tpu.memory_space<vmem>>, vector<1x64xf32>
    %c265 = arith.constant 265 : index
    %c0_51 = arith.constant 0 : index
    %157 = vector.load %arg3[%c265, %c0_51] : memref<280x64xf32, #tpu.memory_space<vmem>>, vector<1x32xf32>
    %c266 = arith.constant 266 : index
    %c0_52 = arith.constant 0 : index
    %158 = vector.load %arg3[%c266, %c0_52] : memref<280x64xf32, #tpu.memory_space<vmem>>, vector<1x32xf32>
    %c267 = arith.constant 267 : index
    %c0_53 = arith.constant 0 : index
    %159 = vector.load %arg3[%c267, %c0_53] : memref<280x64xf32, #tpu.memory_space<vmem>>, vector<1x32xf32>
    %c268 = arith.constant 268 : index
    %c0_54 = arith.constant 0 : index
    %160 = vector.load %arg3[%c268, %c0_54] : memref<280x64xf32, #tpu.memory_space<vmem>>, vector<1x32xf32>
    %c269 = arith.constant 269 : index
    %c0_55 = arith.constant 0 : index
    %161 = vector.load %arg3[%c269, %c0_55] : memref<280x64xf32, #tpu.memory_space<vmem>>, vector<1x32xf32>
    %c270 = arith.constant 270 : index
    %c0_56 = arith.constant 0 : index
    %162 = vector.load %arg3[%c270, %c0_56] : memref<280x64xf32, #tpu.memory_space<vmem>>, vector<1x32xf32>
    %163 = arith.addf %114, %153 : vector<16x32xf32>
    %164 = vector.broadcast %157 : vector<1x32xf32> to vector<16x32xf32>
    %165 = arith.addf %163, %164 : vector<16x32xf32>
    %cst_57 = arith.constant dense<0.000000e+00> : vector<16xf32>
    %166 = vector.multi_reduction <add>, %165, %cst_57 [1] : vector<16x32xf32> to vector<16xf32>
    %167 = vector.shape_cast %166 : vector<16xf32> to vector<16x1xf32>
    %cst_58 = arith.constant 3.200000e+01 : f32
    %168 = vector.broadcast %cst_58 : f32 to vector<16x1xf32>
    %169 = arith.divf %167, %168 : vector<16x1xf32>
    %170 = vector.broadcast %169 : vector<16x1xf32> to vector<16x32xf32>
    %171 = arith.subf %165, %170 : vector<16x32xf32>
    %172 = arith.mulf %171, %171 : vector<16x32xf32>
    %cst_59 = arith.constant dense<0.000000e+00> : vector<16xf32>
    %173 = vector.multi_reduction <add>, %172, %cst_59 [1] : vector<16x32xf32> to vector<16xf32>
    %174 = vector.shape_cast %173 : vector<16xf32> to vector<16x1xf32>
    %cst_60 = arith.constant 3.200000e+01 : f32
    %175 = vector.broadcast %cst_60 : f32 to vector<16x1xf32>
    %176 = arith.divf %174, %175 : vector<16x1xf32>
    %177 = vector.broadcast %169 : vector<16x1xf32> to vector<16x32xf32>
    %178 = arith.subf %165, %177 : vector<16x32xf32>
    %cst_61 = arith.constant 9.99999974E-6 : f32
    %179 = vector.broadcast %cst_61 : f32 to vector<16x1xf32>
    %180 = arith.addf %176, %179 : vector<16x1xf32>
    %181 = math.rsqrt %180 : vector<16x1xf32>
    %182 = vector.broadcast %181 : vector<16x1xf32> to vector<16x32xf32>
    %183 = arith.mulf %178, %182 : vector<16x32xf32>
    %184 = vector.broadcast %158 : vector<1x32xf32> to vector<16x32xf32>
    %185 = arith.mulf %183, %184 : vector<16x32xf32>
    %186 = vector.broadcast %159 : vector<1x32xf32> to vector<16x32xf32>
    %187 = arith.addf %185, %186 : vector<16x32xf32>
    %cst_62 = arith.constant dense<0.000000e+00> : vector<16x64xf32>
    %188 = tpu.matmul %187, %154, %cst_62 {dimension_numbers = #tpu.dot_dimension_numbers<[1], [0], [0], [1], [0, 0, 1, 1], [], []>} : vector<16x32xf32>, vector<32x64xf32>, vector<16x64xf32> -> vector<16x64xf32>
    %189 = vector.broadcast %156 : vector<1x64xf32> to vector<16x64xf32>
    %190 = arith.addf %188, %189 : vector<16x64xf32>
    %cst_63 = arith.constant 0.000000e+00 : f32
    %191 = vector.broadcast %cst_63 : f32 to vector<16x64xf32>
    %192 = arith.maximumf %190, %191 : vector<16x64xf32>
    %cst_64 = arith.constant dense<0.000000e+00> : vector<16x32xf32>
    %193 = tpu.matmul %192, %155, %cst_64 {dimension_numbers = #tpu.dot_dimension_numbers<[1], [0], [0], [1], [0, 0, 1, 1], [], []>} : vector<16x64xf32>, vector<64x32xf32>, vector<16x32xf32> -> vector<16x32xf32>
    %194 = vector.broadcast %160 : vector<1x32xf32> to vector<16x32xf32>
    %195 = arith.addf %193, %194 : vector<16x32xf32>
    %196 = arith.addf %187, %195 : vector<16x32xf32>
    %cst_65 = arith.constant dense<0.000000e+00> : vector<16xf32>
    %197 = vector.multi_reduction <add>, %196, %cst_65 [1] : vector<16x32xf32> to vector<16xf32>
    %198 = vector.shape_cast %197 : vector<16xf32> to vector<16x1xf32>
    %cst_66 = arith.constant 3.200000e+01 : f32
    %199 = vector.broadcast %cst_66 : f32 to vector<16x1xf32>
    %200 = arith.divf %198, %199 : vector<16x1xf32>
    %201 = vector.broadcast %200 : vector<16x1xf32> to vector<16x32xf32>
    %202 = arith.subf %196, %201 : vector<16x32xf32>
    %203 = arith.mulf %202, %202 : vector<16x32xf32>
    %cst_67 = arith.constant dense<0.000000e+00> : vector<16xf32>
    %204 = vector.multi_reduction <add>, %203, %cst_67 [1] : vector<16x32xf32> to vector<16xf32>
    %205 = vector.shape_cast %204 : vector<16xf32> to vector<16x1xf32>
    %cst_68 = arith.constant 3.200000e+01 : f32
    %206 = vector.broadcast %cst_68 : f32 to vector<16x1xf32>
    %207 = arith.divf %205, %206 : vector<16x1xf32>
    %208 = vector.broadcast %200 : vector<16x1xf32> to vector<16x32xf32>
    %209 = arith.subf %196, %208 : vector<16x32xf32>
    %cst_69 = arith.constant 9.99999974E-6 : f32
    %210 = vector.broadcast %cst_69 : f32 to vector<16x1xf32>
    %211 = arith.addf %207, %210 : vector<16x1xf32>
    %212 = math.rsqrt %211 : vector<16x1xf32>
    %213 = vector.broadcast %212 : vector<16x1xf32> to vector<16x32xf32>
    %214 = arith.mulf %209, %213 : vector<16x32xf32>
    %215 = vector.broadcast %161 : vector<1x32xf32> to vector<16x32xf32>
    %216 = arith.mulf %214, %215 : vector<16x32xf32>
    %217 = vector.broadcast %162 : vector<1x32xf32> to vector<16x32xf32>
    %218 = arith.addf %216, %217 : vector<16x32xf32>
    %c272 = arith.constant 272 : index
    %c0_70 = arith.constant 0 : index
    %219 = vector.load %arg3[%c272, %c0_70] : memref<280x64xf32, #tpu.memory_space<vmem>>, vector<1x32xf32>
    %c273 = arith.constant 273 : index
    %c0_71 = arith.constant 0 : index
    %220 = vector.load %arg3[%c273, %c0_71] : memref<280x64xf32, #tpu.memory_space<vmem>>, vector<1x32xf32>
    %c0_72 = arith.constant 0 : index
    %221 = memref.load %arg0[%c0_72] : memref<1xi32, #tpu.memory_space<smem>>
    %222 = vector.shape_cast %218 : vector<16x32xf32> to vector<2x8x32xf32>
    %223 = vector.shape_cast %10 : vector<2x32xf32> to vector<2x1x32xf32>
    %224 = tpu.iota {dimensions = array<i32: 2>} : vector<2x1x8xi32>
    %c1_i32 = arith.constant 1 : i32
    %225 = arith.subi %221, %c1_i32 : i32
    %226 = vector.broadcast %225 : i32 to vector<2x1x8xi32>
    %227 = arith.cmpi eq, %224, %226 : vector<2x1x8xi32>
    %228 = arith.extui %227 : vector<2x1x8xi1> to vector<2x1x8xi32>
    %229 = arith.sitofp %228 : vector<2x1x8xi32> to vector<2x1x8xf32>
    "tpu.trace_start"() <{level = 10 : i32, message = "bqs,bse->bqe"}> : () -> ()
    %cst_73 = arith.constant dense<0.000000e+00> : vector<2x1x32xf32>
    %230 = tpu.matmul %229, %222, %cst_73 {dimension_numbers = #tpu.dot_dimension_numbers<[2], [1], [1], [2], [0, 0, 0, 1, 1, 2], [0], [0]>} : vector<2x1x8xf32>, vector<2x8x32xf32>, vector<2x1x32xf32> -> vector<2x1x32xf32>
    %c0_i32 = arith.constant 0 : i32
    "tpu.trace_stop"() : () -> ()
    %231 = arith.cmpi eq, %221, %c0_i32 : i32
    %232 = arith.extui %231 : i1 to i32
    %233 = arith.sitofp %232 : i32 to f32
    %234 = vector.broadcast %233 : f32 to vector<2x1x32xf32>
    %235 = arith.mulf %234, %223 : vector<2x1x32xf32>
    %236 = arith.addf %235, %230 : vector<2x1x32xf32>
    %cst_74 = arith.constant 0.176776692 : f32
    %237 = vector.broadcast %cst_74 : f32 to vector<2x1x32xf32>
    %238 = arith.mulf %236, %237 : vector<2x1x32xf32>
    "tpu.trace_start"() <{level = 10 : i32, message = "bqe,bke->bqk"}> : () -> ()
    %cst_75 = arith.constant dense<0.000000e+00> : vector<2x1x8xf32>
    %239 = tpu.matmul %238, %222, %cst_75 {dimension_numbers = #tpu.dot_dimension_numbers<[2], [2], [1], [1], [0, 0, 0, 1, 1, 1], [0], [0]>} : vector<2x1x32xf32>, vector<2x8x32xf32>, vector<2x1x8xf32> -> vector<2x1x8xf32>
    "tpu.trace_stop"() : () -> ()
    %240 = arith.mulf %238, %223 : vector<2x1x32xf32>
    %cst_76 = arith.constant dense<0.000000e+00> : vector<2x1xf32>
    %241 = vector.multi_reduction <add>, %240, %cst_76 [2] : vector<2x1x32xf32> to vector<2x1xf32>
    %242 = vector.shape_cast %241 : vector<2x1xf32> to vector<2x1x1xf32>
    %cst_77 = arith.constant dense<0xFF800000> : vector<2x1xf32>
    %243 = vector.multi_reduction <maximumf>, %239, %cst_77 [2] : vector<2x1x8xf32> to vector<2x1xf32>
    %244 = vector.shape_cast %243 : vector<2x1xf32> to vector<2x1x1xf32>
    %245 = arith.maximumf %244, %242 : vector<2x1x1xf32>
    %246 = arith.subf %242, %245 : vector<2x1x1xf32>
    %247 = math.exp %246 : vector<2x1x1xf32>
    %248 = vector.broadcast %245 : vector<2x1x1xf32> to vector<2x1x8xf32>
    %249 = arith.subf %239, %248 : vector<2x1x8xf32>
    %250 = math.exp %249 : vector<2x1x8xf32>
    %cst_78 = arith.constant dense<0.000000e+00> : vector<2x1xf32>
    %251 = vector.multi_reduction <add>, %250, %cst_78 [2] : vector<2x1x8xf32> to vector<2x1xf32>
    %252 = vector.shape_cast %251 : vector<2x1xf32> to vector<2x1x1xf32>
    %253 = arith.addf %247, %252 : vector<2x1x1xf32>
    %254 = vector.broadcast %247 : vector<2x1x1xf32> to vector<2x1x32xf32>
    %255 = arith.mulf %254, %223 : vector<2x1x32xf32>
    "tpu.trace_start"() <{level = 10 : i32, message = "bqk,bke->bqe"}> : () -> ()
    %cst_79 = arith.constant dense<0.000000e+00> : vector<2x1x32xf32>
    %256 = tpu.matmul %250, %222, %cst_79 {dimension_numbers = #tpu.dot_dimension_numbers<[2], [1], [1], [2], [0, 0, 0, 1, 1, 2], [0], [0]>} : vector<2x1x8xf32>, vector<2x8x32xf32>, vector<2x1x32xf32> -> vector<2x1x32xf32>
    "tpu.trace_stop"() : () -> ()
    %257 = arith.addf %255, %256 : vector<2x1x32xf32>
    %258 = vector.broadcast %253 : vector<2x1x1xf32> to vector<2x1x32xf32>
    %259 = arith.divf %257, %258 : vector<2x1x32xf32>
    %260 = vector.shape_cast %259 : vector<2x1x32xf32> to vector<2x32xf32>
    %261 = arith.addf %260, %10 : vector<2x32xf32>
    %cst_80 = arith.constant dense<0.000000e+00> : vector<2xf32>
    %262 = vector.multi_reduction <add>, %261, %cst_80 [1] : vector<2x32xf32> to vector<2xf32>
    %263 = vector.shape_cast %262 : vector<2xf32> to vector<2x1xf32>
    %cst_81 = arith.constant 3.200000e+01 : f32
    %264 = vector.broadcast %cst_81 : f32 to vector<2x1xf32>
    %265 = arith.divf %263, %264 : vector<2x1xf32>
    %266 = vector.broadcast %265 : vector<2x1xf32> to vector<2x32xf32>
    %267 = arith.subf %261, %266 : vector<2x32xf32>
    %268 = arith.mulf %267, %267 : vector<2x32xf32>
    %cst_82 = arith.constant dense<0.000000e+00> : vector<2xf32>
    %269 = vector.multi_reduction <add>, %268, %cst_82 [1] : vector<2x32xf32> to vector<2xf32>
    %270 = vector.shape_cast %269 : vector<2xf32> to vector<2x1xf32>
    %cst_83 = arith.constant 3.200000e+01 : f32
    %271 = vector.broadcast %cst_83 : f32 to vector<2x1xf32>
    %272 = arith.divf %270, %271 : vector<2x1xf32>
    %273 = vector.broadcast %265 : vector<2x1xf32> to vector<2x32xf32>
    %274 = arith.subf %261, %273 : vector<2x32xf32>
    %cst_84 = arith.constant 9.99999974E-6 : f32
    %275 = vector.broadcast %cst_84 : f32 to vector<2x1xf32>
    %276 = arith.addf %272, %275 : vector<2x1xf32>
    %277 = math.rsqrt %276 : vector<2x1xf32>
    %278 = vector.broadcast %277 : vector<2x1xf32> to vector<2x32xf32>
    %279 = arith.mulf %274, %278 : vector<2x32xf32>
    %280 = vector.broadcast %219 : vector<1x32xf32> to vector<2x32xf32>
    %281 = arith.mulf %279, %280 : vector<2x32xf32>
    %282 = vector.broadcast %220 : vector<1x32xf32> to vector<2x32xf32>
    %283 = arith.addf %281, %282 : vector<2x32xf32>
    %284 = arith.mulf %9, %283 : vector<2x32xf32>
    %cst_85 = arith.constant dense<0.000000e+00> : vector<2xf32>
    %285 = vector.multi_reduction <add>, %284, %cst_85 [1] : vector<2x32xf32> to vector<2xf32>
    %286 = vector.shape_cast %285 : vector<2xf32> to vector<2x1xf32>
    %c0_86 = arith.constant 0 : index
    %c0_87 = arith.constant 0 : index
    %287 = vector.load %arg4[%c0_86, %c0_87] : memref<2x1xf32, #tpu.memory_space<vmem>>, vector<2x1xf32>
    tpu.vector_store %arg4[%c0_86, %c0_87], %286 {strides = array<i32>} : memref<2x1xf32, #tpu.memory_space<vmem>>, vector<2x1xf32>,
    return
  }
}

</mosaic_0001>

<llo_original>
// kernel: tpu_custom_call.1
$region0: #{tpu_custom_call.1}
  #allocation0 [shape = 'u32[]', space=smem, size = 0x4, offset = 0x4, fixed_abs, tag = 'smem constant byte address 0x4 - core index']
  #allocation1 [shape = 'u32[144,128]{1,0:T(1,128)}', space=vmem, size = 0x12000, scoped, tag = 'internal scratch']
  #allocation2 [shape = 's32[1]{0:T(128)S(6)}', space=smem, size = 0x200, scoped, tag = 'scoped memory for tpu_custom_call.1']
  %s0 = inlined_call_operand.<no memory space> [shape: s32[1], index: 0, kind: input, shape index: {}]
  %s1 = inlined_call_operand.vmem [shape: s32[32,1], index: 1, kind: input, shape index: {}]
  %s2 = inlined_call_operand.vmem [shape: f32[80,768], index: 2, kind: input, shape index: {}]
  %s3 = inlined_call_operand.vmem [shape: f32[280,64], index: 3, kind: input, shape index: {}]
  %s4 = inlined_call_operand.vmem [shape: f32[2,1], index: 4, kind: output, shape index: {}]
  %s5 = sld [smem:[#allocation0]]
  $region26: #{tpu_custom_call.1} parent=0
    _
  %s7 = ssub.s32 1, %s5
  %s8 = scalar_select 0, %s7, %s5
  %9 = sst [smem:[#allocation2]] %s0
  // Predicated region
  $region2: #{tpu_custom_call.1} parent=0 // pred_check
    _
  $region3: #{tpu_custom_call.1} parent=0 // pred_check_branch
    %11 = sbr.rel (0) target = $region5
  $region4: #{tpu_custom_call.1} parent=0 // pred_region
    _
  $region5: #{tpu_custom_call.1} parent=0 // pred_fallthru
    _
  // Predicated region
  $region6: #{tpu_custom_call.1} parent=0 // pred_check
    _
  $region7: #{tpu_custom_call.1} parent=0 // pred_check_branch
    %13 = sbr.rel (0) target = $region9
  $region8: #{tpu_custom_call.1} parent=0 // pred_region
    _
  $region9: #{tpu_custom_call.1} parent=0 // pred_fallthru
    _
  // Predicated region
  $region10: #{tpu_custom_call.1} parent=0 // pred_check
    _
  $region11: #{tpu_custom_call.1} parent=0 // pred_check_branch
    %15 = sbr.rel (0) target = $region13
  $region12: #{tpu_custom_call.1} parent=0 // pred_region
    _
  $region13: #{tpu_custom_call.1} parent=0 // pred_fallthru
    _
  // Predicated region
  $region14: #{tpu_custom_call.1} parent=0 // pred_check
    _
  $region15: #{tpu_custom_call.1} parent=0 // pred_check_branch
    %17 = sbr.rel (0) target = $region17
  $region16: #{tpu_custom_call.1} parent=0 // pred_region
    _
  $region17: #{tpu_custom_call.1} parent=0 // pred_fallthru
    _
  %v18 = vld [vmem:[%s1] sm:$0xff]
  %v19 = vld [vmem:[%s1 + $0x8] sm:$0xff]
  %v20 = vld [vmem:[%s1 + $0x10] sm:$0xff]
  %v21 = vld [vmem:[%s1 + $0x18] sm:$0xff]
  %v22 = vld [vmem:[%s3] sm:$0xff]
  %v23 = vld [vmem:[%s3 + $0x8] sm:$0xff]
  %v24 = vld [vmem:[%s3 + $0x10] sm:$0xff]
  %v25 = vld [vmem:[%s3 + $0x18] sm:$0xff]
  %v26 = vld [vmem:[%s3 + $0x20] sm:$0xff]
  %v27 = vld [vmem:[%s3 + $0x28] sm:$0xff]
  %v28 = vld [vmem:[%s3 + $0x30] sm:$0xff]
  %v29 = vld [vmem:[%s3 + $0x38] sm:$0xff]
  %v30 = vlaneseq
  %v31 = vand.u32 %v30, 127
  %32 = vset.pattern.permute.xlu0 0
  %33 = vperm.xlu0 %32, %v18
  %v34 = vpop.permute.xlu0 %33
  %35 = vset.pattern.permute.xlu0 0
  %36 = vperm.xlu0 %35, %v19
  %v37 = vpop.permute.xlu0 %36
  %38 = vset.pattern.permute.xlu0 0
  %39 = vperm.xlu0 %38, %v20
  %v40 = vpop.permute.xlu0 %39
  %41 = vset.pattern.permute.xlu0 0
  %42 = vperm.xlu0 %41, %v21
  %v43 = vpop.permute.xlu0 %42
  %vm44 = vcmp.eq.s32.totalorder %v34, %v31
  %vm45 = vcmp.eq.s32.totalorder %v37, %v31
  %vm46 = vcmp.eq.s32.totalorder %v40, %v31
  %vm47 = vcmp.eq.s32.totalorder %v43, %v31
  %v48 = vsel %vm44, 1, 0
  %v49 = vsel %vm45, 1, 0
  %v50 = vsel %vm46, 1, 0
  %v51 = vsel %vm47, 1, 0
  %v52 = vcvt.s32.f32 %v48
  %v53 = vcvt.s32.f32 %v49
  %v54 = vcvt.s32.f32 %v50
  %v55 = vcvt.s32.f32 %v51
  %vm56 = vcmask 523264
  %v58 = vsel %vm56, %v52, 0
  %v61 = vsel %vm56, %v53, 0
  %v64 = vsel %vm56, %v54, 0
  %v67 = vsel %vm56, %v55, 0
  %69 = vmatprep.subr.mxu0 0.0
  %70 = vmatpush1.msra.mxu0 0.0
  %71 = vmatprep.subr.mxu0 0.0
  %72 = vmatpush1.msra.mxu0 0.0
  %73 = vmatprep.subr.mxu0 0.0
  %74 = vmatpush1.msra.mxu0 0.0
  %75 = vmatprep.subr.mxu0 0.0
  %76 = vmatpush1.msra.mxu0 0.0
  %77 = vmatprep.subr.mxu0 0.0
  %78 = vmatpush1.msra.mxu0 0.0
  %79 = vmatprep.subr.mxu0 0.0
  %80 = vmatpush1.msra.mxu0 0.0
  %81 = vmatprep.subr.mxu0 0.0
  %82 = vmatpush1.msra.mxu0 0.0
  %83 = vmatprep.subr.mxu0 0.0
  %84 = vmatpush1.msra.mxu0 0.0
  %85 = vmatprep.subr.mxu0 0.0
  %86 = vmatpush1.msra.mxu0 %v29
  %87 = vmatprep.subr.mxu0 0.0
  %88 = vmatpush1.msra.mxu0 %v28
  %89 = vmatprep.subr.mxu0 0.0
  %90 = vmatpush1.msra.mxu0 %v27
  %91 = vmatprep.subr.mxu0 0.0
  %92 = vmatpush1.msra.mxu0 %v26
  %93 = vmatprep.subr.mxu0 0.0
  %94 = vmatpush1.msra.mxu0 %v25
  %95 = vmatprep.subr.mxu0 0.0
  %96 = vmatpush1.msra.mxu0 %v24
  %97 = vmatprep.subr.mxu0 0.0
  %98 = vmatpush1.msra.mxu0 %v23
  %99 = vmatprep.subr.mxu0 0.0
  %100 = vmatpush1.msra.mxu0 %v22
  %101 = vmatprep.subr.mxu0 0.0
  %102 = vmatpush2.msra.mxu0 0.0
  %103 = vmatprep.subr.mxu0 0.0
  %104 = vmatpush2.msra.mxu0 0.0
  %105 = vmatprep.subr.mxu0 0.0
  %106 = vmatpush2.msra.mxu0 0.0
  %107 = vmatprep.subr.mxu0 0.0
  %108 = vmatpush2.msra.mxu0 0.0
  %109 = vmatprep.subr.mxu0 0.0
  %110 = vmatpush2.msra.mxu0 0.0
  %111 = vmatprep.subr.mxu0 0.0
  %112 = vmatpush2.msra.mxu0 0.0
  %113 = vmatprep.subr.mxu0 0.0
  %114 = vmatpush2.msra.mxu0 0.0
  %115 = vmatprep.subr.mxu0 0.0
  %116 = vmatpush2.msra.mxu0 0.0
  %117 = vmatprep.subr.mxu0 0.0
  %118 = vmatpush2.msra.mxu0 0.0
  %119 = vmatprep.subr.mxu0 0.0
  %120 = vmatpush2.msra.mxu0 0.0
  %121 = vmatprep.subr.mxu0 0.0
  %122 = vmatpush2.msra.mxu0 0.0
  %123 = vmatprep.subr.mxu0 0.0
  %124 = vmatpush2.msra.mxu0 0.0
  %125 = vmatprep.subr.mxu0 0.0
  %126 = vmatpush2.msra.mxu0 0.0
  %127 = vmatprep.subr.mxu0 0.0
  %128 = vmatpush2.msra.mxu0 0.0
  %129 = vmatprep.subr.mxu0 0.0
  %130 = vmatpush2.msra.mxu0 0.0
  %131 = vmatprep.subr.mxu0 0.0
  %132 = vmatpush2.msra.mxu0 0.0
  %133 = vmatprep.mubr.f32.mxu0 0.0
  %134 = vmatmul.mubr.f32.gmra.mxu0 %v58
  %v135 = vpop.f32.mrf.mxu0
  %v136 = vadd.f32 0.0, %v135
  %v137 = vpop.f32.mrf.mxu0
  %138 = vmatprep.mubr.f32.mxu0 0.0
  %139 = vmatmul.mubr.f32.gmra.mxu0 %v61
  %v140 = vpop.f32.mrf.mxu0
  %v141 = vadd.f32 0.0, %v140
  %v142 = vpop.f32.mrf.mxu0
  %143 = vmatprep.mubr.f32.mxu0 0.0
  %144 = vmatmul.mubr.f32.gmra.mxu0 %v64
  %v145 = vpop.f32.mrf.mxu0
  %v146 = vadd.f32 0.0, %v145
  %v147 = vpop.f32.mrf.mxu0
  %148 = vmatprep.mubr.f32.mxu0 0.0
  %149 = vmatmul.mubr.f32.gmra.mxu0 %v67
  %v150 = vpop.f32.mrf.mxu0
  %v151 = vadd.f32 0.0, %v150
  %v152 = vpop.f32.mrf.mxu0
  %153 = vdwg.mxu0
  %v154 = vld [vmem:[%s2] sm:$0xff]
  %v155 = vld [vmem:[%s2 + $0x8] sm:$0xff]
  %v156 = vld [vmem:[%s2 + $0x10] sm:$0xff]
  %v157 = vld [vmem:[%s2 + $0x18] sm:$0xff]
  %v158 = vld [vmem:[%s2 + $0x20] sm:$0xff]
  %v159 = vld [vmem:[%s2 + $0x28] sm:$0xff]
  %v160 = vld [vmem:[%s2 + $0x30] sm:$0xff]
  %v161 = vld [vmem:[%s2 + $0x38] sm:$0xff]
  %v162 = vld [vmem:[%s2 + $0x40] sm:$0xff]
  %v163 = vld [vmem:[%s2 + $0x48] sm:$0xff]
  %v164 = vld [vmem:[%s2 + $0x50] sm:$0xff]
  %v165 = vld [vmem:[%s2 + $0x58] sm:$0xff]
  %v166 = vld [vmem:[%s2 + $0x60] sm:$0xff]
  %v167 = vld [vmem:[%s2 + $0x68] sm:$0xff]
  %v168 = vld [vmem:[%s2 + $0x70] sm:$0xff]
  %v169 = vld [vmem:[%s2 + $0x78] sm:$0xff]
  %v170 = vld [vmem:[%s2 + $0x80] sm:$0xff]
  %v171 = vld [vmem:[%s2 + $0x88] sm:$0xff]
  %v172 = vld [vmem:[%s2 + $0x90] sm:$0xff]
  %v173 = vld [vmem:[%s2 + $0x98] sm:$0xff]
  %v174 = vld [vmem:[%s2 + $0xa0] sm:$0xff]
  %v175 = vld [vmem:[%s2 + $0xa8] sm:$0xff]
  %v176 = vld [vmem:[%s2 + $0xb0] sm:$0xff]
  %v177 = vld [vmem:[%s2 + $0xb8] sm:$0xff]
  %s178 = scalar_lea.vmem %s2, 192
  %v179 = vld [vmem:[%s178] ss:$8 sm:$0xf]
  %v180 = vld [vmem:[%s178] ss:$8 sm:$0x30]
  %v181 = vor.u32 %v179, %v180
  %v183 = vlaneseq
  %v184 = vshrl.u32 %v183, 7
  %v185 = vsub.s32 0, %v184
  %v186 = vrot.slane %v181, %v185
  %v187 = vlaneseq
  %v188 = vshrl.u32 %v187, 7
  %v189 = vsub.s32 1, %v188
  %v190 = vrot.slane %v181, %v189
  %v191 = vlaneseq
  %v192 = vshrl.u32 %v191, 7
  %v193 = vsub.s32 2, %v192
  %v194 = vrot.slane %v181, %v193
  %v195 = vlaneseq
  %v196 = vshrl.u32 %v195, 7
  %v197 = vsub.s32 3, %v196
  %v198 = vrot.slane %v181, %v197
  %v199 = vlaneseq
  %v200 = vshrl.u32 %v199, 7
  %v201 = vsub.s32 4, %v200
  %v202 = vrot.slane %v181, %v201
  %v203 = vlaneseq
  %v204 = vshrl.u32 %v203, 7
  %v205 = vsub.s32 5, %v204
  %v206 = vrot.slane %v181, %v205
  %vm213 = vcmask 261120
  %v215 = vsel %vm213, %v136, 0
  %v218 = vsel %vm213, %v141, 0
  %220 = vmatprep.subr.mxu0 0.0
  %221 = vmatpush1.msra.mxu0 0.0
  %222 = vmatprep.subr.mxu0 0.0
  %223 = vmatpush1.msra.mxu0 0.0
  %224 = vmatprep.subr.mxu0 0.0
  %225 = vmatpush1.msra.mxu0 0.0
  %226 = vmatprep.subr.mxu0 0.0
  %227 = vmatpush1.msra.mxu0 0.0
  %228 = vmatprep.subr.mxu0 0.0
  %229 = vmatpush1.msra.mxu0 0.0
  %230 = vmatprep.subr.mxu0 0.0
  %231 = vmatpush1.msra.mxu0 0.0
  %232 = vmatprep.subr.mxu0 0.0
  %233 = vmatpush1.msra.mxu0 0.0
  %234 = vmatprep.subr.mxu0 0.0
  %235 = vmatpush1.msra.mxu0 0.0
  %236 = vmatprep.subr.mxu0 0.0
  %237 = vmatpush1.msra.mxu0 0.0
  %238 = vmatprep.subr.mxu0 0.0
  %239 = vmatpush1.msra.mxu0 0.0
  %240 = vmatprep.subr.mxu0 0.0
  %241 = vmatpush1.msra.mxu0 0.0
  %242 = vmatprep.subr.mxu0 0.0
  %243 = vmatpush1.msra.mxu0 0.0
  %244 = vmatprep.subr.mxu0 %v173
  %245 = vmatpush1.msra.mxu0 %v172
  %246 = vmatprep.subr.mxu0 %v167
  %247 = vmatpush1.msra.mxu0 %v166
  %248 = vmatprep.subr.mxu0 %v161
  %249 = vmatpush1.msra.mxu0 %v160
  %250 = vmatprep.subr.mxu0 %v155
  %251 = vmatpush1.msra.mxu0 %v154
  %252 = vmatprep.subr.mxu0 0.0
  %253 = vmatpush2.msra.mxu0 0.0
  %254 = vmatprep.subr.mxu0 0.0
  %255 = vmatpush2.msra.mxu0 0.0
  %256 = vmatprep.subr.mxu0 0.0
  %257 = vmatpush2.msra.mxu0 0.0
  %258 = vmatprep.subr.mxu0 0.0
  %259 = vmatpush2.msra.mxu0 0.0
  %260 = vmatprep.subr.mxu0 0.0
  %261 = vmatpush2.msra.mxu0 0.0
  %262 = vmatprep.subr.mxu0 0.0
  %263 = vmatpush2.msra.mxu0 0.0
  %264 = vmatprep.subr.mxu0 0.0
  %265 = vmatpush2.msra.mxu0 0.0
  %266 = vmatprep.subr.mxu0 0.0
  %267 = vmatpush2.msra.mxu0 0.0
  %268 = vmatprep.subr.mxu0 0.0
  %269 = vmatpush2.msra.mxu0 0.0
  %270 = vmatprep.subr.mxu0 0.0
  %271 = vmatpush2.msra.mxu0 0.0
  %272 = vmatprep.subr.mxu0 0.0
  %273 = vmatpush2.msra.mxu0 0.0
  %274 = vmatprep.subr.mxu0 0.0
  %275 = vmatpush2.msra.mxu0 0.0
  %276 = vmatprep.subr.mxu0 0.0
  %277 = vmatpush2.msra.mxu0 0.0
  %278 = vmatprep.subr.mxu0 0.0
  %279 = vmatpush2.msra.mxu0 0.0
  %280 = vmatprep.subr.mxu0 0.0
  %281 = vmatpush2.msra.mxu0 0.0
  %282 = vmatprep.subr.mxu0 0.0
  %283 = vmatpush2.msra.mxu0 0.0
  %284 = vmatprep.mubr.f32.mxu0 0.0
  %285 = vmatmul.mubr.f32.gmra.mxu0 %v215
  %v286 = vpop.f32.mrf.mxu0
  %v287 = vadd.f32 %v186, %v286
  %v288 = vpop.f32.mrf.mxu0
  %v289 = vadd.f32 %v190, %v288
  %290 = vmatprep.mubr.f32.mxu0 0.0
  %291 = vmatmul.mubr.f32.gmra.mxu0 %v218
  %v292 = vpop.f32.mrf.mxu0
  %v293 = vadd.f32 %v186, %v292
  %v294 = vpop.f32.mrf.mxu0
  %v295 = vadd.f32 %v190, %v294
  %296 = vdwg.mxu0
  %297 = vmatprep.subr.mxu0 0.0
  %298 = vmatpush1.msra.mxu0 0.0
  %299 = vmatprep.subr.mxu0 0.0
  %300 = vmatpush1.msra.mxu0 0.0
  %301 = vmatprep.subr.mxu0 0.0
  %302 = vmatpush1.msra.mxu0 0.0
  %303 = vmatprep.subr.mxu0 0.0
  %304 = vmatpush1.msra.mxu0 0.0
  %305 = vmatprep.subr.mxu0 0.0
  %306 = vmatpush1.msra.mxu0 0.0
  %307 = vmatprep.subr.mxu0 0.0
  %308 = vmatpush1.msra.mxu0 0.0
  %309 = vmatprep.subr.mxu0 0.0
  %310 = vmatpush1.msra.mxu0 0.0
  %311 = vmatprep.subr.mxu0 0.0
  %312 = vmatpush1.msra.mxu0 0.0
  %313 = vmatprep.subr.mxu0 0.0
  %314 = vmatpush1.msra.mxu0 0.0
  %315 = vmatprep.subr.mxu0 0.0
  %316 = vmatpush1.msra.mxu0 0.0
  %317 = vmatprep.subr.mxu0 0.0
  %318 = vmatpush1.msra.mxu0 0.0
  %319 = vmatprep.subr.mxu0 0.0
  %320 = vmatpush1.msra.mxu0 0.0
  %321 = vmatprep.subr.mxu0 %v175
  %322 = vmatpush1.msra.mxu0 %v174
  %323 = vmatprep.subr.mxu0 %v169
  %324 = vmatpush1.msra.mxu0 %v168
  %325 = vmatprep.subr.mxu0 %v163
  %326 = vmatpush1.msra.mxu0 %v162
  %327 = vmatprep.subr.mxu0 %v157
  %328 = vmatpush1.msra.mxu0 %v156
  %329 = vmatprep.subr.mxu0 0.0
  %330 = vmatpush2.msra.mxu0 0.0
  %331 = vmatprep.subr.mxu0 0.0
  %332 = vmatpush2.msra.mxu0 0.0
  %333 = vmatprep.subr.mxu0 0.0
  %334 = vmatpush2.msra.mxu0 0.0
  %335 = vmatprep.subr.mxu0 0.0
  %336 = vmatpush2.msra.mxu0 0.0
  %337 = vmatprep.subr.mxu0 0.0
  %338 = vmatpush2.msra.mxu0 0.0
  %339 = vmatprep.subr.mxu0 0.0
  %340 = vmatpush2.msra.mxu0 0.0
  %341 = vmatprep.subr.mxu0 0.0
  %342 = vmatpush2.msra.mxu0 0.0
  %343 = vmatprep.subr.mxu0 0.0
  %344 = vmatpush2.msra.mxu0 0.0
  %345 = vmatprep.subr.mxu0 0.0
  %346 = vmatpush2.msra.mxu0 0.0
  %347 = vmatprep.subr.mxu0 0.0
  %348 = vmatpush2.msra.mxu0 0.0
  %349 = vmatprep.subr.mxu0 0.0
  %350 = vmatpush2.msra.mxu0 0.0
  %351 = vmatprep.subr.mxu0 0.0
  %352 = vmatpush2.msra.mxu0 0.0
  %353 = vmatprep.subr.mxu0 0.0
  %354 = vmatpush2.msra.mxu0 0.0
  %355 = vmatprep.subr.mxu0 0.0
  %356 = vmatpush2.msra.mxu0 0.0
  %357 = vmatprep.subr.mxu0 0.0
  %358 = vmatpush2.msra.mxu0 0.0
  %359 = vmatprep.subr.mxu0 0.0
  %360 = vmatpush2.msra.mxu0 0.0
  %361 = vmatprep.mubr.f32.mxu0 0.0
  %362 = vmatmul.mubr.f32.gmra.mxu0 %v215
  %v363 = vpop.f32.mrf.mxu0
  %v364 = vadd.f32 %v194, %v363
  %v365 = vpop.f32.mrf.mxu0
  %v366 = vadd.f32 %v198, %v365
  %367 = vmatprep.mubr.f32.mxu0 0.0
  %368 = vmatmul.mubr.f32.gmra.mxu0 %v218
  %v369 = vpop.f32.mrf.mxu0
  %v370 = vadd.f32 %v194, %v369
  %v371 = vpop.f32.mrf.mxu0
  %v372 = vadd.f32 %v198, %v371
  %373 = vdwg.mxu0
  %374 = vmatprep.subr.mxu0 0.0
  %375 = vmatpush1.msra.mxu0 0.0
  %376 = vmatprep.subr.mxu0 0.0
  %377 = vmatpush1.msra.mxu0 0.0
  %378 = vmatprep.subr.mxu0 0.0
  %379 = vmatpush1.msra.mxu0 0.0
  %380 = vmatprep.subr.mxu0 0.0
  %381 = vmatpush1.msra.mxu0 0.0
  %382 = vmatprep.subr.mxu0 0.0
  %383 = vmatpush1.msra.mxu0 0.0
  %384 = vmatprep.subr.mxu0 0.0
  %385 = vmatpush1.msra.mxu0 0.0
  %386 = vmatprep.subr.mxu0 0.0
  %387 = vmatpush1.msra.mxu0 0.0
  %388 = vmatprep.subr.mxu0 0.0
  %389 = vmatpush1.msra.mxu0 0.0
  %390 = vmatprep.subr.mxu0 0.0
  %391 = vmatpush1.msra.mxu0 0.0
  %392 = vmatprep.subr.mxu0 0.0
  %393 = vmatpush1.msra.mxu0 0.0
  %394 = vmatprep.subr.mxu0 0.0
  %395 = vmatpush1.msra.mxu0 0.0
  %396 = vmatprep.subr.mxu0 0.0
  %397 = vmatpush1.msra.mxu0 0.0
  %398 = vmatprep.subr.mxu0 %v177
  %399 = vmatpush1.msra.mxu0 %v176
  %400 = vmatprep.subr.mxu0 %v171
  %401 = vmatpush1.msra.mxu0 %v170
  %402 = vmatprep.subr.mxu0 %v165
  %403 = vmatpush1.msra.mxu0 %v164
  %404 = vmatprep.subr.mxu0 %v159
  %405 = vmatpush1.msra.mxu0 %v158
  %406 = vmatprep.subr.mxu0 0.0
  %407 = vmatpush2.msra.mxu0 0.0
  %408 = vmatprep.subr.mxu0 0.0
  %409 = vmatpush2.msra.mxu0 0.0
  %410 = vmatprep.subr.mxu0 0.0
  %411 = vmatpush2.msra.mxu0 0.0
  %412 = vmatprep.subr.mxu0 0.0
  %413 = vmatpush2.msra.mxu0 0.0
  %414 = vmatprep.subr.mxu0 0.0
  %415 = vmatpush2.msra.mxu0 0.0
  %416 = vmatprep.subr.mxu0 0.0
  %417 = vmatpush2.msra.mxu0 0.0
  %418 = vmatprep.subr.mxu0 0.0
  %419 = vmatpush2.msra.mxu0 0.0
  %420 = vmatprep.subr.mxu0 0.0
  %421 = vmatpush2.msra.mxu0 0.0
  %422 = vmatprep.subr.mxu0 0.0
  %423 = vmatpush2.msra.mxu0 0.0
  %424 = vmatprep.subr.mxu0 0.0
  %425 = vmatpush2.msra.mxu0 0.0
  %426 = vmatprep.subr.mxu0 0.0
  %427 = vmatpush2.msra.mxu0 0.0
  %428 = vmatprep.subr.mxu0 0.0
  %429 = vmatpush2.msra.mxu0 0.0
  %430 = vmatprep.subr.mxu0 0.0
  %431 = vmatpush2.msra.mxu0 0.0
  %432 = vmatprep.subr.mxu0 0.0
  %433 = vmatpush2.msra.mxu0 0.0
  %434 = vmatprep.subr.mxu0 0.0
  %435 = vmatpush2.msra.mxu0 0.0
  %436 = vmatprep.subr.mxu0 0.0
  %437 = vmatpush2.msra.mxu0 0.0
  %438 = vmatprep.mubr.f32.mxu0 0.0
  %439 = vmatmul.mubr.f32.gmra.mxu0 %v215
  %v440 = vpop.f32.mrf.mxu0
  %v441 = vadd.f32 %v202, %v440
  %v442 = vpop.f32.mrf.mxu0
  %v443 = vadd.f32 %v206, %v442
  %444 = vmatprep.mubr.f32.mxu0 0.0
  %445 = vmatmul.mubr.f32.gmra.mxu0 %v218
  %v446 = vpop.f32.mrf.mxu0
  %v447 = vadd.f32 %v202, %v446
  %v448 = vpop.f32.mrf.mxu0
  %v449 = vadd.f32 %v206, %v448
  %450 = vdwg.mxu0
  %451 = vmatprep.subr.mxu0 0.0
  %452 = vmatpush1.xpose.msra.mxu0 0.0
  %453 = vmatprep.subr.mxu0 0.0
  %454 = vmatpush1.xpose.msra.mxu0 0.0
  %455 = vmatprep.subr.mxu0 0.0
  %456 = vmatpush1.xpose.msra.mxu0 0.0
  %457 = vmatprep.subr.mxu0 0.0
  %458 = vmatpush1.xpose.msra.mxu0 0.0
  %459 = vmatprep.subr.mxu0 0.0
  %460 = vmatpush1.xpose.msra.mxu0 0.0
  %461 = vmatprep.subr.mxu0 0.0
  %462 = vmatpush1.xpose.msra.mxu0 0.0
  %463 = vmatprep.subr.mxu0 0.0
  %464 = vmatpush1.xpose.msra.mxu0 0.0
  %465 = vmatprep.subr.mxu0 0.0
  %466 = vmatpush1.xpose.msra.mxu0 0.0
  %467 = vmatprep.subr.mxu0 0.0
  %468 = vmatpush1.xpose.msra.mxu0 0.0
  %469 = vmatprep.subr.mxu0 0.0
  %470 = vmatpush1.xpose.msra.mxu0 0.0
  %471 = vmatprep.subr.mxu0 0.0
  %472 = vmatpush1.xpose.msra.mxu0 0.0
  %473 = vmatprep.subr.mxu0 0.0
  %474 = vmatpush1.xpose.msra.mxu0 0.0
  %475 = vmatprep.subr.mxu0 0.0
  %476 = vmatpush1.xpose.msra.mxu0 0.0
  %477 = vmatprep.subr.mxu0 0.0
  %478 = vmatpush1.xpose.msra.mxu0 0.0
  %479 = vmatprep.subr.mxu0 0.0
  %480 = vmatpush1.xpose.msra.mxu0 0.0
  %481 = vmatprep.subr.mxu0 0.0
  %482 = vmatpush1.xpose.msra.mxu0 %v364
  %483 = vmatprep.subr.mxu0 0.0
  %484 = vmatpush2.xpose.msra.mxu0 0.0
  %485 = vmatprep.subr.mxu0 0.0
  %486 = vmatpush2.xpose.msra.mxu0 0.0
  %487 = vmatprep.subr.mxu0 0.0
  %488 = vmatpush2.xpose.msra.mxu0 0.0
  %489 = vmatprep.subr.mxu0 0.0
  %490 = vmatpush2.xpose.msra.mxu0 0.0
  %491 = vmatprep.subr.mxu0 0.0
  %492 = vmatpush2.xpose.msra.mxu0 0.0
  %493 = vmatprep.subr.mxu0 0.0
  %494 = vmatpush2.xpose.msra.mxu0 0.0
  %495 = vmatprep.subr.mxu0 0.0
  %496 = vmatpush2.xpose.msra.mxu0 0.0
  %497 = vmatprep.subr.mxu0 0.0
  %498 = vmatpush2.xpose.msra.mxu0 0.0
  %499 = vmatprep.subr.mxu0 0.0
  %500 = vmatpush2.xpose.msra.mxu0 0.0
  %501 = vmatprep.subr.mxu0 0.0
  %502 = vmatpush2.xpose.msra.mxu0 0.0
  %503 = vmatprep.subr.mxu0 0.0
  %504 = vmatpush2.xpose.msra.mxu0 0.0
  %505 = vmatprep.subr.mxu0 0.0
  %506 = vmatpush2.xpose.msra.mxu0 0.0
  %507 = vmatprep.subr.mxu0 0.0
  %508 = vmatpush2.xpose.msra.mxu0 0.0
  %509 = vmatprep.subr.mxu0 0.0
  %510 = vmatpush2.xpose.msra.mxu0 0.0
  %511 = vmatprep.subr.mxu0 0.0
  %512 = vmatpush2.xpose.msra.mxu0 0.0
  %513 = vmatprep.subr.mxu0 0.0
  %514 = vmatpush2.xpose.msra.mxu0 0.0
  %515 = vmatprep.mubr.f32.mxu0 0.0
  %516 = vmatmul.mubr.f32.gmra.mxu0 %v287
  %v517 = vpop.f32.mrf.mxu0
  %v518 = vadd.f32 0.0, %v517
  %v519 = vpop.f32.mrf.mxu0
  %520 = vdwg.mxu0
  %521 = vmatprep.subr.mxu0 0.0
  %522 = vmatpush1.xpose.msra.mxu0 0.0
  %523 = vmatprep.subr.mxu0 0.0
  %524 = vmatpush1.xpose.msra.mxu0 0.0
  %525 = vmatprep.subr.mxu0 0.0
  %526 = vmatpush1.xpose.msra.mxu0 0.0
  %527 = vmatprep.subr.mxu0 0.0
  %528 = vmatpush1.xpose.msra.mxu0 0.0
  %529 = vmatprep.subr.mxu0 0.0
  %530 = vmatpush1.xpose.msra.mxu0 0.0
  %531 = vmatprep.subr.mxu0 0.0
  %532 = vmatpush1.xpose.msra.mxu0 0.0
  %533 = vmatprep.subr.mxu0 0.0
  %534 = vmatpush1.xpose.msra.mxu0 0.0
  %535 = vmatprep.subr.mxu0 0.0
  %536 = vmatpush1.xpose.msra.mxu0 0.0
  %537 = vmatprep.subr.mxu0 0.0
  %538 = vmatpush1.xpose.msra.mxu0 0.0
  %539 = vmatprep.subr.mxu0 0.0
  %540 = vmatpush1.xpose.msra.mxu0 0.0
  %541 = vmatprep.subr.mxu0 0.0
  %542 = vmatpush1.xpose.msra.mxu0 0.0
  %543 = vmatprep.subr.mxu0 0.0
  %544 = vmatpush1.xpose.msra.mxu0 0.0
  %545 = vmatprep.subr.mxu0 0.0
  %546 = vmatpush1.xpose.msra.mxu0 0.0
  %547 = vmatprep.subr.mxu0 0.0
  %548 = vmatpush1.xpose.msra.mxu0 0.0
  %549 = vmatprep.subr.mxu0 0.0
  %550 = vmatpush1.xpose.msra.mxu0 0.0
  %551 = vmatprep.subr.mxu0 0.0
  %552 = vmatpush1.xpose.msra.mxu0 %v370
  %553 = vmatprep.subr.mxu0 0.0
  %554 = vmatpush2.xpose.msra.mxu0 0.0
  %555 = vmatprep.subr.mxu0 0.0
  %556 = vmatpush2.xpose.msra.mxu0 0.0
  %557 = vmatprep.subr.mxu0 0.0
  %558 = vmatpush2.xpose.msra.mxu0 0.0
  %559 = vmatprep.subr.mxu0 0.0
  %560 = vmatpush2.xpose.msra.mxu0 0.0
  %561 = vmatprep.subr.mxu0 0.0
  %562 = vmatpush2.xpose.msra.mxu0 0.0
  %563 = vmatprep.subr.mxu0 0.0
  %564 = vmatpush2.xpose.msra.mxu0 0.0
  %565 = vmatprep.subr.mxu0 0.0
  %566 = vmatpush2.xpose.msra.mxu0 0.0
  %567 = vmatprep.subr.mxu0 0.0
  %568 = vmatpush2.xpose.msra.mxu0 0.0
  %569 = vmatprep.subr.mxu0 0.0
  %570 = vmatpush2.xpose.msra.mxu0 0.0
  %571 = vmatprep.subr.mxu0 0.0
  %572 = vmatpush2.xpose.msra.mxu0 0.0
  %573 = vmatprep.subr.mxu0 0.0
  %574 = vmatpush2.xpose.msra.mxu0 0.0
  %575 = vmatprep.subr.mxu0 0.0
  %576 = vmatpush2.xpose.msra.mxu0 0.0
  %577 = vmatprep.subr.mxu0 0.0
  %578 = vmatpush2.xpose.msra.mxu0 0.0
  %579 = vmatprep.subr.mxu0 0.0
  %580 = vmatpush2.xpose.msra.mxu0 0.0
  %581 = vmatprep.subr.mxu0 0.0
  %582 = vmatpush2.xpose.msra.mxu0 0.0
  %583 = vmatprep.subr.mxu0 0.0
  %584 = vmatpush2.xpose.msra.mxu0 0.0
  %585 = vmatprep.mubr.f32.mxu0 0.0
  %586 = vmatmul.mubr.f32.gmra.mxu0 %v293
  %v587 = vpop.f32.mrf.mxu0
  %v588 = vadd.f32 0.0, %v587
  %v589 = vpop.f32.mrf.mxu0
  %590 = vdwg.mxu0
  %vm591 = vcmask 64512
  %v592 = vsel %vm591, %v518, -inf
  %593 = vmax.xlane.f32.xlu0 %v592
  %v594 = vpop.xlane.xlu0 %593
  %v595 = vsel %vm591, %v588, -inf
  %596 = vmax.xlane.f32.xlu0 %v595
  %v597 = vpop.xlane.xlu0 %596
  %v598 = vsub.f32 %v518, %v594
  %v599 = vsub.f32 %v588, %v597
  %v600 = vmul.f32 %v598, 1.442695
  %v601 = vpow.pop %v600
  %v602 = vmul.f32 %v599, 1.442695
  %v603 = vpow.pop %v602
  %v604 = vsel %vm591, %v601, 0.0
  %605 = vadd.xlane.f32.xlu0 %v604
  %v606 = vpop.xlane.xlu0 %605
  %v607 = vsel %vm591, %v603, 0.0
  %608 = vadd.xlane.f32.xlu0 %v607
  %v609 = vpop.xlane.xlu0 %608
  %v610 = vrcp.pop %v606
  %v611 = vrcp.pop %v609
  %v612 = vmul.f32 %v601, %v610
  %v613 = vmul.f32 %v603, %v611
  %614 = vmatprep.subr.mxu0 0.0
  %615 = vmatpush1.xpose.msra.mxu0 0.0
  %616 = vmatprep.subr.mxu0 0.0
  %617 = vmatpush1.xpose.msra.mxu0 0.0
  %618 = vmatprep.subr.mxu0 0.0
  %619 = vmatpush1.xpose.msra.mxu0 0.0
  %620 = vmatprep.subr.mxu0 0.0
  %621 = vmatpush1.xpose.msra.mxu0 0.0
  %622 = vmatprep.subr.mxu0 0.0
  %623 = vmatpush1.xpose.msra.mxu0 0.0
  %624 = vmatprep.subr.mxu0 0.0
  %625 = vmatpush1.xpose.msra.mxu0 0.0
  %626 = vmatprep.subr.mxu0 0.0
  %627 = vmatpush1.xpose.msra.mxu0 0.0
  %628 = vmatprep.subr.mxu0 0.0
  %629 = vmatpush1.xpose.msra.mxu0 0.0
  %630 = vmatprep.subr.mxu0 0.0
  %631 = vmatpush1.xpose.msra.mxu0 0.0
  %632 = vmatprep.subr.mxu0 0.0
  %633 = vmatpush1.xpose.msra.mxu0 0.0
  %634 = vmatprep.subr.mxu0 0.0
  %635 = vmatpush1.xpose.msra.mxu0 0.0
  %636 = vmatprep.subr.mxu0 0.0
  %637 = vmatpush1.xpose.msra.mxu0 0.0
  %638 = vmatprep.subr.mxu0 0.0
  %639 = vmatpush1.xpose.msra.mxu0 0.0
  %640 = vmatprep.subr.mxu0 0.0
  %641 = vmatpush1.xpose.msra.mxu0 0.0
  %642 = vmatprep.subr.mxu0 0.0
  %643 = vmatpush1.xpose.msra.mxu0 0.0
  %644 = vmatprep.subr.mxu0 0.0
  %645 = vmatpush1.xpose.msra.mxu0 %v366
  %646 = vmatprep.subr.mxu0 0.0
  %647 = vmatpush2.xpose.msra.mxu0 0.0
  %648 = vmatprep.subr.mxu0 0.0
  %649 = vmatpush2.xpose.msra.mxu0 0.0
  %650 = vmatprep.subr.mxu0 0.0
  %651 = vmatpush2.xpose.msra.mxu0 0.0
  %652 = vmatprep.subr.mxu0 0.0
  %653 = vmatpush2.xpose.msra.mxu0 0.0
  %654 = vmatprep.subr.mxu0 0.0
  %655 = vmatpush2.xpose.msra.mxu0 0.0
  %656 = vmatprep.subr.mxu0 0.0
  %657 = vmatpush2.xpose.msra.mxu0 0.0
  %658 = vmatprep.subr.mxu0 0.0
  %659 = vmatpush2.xpose.msra.mxu0 0.0
  %660 = vmatprep.subr.mxu0 0.0
  %661 = vmatpush2.xpose.msra.mxu0 0.0
  %662 = vmatprep.subr.mxu0 0.0
  %663 = vmatpush2.xpose.msra.mxu0 0.0
  %664 = vmatprep.subr.mxu0 0.0
  %665 = vmatpush2.xpose.msra.mxu0 0.0
  %666 = vmatprep.subr.mxu0 0.0
  %667 = vmatpush2.xpose.msra.mxu0 0.0
  %668 = vmatprep.subr.mxu0 0.0
  %669 = vmatpush2.xpose.msra.mxu0 0.0
  %670 = vmatprep.subr.mxu0 0.0
  %671 = vmatpush2.xpose.msra.mxu0 0.0
  %672 = vmatprep.subr.mxu0 0.0
  %673 = vmatpush2.xpose.msra.mxu0 0.0
  %674 = vmatprep.subr.mxu0 0.0
  %675 = vmatpush2.xpose.msra.mxu0 0.0
  %676 = vmatprep.subr.mxu0 0.0
  %677 = vmatpush2.xpose.msra.mxu0 0.0
  %678 = vmatprep.mubr.f32.mxu0 0.0
  %679 = vmatmul.mubr.f32.gmra.mxu0 %v289
  %v680 = vpop.f32.mrf.mxu0
  %v681 = vadd.f32 0.0, %v680
  %v682 = vpop.f32.mrf.mxu0
  %683 = vdwg.mxu0
  %684 = vmatprep.subr.mxu0 0.0
  %685 = vmatpush1.xpose.msra.mxu0 0.0
  %686 = vmatprep.subr.mxu0 0.0
  %687 = vmatpush1.xpose.msra.mxu0 0.0
  %688 = vmatprep.subr.mxu0 0.0
  %689 = vmatpush1.xpose.msra.mxu0 0.0
  %690 = vmatprep.subr.mxu0 0.0
  %691 = vmatpush1.xpose.msra.mxu0 0.0
  %692 = vmatprep.subr.mxu0 0.0
  %693 = vmatpush1.xpose.msra.mxu0 0.0
  %694 = vmatprep.subr.mxu0 0.0
  %695 = vmatpush1.xpose.msra.mxu0 0.0
  %696 = vmatprep.subr.mxu0 0.0
  %697 = vmatpush1.xpose.msra.mxu0 0.0
  %698 = vmatprep.subr.mxu0 0.0
  %699 = vmatpush1.xpose.msra.mxu0 0.0
  %700 = vmatprep.subr.mxu0 0.0
  %701 = vmatpush1.xpose.msra.mxu0 0.0
  %702 = vmatprep.subr.mxu0 0.0
  %703 = vmatpush1.xpose.msra.mxu0 0.0
  %704 = vmatprep.subr.mxu0 0.0
  %705 = vmatpush1.xpose.msra.mxu0 0.0
  %706 = vmatprep.subr.mxu0 0.0
  %707 = vmatpush1.xpose.msra.mxu0 0.0
  %708 = vmatprep.subr.mxu0 0.0
  %709 = vmatpush1.xpose.msra.mxu0 0.0
  %710 = vmatprep.subr.mxu0 0.0
  %711 = vmatpush1.xpose.msra.mxu0 0.0
  %712 = vmatprep.subr.mxu0 0.0
  %713 = vmatpush1.xpose.msra.mxu0 0.0
  %714 = vmatprep.subr.mxu0 0.0
  %715 = vmatpush1.xpose.msra.mxu0 %v372
  %716 = vmatprep.subr.mxu0 0.0
  %717 = vmatpush2.xpose.msra.mxu0 0.0
  %718 = vmatprep.subr.mxu0 0.0
  %719 = vmatpush2.xpose.msra.mxu0 0.0
  %720 = vmatprep.subr.mxu0 0.0
  %721 = vmatpush2.xpose.msra.mxu0 0.0
  %722 = vmatprep.subr.mxu0 0.0
  %723 = vmatpush2.xpose.msra.mxu0 0.0
  %724 = vmatprep.subr.mxu0 0.0
  %725 = vmatpush2.xpose.msra.mxu0 0.0
  %726 = vmatprep.subr.mxu0 0.0
  %727 = vmatpush2.xpose.msra.mxu0 0.0
  %728 = vmatprep.subr.mxu0 0.0
  %729 = vmatpush2.xpose.msra.mxu0 0.0
  %730 = vmatprep.subr.mxu0 0.0
  %731 = vmatpush2.xpose.msra.mxu0 0.0
  %732 = vmatprep.subr.mxu0 0.0
  %733 = vmatpush2.xpose.msra.mxu0 0.0
  %734 = vmatprep.subr.mxu0 0.0
  %735 = vmatpush2.xpose.msra.mxu0 0.0
  %736 = vmatprep.subr.mxu0 0.0
  %737 = vmatpush2.xpose.msra.mxu0 0.0
  %738 = vmatprep.subr.mxu0 0.0
  %739 = vmatpush2.xpose.msra.mxu0 0.0
  %740 = vmatprep.subr.mxu0 0.0
  %741 = vmatpush2.xpose.msra.mxu0 0.0
  %742 = vmatprep.subr.mxu0 0.0
  %743 = vmatpush2.xpose.msra.mxu0 0.0
  %744 = vmatprep.subr.mxu0 0.0
  %745 = vmatpush2.xpose.msra.mxu0 0.0
  %746 = vmatprep.subr.mxu0 0.0
  %747 = vmatpush2.xpose.msra.mxu0 0.0
  %748 = vmatprep.mubr.f32.mxu0 0.0
  %749 = vmatmul.mubr.f32.gmra.mxu0 %v295
  %v750 = vpop.f32.mrf.mxu0
  %v751 = vadd.f32 0.0, %v750
  %v752 = vpop.f32.mrf.mxu0
  %753 = vdwg.mxu0
  %v754 = vsel %vm591, %v681, -inf
  %755 = vmax.xlane.f32.xlu0 %v754
  %v756 = vpop.xlane.xlu0 %755
  %v757 = vsel %vm591, %v751, -inf
  %758 = vmax.xlane.f32.xlu0 %v757
  %v759 = vpop.xlane.xlu0 %758
  %v760 = vsub.f32 %v681, %v756
  %v761 = vsub.f32 %v751, %v759
  %v762 = vmul.f32 %v760, 1.442695
  %v763 = vpow.pop %v762
  %v764 = vmul.f32 %v761, 1.442695
  %v765 = vpow.pop %v764
  %v766 = vsel %vm591, %v763, 0.0
  %767 = vadd.xlane.f32.xlu0 %v766
  %v768 = vpop.xlane.xlu0 %767
  %v769 = vsel %vm591, %v765, 0.0
  %770 = vadd.xlane.f32.xlu0 %v769
  %v771 = vpop.xlane.xlu0 %770
  %v772 = vrcp.pop %v768
  %v773 = vrcp.pop %v771
  %v774 = vmul.f32 %v763, %v772
  %v775 = vmul.f32 %v765, %v773
  %v777 = vsel %vm591, %v774, 0
  %779 = vmatprep.subr.mxu0 0.0
  %780 = vmatpush1.msra.mxu0 0.0
  %781 = vmatprep.subr.mxu0 0.0
  %782 = vmatpush1.msra.mxu0 0.0
  %783 = vmatprep.subr.mxu0 0.0
  %784 = vmatpush1.msra.mxu0 0.0
  %785 = vmatprep.subr.mxu0 0.0
  %786 = vmatpush1.msra.mxu0 0.0
  %787 = vmatprep.subr.mxu0 0.0
  %788 = vmatpush1.msra.mxu0 0.0
  %789 = vmatprep.subr.mxu0 0.0
  %790 = vmatpush1.msra.mxu0 0.0
  %791 = vmatprep.subr.mxu0 0.0
  %792 = vmatpush1.msra.mxu0 0.0
  %793 = vmatprep.subr.mxu0 0.0
  %794 = vmatpush1.msra.mxu0 0.0
  %795 = vmatprep.subr.mxu0 0.0
  %796 = vmatpush1.msra.mxu0 0.0
  %797 = vmatprep.subr.mxu0 0.0
  %798 = vmatpush1.msra.mxu0 0.0
  %799 = vmatprep.subr.mxu0 0.0
  %800 = vmatpush1.msra.mxu0 0.0
  %801 = vmatprep.subr.mxu0 0.0
  %802 = vmatpush1.msra.mxu0 0.0
  %803 = vmatprep.subr.mxu0 0.0
  %804 = vmatpush1.msra.mxu0 0.0
  %805 = vmatprep.subr.mxu0 0.0
  %806 = vmatpush1.msra.mxu0 0.0
  %807 = vmatprep.subr.mxu0 0.0
  %808 = vmatpush1.msra.mxu0 0.0
  %809 = vmatprep.subr.mxu0 0.0
  %810 = vmatpush1.msra.mxu0 %v443
  %811 = vmatprep.subr.mxu0 0.0
  %812 = vmatpush2.msra.mxu0 0.0
  %813 = vmatprep.subr.mxu0 0.0
  %814 = vmatpush2.msra.mxu0 0.0
  %815 = vmatprep.subr.mxu0 0.0
  %816 = vmatpush2.msra.mxu0 0.0
  %817 = vmatprep.subr.mxu0 0.0
  %818 = vmatpush2.msra.mxu0 0.0
  %819 = vmatprep.subr.mxu0 0.0
  %820 = vmatpush2.msra.mxu0 0.0
  %821 = vmatprep.subr.mxu0 0.0
  %822 = vmatpush2.msra.mxu0 0.0
  %823 = vmatprep.subr.mxu0 0.0
  %824 = vmatpush2.msra.mxu0 0.0
  %825 = vmatprep.subr.mxu0 0.0
  %826 = vmatpush2.msra.mxu0 0.0
  %827 = vmatprep.subr.mxu0 0.0
  %828 = vmatpush2.msra.mxu0 0.0
  %829 = vmatprep.subr.mxu0 0.0
  %830 = vmatpush2.msra.mxu0 0.0
  %831 = vmatprep.subr.mxu0 0.0
  %832 = vmatpush2.msra.mxu0 0.0
  %833 = vmatprep.subr.mxu0 0.0
  %834 = vmatpush2.msra.mxu0 0.0
  %835 = vmatprep.subr.mxu0 0.0
  %836 = vmatpush2.msra.mxu0 0.0
  %837 = vmatprep.subr.mxu0 0.0
  %838 = vmatpush2.msra.mxu0 0.0
  %839 = vmatprep.subr.mxu0 0.0
  %840 = vmatpush2.msra.mxu0 0.0
  %841 = vmatprep.subr.mxu0 0.0
  %842 = vmatpush2.msra.mxu0 0.0
  %843 = vmatprep.mubr.f32.mxu0 0.0
  %844 = vmatmul.mubr.f32.gmra.mxu0 %v777
  %v845 = vpop.f32.mrf.mxu0
  %v846 = vadd.f32 0.0, %v845
  %v847 = vpop.f32.mrf.mxu0
  %848 = vdwg.mxu0
  %v850 = vsel %vm591, %v775, 0
  %852 = vmatprep.subr.mxu0 0.0
  %853 = vmatpush1.msra.mxu0 0.0
  %854 = vmatprep.subr.mxu0 0.0
  %855 = vmatpush1.msra.mxu0 0.0
  %856 = vmatprep.subr.mxu0 0.0
  %857 = vmatpush1.msra.mxu0 0.0
  %858 = vmatprep.subr.mxu0 0.0
  %859 = vmatpush1.msra.mxu0 0.0
  %860 = vmatprep.subr.mxu0 0.0
  %861 = vmatpush1.msra.mxu0 0.0
  %862 = vmatprep.subr.mxu0 0.0
  %863 = vmatpush1.msra.mxu0 0.0
  %864 = vmatprep.subr.mxu0 0.0
  %865 = vmatpush1.msra.mxu0 0.0
  %866 = vmatprep.subr.mxu0 0.0
  %867 = vmatpush1.msra.mxu0 0.0
  %868 = vmatprep.subr.mxu0 0.0
  %869 = vmatpush1.msra.mxu0 0.0
  %870 = vmatprep.subr.mxu0 0.0
  %871 = vmatpush1.msra.mxu0 0.0
  %872 = vmatprep.subr.mxu0 0.0
  %873 = vmatpush1.msra.mxu0 0.0
  %874 = vmatprep.subr.mxu0 0.0
  %875 = vmatpush1.msra.mxu0 0.0
  %876 = vmatprep.subr.mxu0 0.0
  %877 = vmatpush1.msra.mxu0 0.0
  %878 = vmatprep.subr.mxu0 0.0
  %879 = vmatpush1.msra.mxu0 0.0
  %880 = vmatprep.subr.mxu0 0.0
  %881 = vmatpush1.msra.mxu0 0.0
  %882 = vmatprep.subr.mxu0 0.0
  %883 = vmatpush1.msra.mxu0 %v449
  %884 = vmatprep.subr.mxu0 0.0
  %885 = vmatpush2.msra.mxu0 0.0
  %886 = vmatprep.subr.mxu0 0.0
  %887 = vmatpush2.msra.mxu0 0.0
  %888 = vmatprep.subr.mxu0 0.0
  %889 = vmatpush2.msra.mxu0 0.0
  %890 = vmatprep.subr.mxu0 0.0
  %891 = vmatpush2.msra.mxu0 0.0
  %892 = vmatprep.subr.mxu0 0.0
  %893 = vmatpush2.msra.mxu0 0.0
  %894 = vmatprep.subr.mxu0 0.0
  %895 = vmatpush2.msra.mxu0 0.0
  %896 = vmatprep.subr.mxu0 0.0
  %897 = vmatpush2.msra.mxu0 0.0
  %898 = vmatprep.subr.mxu0 0.0
  %899 = vmatpush2.msra.mxu0 0.0
  %900 = vmatprep.subr.mxu0 0.0
  %901 = vmatpush2.msra.mxu0 0.0
  %902 = vmatprep.subr.mxu0 0.0
  %903 = vmatpush2.msra.mxu0 0.0
  %904 = vmatprep.subr.mxu0 0.0
  %905 = vmatpush2.msra.mxu0 0.0
  %906 = vmatprep.subr.mxu0 0.0
  %907 = vmatpush2.msra.mxu0 0.0
  %908 = vmatprep.subr.mxu0 0.0
  %909 = vmatpush2.msra.mxu0 0.0
  %910 = vmatprep.subr.mxu0 0.0
  %911 = vmatpush2.msra.mxu0 0.0
  %912 = vmatprep.subr.mxu0 0.0
  %913 = vmatpush2.msra.mxu0 0.0
  %914 = vmatprep.subr.mxu0 0.0
  %915 = vmatpush2.msra.mxu0 0.0
  %916 = vmatprep.mubr.f32.mxu0 0.0
  %917 = vmatmul.mubr.f32.gmra.mxu0 %v850
  %v918 = vpop.f32.mrf.mxu0
  %v919 = vadd.f32 0.0, %v918
  %v920 = vpop.f32.mrf.mxu0
  %921 = vdwg.mxu0
  %v923 = vsel %vm591, %v612, 0
  %925 = vmatprep.subr.mxu0 0.0
  %926 = vmatpush1.msra.mxu0 0.0
  %927 = vmatprep.subr.mxu0 0.0
  %928 = vmatpush1.msra.mxu0 0.0
  %929 = vmatprep.subr.mxu0 0.0
  %930 = vmatpush1.msra.mxu0 0.0
  %931 = vmatprep.subr.mxu0 0.0
  %932 = vmatpush1.msra.mxu0 0.0
  %933 = vmatprep.subr.mxu0 0.0
  %934 = vmatpush1.msra.mxu0 0.0
  %935 = vmatprep.subr.mxu0 0.0
  %936 = vmatpush1.msra.mxu0 0.0
  %937 = vmatprep.subr.mxu0 0.0
  %938 = vmatpush1.msra.mxu0 0.0
  %939 = vmatprep.subr.mxu0 0.0
  %940 = vmatpush1.msra.mxu0 0.0
  %941 = vmatprep.subr.mxu0 0.0
  %942 = vmatpush1.msra.mxu0 0.0
  %943 = vmatprep.subr.mxu0 0.0
  %944 = vmatpush1.msra.mxu0 0.0
  %945 = vmatprep.subr.mxu0 0.0
  %946 = vmatpush1.msra.mxu0 0.0
  %947 = vmatprep.subr.mxu0 0.0
  %948 = vmatpush1.msra.mxu0 0.0
  %949 = vmatprep.subr.mxu0 0.0
  %950 = vmatpush1.msra.mxu0 0.0
  %951 = vmatprep.subr.mxu0 0.0
  %952 = vmatpush1.msra.mxu0 0.0
  %953 = vmatprep.subr.mxu0 0.0
  %954 = vmatpush1.msra.mxu0 0.0
  %955 = vmatprep.subr.mxu0 0.0
  %956 = vmatpush1.msra.mxu0 %v441
  %957 = vmatprep.subr.mxu0 0.0
  %958 = vmatpush2.msra.mxu0 0.0
  %959 = vmatprep.subr.mxu0 0.0
  %960 = vmatpush2.msra.mxu0 0.0
  %961 = vmatprep.subr.mxu0 0.0
  %962 = vmatpush2.msra.mxu0 0.0
  %963 = vmatprep.subr.mxu0 0.0
  %964 = vmatpush2.msra.mxu0 0.0
  %965 = vmatprep.subr.mxu0 0.0
  %966 = vmatpush2.msra.mxu0 0.0
  %967 = vmatprep.subr.mxu0 0.0
  %968 = vmatpush2.msra.mxu0 0.0
  %969 = vmatprep.subr.mxu0 0.0
  %970 = vmatpush2.msra.mxu0 0.0
  %971 = vmatprep.subr.mxu0 0.0
  %972 = vmatpush2.msra.mxu0 0.0
  %973 = vmatprep.subr.mxu0 0.0
  %974 = vmatpush2.msra.mxu0 0.0
  %975 = vmatprep.subr.mxu0 0.0
  %976 = vmatpush2.msra.mxu0 0.0
  %977 = vmatprep.subr.mxu0 0.0
  %978 = vmatpush2.msra.mxu0 0.0
  %979 = vmatprep.subr.mxu0 0.0
  %980 = vmatpush2.msra.mxu0 0.0
  %981 = vmatprep.subr.mxu0 0.0
  %982 = vmatpush2.msra.mxu0 0.0
  %983 = vmatprep.subr.mxu0 0.0
  %984 = vmatpush2.msra.mxu0 0.0
  %985 = vmatprep.subr.mxu0 0.0
  %986 = vmatpush2.msra.mxu0 0.0
  %987 = vmatprep.subr.mxu0 0.0
  %988 = vmatpush2.msra.mxu0 0.0
  %989 = vmatprep.mubr.f32.mxu0 0.0
  %990 = vmatmul.mubr.f32.gmra.mxu0 %v923
  %v991 = vpop.f32.mrf.mxu0
  %v992 = vadd.f32 %v846, %v991
  %v993 = vpop.f32.mrf.mxu0
  %994 = vdwg.mxu0
  %v996 = vsel %vm591, %v613, 0
  %998 = vmatprep.subr.mxu0 0.0
  %999 = vmatpush1.msra.mxu0 0.0
  %1000 = vmatprep.subr.mxu0 0.0
  %1001 = vmatpush1.msra.mxu0 0.0
  %1002 = vmatprep.subr.mxu0 0.0
  %1003 = vmatpush1.msra.mxu0 0.0
  %1004 = vmatprep.subr.mxu0 0.0
  %1005 = vmatpush1.msra.mxu0 0.0
  %1006 = vmatprep.subr.mxu0 0.0
  %1007 = vmatpush1.msra.mxu0 0.0
  %1008 = vmatprep.subr.mxu0 0.0
  %1009 = vmatpush1.msra.mxu0 0.0
  %1010 = vmatprep.subr.mxu0 0.0
  %1011 = vmatpush1.msra.mxu0 0.0
  %1012 = vmatprep.subr.mxu0 0.0
  %1013 = vmatpush1.msra.mxu0 0.0
  %1014 = vmatprep.subr.mxu0 0.0
  %1015 = vmatpush1.msra.mxu0 0.0
  %1016 = vmatprep.subr.mxu0 0.0
  %1017 = vmatpush1.msra.mxu0 0.0
  %1018 = vmatprep.subr.mxu0 0.0
  %1019 = vmatpush1.msra.mxu0 0.0
  %1020 = vmatprep.subr.mxu0 0.0
  %1021 = vmatpush1.msra.mxu0 0.0
  %1022 = vmatprep.subr.mxu0 0.0
  %1023 = vmatpush1.msra.mxu0 0.0
  %1024 = vmatprep.subr.mxu0 0.0
  %1025 = vmatpush1.msra.mxu0 0.0
  %1026 = vmatprep.subr.mxu0 0.0
  %1027 = vmatpush1.msra.mxu0 0.0
  %1028 = vmatprep.subr.mxu0 0.0
  %1029 = vmatpush1.msra.mxu0 %v447
  %1030 = vmatprep.subr.mxu0 0.0
  %1031 = vmatpush2.msra.mxu0 0.0
  %1032 = vmatprep.subr.mxu0 0.0
  %1033 = vmatpush2.msra.mxu0 0.0
  %1034 = vmatprep.subr.mxu0 0.0
  %1035 = vmatpush2.msra.mxu0 0.0
  %1036 = vmatprep.subr.mxu0 0.0
  %1037 = vmatpush2.msra.mxu0 0.0
  %1038 = vmatprep.subr.mxu0 0.0
  %1039 = vmatpush2.msra.mxu0 0.0
  %1040 = vmatprep.subr.mxu0 0.0
  %1041 = vmatpush2.msra.mxu0 0.0
  %1042 = vmatprep.subr.mxu0 0.0
  %1043 = vmatpush2.msra.mxu0 0.0
  %1044 = vmatprep.subr.mxu0 0.0
  %1045 = vmatpush2.msra.mxu0 0.0
  %1046 = vmatprep.subr.mxu0 0.0
  %1047 = vmatpush2.msra.mxu0 0.0
  %1048 = vmatprep.subr.mxu0 0.0
  %1049 = vmatpush2.msra.mxu0 0.0
  %1050 = vmatprep.subr.mxu0 0.0
  %1051 = vmatpush2.msra.mxu0 0.0
  %1052 = vmatprep.subr.mxu0 0.0
  %1053 = vmatpush2.msra.mxu0 0.0
  %1054 = vmatprep.subr.mxu0 0.0
  %1055 = vmatpush2.msra.mxu0 0.0
  %1056 = vmatprep.subr.mxu0 0.0
  %1057 = vmatpush2.msra.mxu0 0.0
  %1058 = vmatprep.subr.mxu0 0.0
  %1059 = vmatpush2.msra.mxu0 0.0
  %1060 = vmatprep.subr.mxu0 0.0
  %1061 = vmatpush2.msra.mxu0 0.0
  %1062 = vmatprep.mubr.f32.mxu0 0.0
  %1063 = vmatmul.mubr.f32.gmra.mxu0 %v996
  %v1064 = vpop.f32.mrf.mxu0
  %v1065 = vadd.f32 %v919, %v1064
  %v1066 = vpop.f32.mrf.mxu0
  %1067 = vdwg.mxu0
  %v1068 = vld [vmem:[%s3 + $0x40] sm:$0xff]
  %v1069 = vld [vmem:[%s3 + $0x48] sm:$0xff]
  %v1070 = vld [vmem:[%s3 + $0x50] sm:$0xff]
  %v1071 = vld [vmem:[%s3 + $0x58] sm:$0xff]
  %v1072 = vld [vmem:[%s3 + $0x60] sm:$0xff]
  %v1073 = vld [vmem:[%s3 + $0x68] sm:$0xff]
  %v1074 = vld [vmem:[%s3 + $0x70] sm:$0xff]
  %v1075 = vld [vmem:[%s3 + $0x78] sm:$0xff]
  %v1076 = vld [vmem:[%s3 + $0x80] sm:$0xff]
  %v1077 = vld [vmem:[%s3 + $0x88] sm:$0xff]
  %v1078 = vld [vmem:[%s3 + $0x90] sm:$0xff]
  %v1079 = vld [vmem:[%s3 + $0x98] sm:$0xff]
  %v1080 = vld [vmem:[%s3 + $0xa0] sm:$0x1]
  %v1081 = vld [vmem:[%s3 + $0xa1] sm:$0x1]
  %v1082 = vld [vmem:[%s3 + $0xa2] sm:$0x1]
  %v1083 = vld [vmem:[%s3 + $0xa3] sm:$0x1]
  %v1084 = vld [vmem:[%s3 + $0xa4] sm:$0x1]
  %v1085 = vld [vmem:[%s3 + $0xa5] sm:$0x1]
  %v1086 = vld [vmem:[%s3 + $0xa6] sm:$0x1]
  %v1087 = vadd.f32 %v136, %v992
  %v1088 = vadd.f32 %v141, %v1065
  %v1089 = vlaneseq
  %v1090 = vshrl.u32 %v1089, 7
  %v1091 = vsub.s32 0, %v1090
  %v1092 = vrot.slane %v1081, %v1091
  %v1093 = vadd.f32 %v1087, %v1092
  %v1094 = vadd.f32 %v1088, %v1092
  %v1095 = vsel %vm213, %v1093, 0.0
  %1096 = vadd.xlane.f32.xlu0 %v1095
  %v1097 = vpop.xlane.xlu0 %1096
  %v1098 = vsel %vm213, %v1094, 0.0
  %1099 = vadd.xlane.f32.xlu0 %v1098
  %v1100 = vpop.xlane.xlu0 %1099
  %v1101 = vrcp.pop 32.0
  %v1102 = vmul.f32 %v1097, %v1101
  %v1103 = vmul.f32 %v1100, %v1101
  %v1104 = vsub.f32 %v1093, %v1102
  %v1105 = vsub.f32 %v1094, %v1103
  %v1106 = vmul.f32 %v1104, %v1104
  %v1107 = vmul.f32 %v1105, %v1105
  %v1108 = vsel %vm213, %v1106, 0.0
  %1109 = vadd.xlane.f32.xlu0 %v1108
  %v1110 = vpop.xlane.xlu0 %1109
  %v1111 = vsel %vm213, %v1107, 0.0
  %1112 = vadd.xlane.f32.xlu0 %v1111
  %v1113 = vpop.xlane.xlu0 %1112
  %v1114 = vmul.f32 %v1110, %v1101
  %v1115 = vmul.f32 %v1113, %v1101
  %v1116 = vadd.f32 %v1114, 1e-05
  %v1117 = vadd.f32 %v1115, 1e-05
  %v1118 = vrsqrt.pop %v1116
  %v1119 = vrsqrt.pop %v1117
  %v1120 = vmul.f32 %v1104, %v1118
  %v1121 = vmul.f32 %v1105, %v1119
  %v1122 = vlaneseq
  %v1123 = vshrl.u32 %v1122, 7
  %v1124 = vsub.s32 0, %v1123
  %v1125 = vrot.slane %v1082, %v1124
  %v1126 = vmul.f32 %v1120, %v1125
  %v1127 = vmul.f32 %v1121, %v1125
  %v1128 = vlaneseq
  %v1129 = vshrl.u32 %v1128, 7
  %v1130 = vsub.s32 0, %v1129
  %v1131 = vrot.slane %v1083, %v1130
  %v1132 = vadd.f32 %v1126, %v1131
  %v1133 = vadd.f32 %v1127, %v1131
  %v1134 = vlaneseq
  %v1135 = vshrl.u32 %v1134, 7
  %v1136 = vsub.s32 0, %v1135
  %v1137 = vrot.slane %v1080, %v1136
  %v1139 = vsel %vm213, %v1132, 0
  %v1142 = vsel %vm213, %v1133, 0
  %1144 = vmatprep.subr.mxu0 0.0
  %1145 = vmatpush1.msra.mxu0 0.0
  %1146 = vmatprep.subr.mxu0 0.0
  %1147 = vmatpush1.msra.mxu0 0.0
  %1148 = vmatprep.subr.mxu0 0.0
  %1149 = vmatpush1.msra.mxu0 0.0
  %1150 = vmatprep.subr.mxu0 0.0
  %1151 = vmatpush1.msra.mxu0 0.0
  %1152 = vmatprep.subr.mxu0 0.0
  %1153 = vmatpush1.msra.mxu0 0.0
  %1154 = vmatprep.subr.mxu0 0.0
  %1155 = vmatpush1.msra.mxu0 0.0
  %1156 = vmatprep.subr.mxu0 0.0
  %1157 = vmatpush1.msra.mxu0 0.0
  %1158 = vmatprep.subr.mxu0 0.0
  %1159 = vmatpush1.msra.mxu0 0.0
  %1160 = vmatprep.subr.mxu0 0.0
  %1161 = vmatpush1.msra.mxu0 0.0
  %1162 = vmatprep.subr.mxu0 0.0
  %1163 = vmatpush1.msra.mxu0 0.0
  %1164 = vmatprep.subr.mxu0 0.0
  %1165 = vmatpush1.msra.mxu0 0.0
  %1166 = vmatprep.subr.mxu0 0.0
  %1167 = vmatpush1.msra.mxu0 0.0
  %1168 = vmatprep.subr.mxu0 0.0
  %1169 = vmatpush1.msra.mxu0 %v1071
  %1170 = vmatprep.subr.mxu0 0.0
  %1171 = vmatpush1.msra.mxu0 %v1070
  %1172 = vmatprep.subr.mxu0 0.0
  %1173 = vmatpush1.msra.mxu0 %v1069
  %1174 = vmatprep.subr.mxu0 0.0
  %1175 = vmatpush1.msra.mxu0 %v1068
  %1176 = vmatprep.subr.mxu0 0.0
  %1177 = vmatpush2.msra.mxu0 0.0
  %1178 = vmatprep.subr.mxu0 0.0
  %1179 = vmatpush2.msra.mxu0 0.0
  %1180 = vmatprep.subr.mxu0 0.0
  %1181 = vmatpush2.msra.mxu0 0.0
  %1182 = vmatprep.subr.mxu0 0.0
  %1183 = vmatpush2.msra.mxu0 0.0
  %1184 = vmatprep.subr.mxu0 0.0
  %1185 = vmatpush2.msra.mxu0 0.0
  %1186 = vmatprep.subr.mxu0 0.0
  %1187 = vmatpush2.msra.mxu0 0.0
  %1188 = vmatprep.subr.mxu0 0.0
  %1189 = vmatpush2.msra.mxu0 0.0
  %1190 = vmatprep.subr.mxu0 0.0
  %1191 = vmatpush2.msra.mxu0 0.0
  %1192 = vmatprep.subr.mxu0 0.0
  %1193 = vmatpush2.msra.mxu0 0.0
  %1194 = vmatprep.subr.mxu0 0.0
  %1195 = vmatpush2.msra.mxu0 0.0
  %1196 = vmatprep.subr.mxu0 0.0
  %1197 = vmatpush2.msra.mxu0 0.0
  %1198 = vmatprep.subr.mxu0 0.0
  %1199 = vmatpush2.msra.mxu0 0.0
  %1200 = vmatprep.subr.mxu0 0.0
  %1201 = vmatpush2.msra.mxu0 0.0
  %1202 = vmatprep.subr.mxu0 0.0
  %1203 = vmatpush2.msra.mxu0 0.0
  %1204 = vmatprep.subr.mxu0 0.0
  %1205 = vmatpush2.msra.mxu0 0.0
  %1206 = vmatprep.subr.mxu0 0.0
  %1207 = vmatpush2.msra.mxu0 0.0
  %1208 = vmatprep.mubr.f32.mxu0 0.0
  %1209 = vmatmul.mubr.f32.gmra.mxu0 %v1139
  %v1210 = vpop.f32.mrf.mxu0
  %v1211 = vadd.f32 %v1137, %v1210
  %v1212 = vpop.f32.mrf.mxu0
  %1213 = vmatprep.mubr.f32.mxu0 0.0
  %1214 = vmatmul.mubr.f32.gmra.mxu0 %v1142
  %v1215 = vpop.f32.mrf.mxu0
  %v1216 = vadd.f32 %v1137, %v1215
  %v1217 = vpop.f32.mrf.mxu0
  %1218 = vdwg.mxu0
  %v1219 = vmax.f32 %v1211, 0.0
  %v1220 = vmax.f32 %v1216, 0.0
  %v1221 = vlaneseq
  %v1222 = vshrl.u32 %v1221, 7
  %v1223 = vsub.s32 0, %v1222
  %v1224 = vrot.slane %v1084, %v1223
  %v1226 = vsel %vm56, %v1219, 0
  %v1229 = vsel %vm56, %v1220, 0
  %1231 = vmatprep.subr.mxu0 0.0
  %1232 = vmatpush1.msra.mxu0 0.0
  %1233 = vmatprep.subr.mxu0 0.0
  %1234 = vmatpush1.msra.mxu0 0.0
  %1235 = vmatprep.subr.mxu0 0.0
  %1236 = vmatpush1.msra.mxu0 0.0
  %1237 = vmatprep.subr.mxu0 0.0
  %1238 = vmatpush1.msra.mxu0 0.0
  %1239 = vmatprep.subr.mxu0 0.0
  %1240 = vmatpush1.msra.mxu0 0.0
  %1241 = vmatprep.subr.mxu0 0.0
  %1242 = vmatpush1.msra.mxu0 0.0
  %1243 = vmatprep.subr.mxu0 0.0
  %1244 = vmatpush1.msra.mxu0 0.0
  %1245 = vmatprep.subr.mxu0 0.0
  %1246 = vmatpush1.msra.mxu0 0.0
  %1247 = vmatprep.subr.mxu0 0.0
  %1248 = vmatpush1.msra.mxu0 %v1079
  %1249 = vmatprep.subr.mxu0 0.0
  %1250 = vmatpush1.msra.mxu0 %v1078
  %1251 = vmatprep.subr.mxu0 0.0
  %1252 = vmatpush1.msra.mxu0 %v1077
  %1253 = vmatprep.subr.mxu0 0.0
  %1254 = vmatpush1.msra.mxu0 %v1076
  %1255 = vmatprep.subr.mxu0 0.0
  %1256 = vmatpush1.msra.mxu0 %v1075
  %1257 = vmatprep.subr.mxu0 0.0
  %1258 = vmatpush1.msra.mxu0 %v1074
  %1259 = vmatprep.subr.mxu0 0.0
  %1260 = vmatpush1.msra.mxu0 %v1073
  %1261 = vmatprep.subr.mxu0 0.0
  %1262 = vmatpush1.msra.mxu0 %v1072
  %1263 = vmatprep.subr.mxu0 0.0
  %1264 = vmatpush2.msra.mxu0 0.0
  %1265 = vmatprep.subr.mxu0 0.0
  %1266 = vmatpush2.msra.mxu0 0.0
  %1267 = vmatprep.subr.mxu0 0.0
  %1268 = vmatpush2.msra.mxu0 0.0
  %1269 = vmatprep.subr.mxu0 0.0
  %1270 = vmatpush2.msra.mxu0 0.0
  %1271 = vmatprep.subr.mxu0 0.0
  %1272 = vmatpush2.msra.mxu0 0.0
  %1273 = vmatprep.subr.mxu0 0.0
  %1274 = vmatpush2.msra.mxu0 0.0
  %1275 = vmatprep.subr.mxu0 0.0
  %1276 = vmatpush2.msra.mxu0 0.0
  %1277 = vmatprep.subr.mxu0 0.0
  %1278 = vmatpush2.msra.mxu0 0.0
  %1279 = vmatprep.subr.mxu0 0.0
  %1280 = vmatpush2.msra.mxu0 0.0
  %1281 = vmatprep.subr.mxu0 0.0
  %1282 = vmatpush2.msra.mxu0 0.0
  %1283 = vmatprep.subr.mxu0 0.0
  %1284 = vmatpush2.msra.mxu0 0.0
  %1285 = vmatprep.subr.mxu0 0.0
  %1286 = vmatpush2.msra.mxu0 0.0
  %1287 = vmatprep.subr.mxu0 0.0
  %1288 = vmatpush2.msra.mxu0 0.0
  %1289 = vmatprep.subr.mxu0 0.0
  %1290 = vmatpush2.msra.mxu0 0.0
  %1291 = vmatprep.subr.mxu0 0.0
  %1292 = vmatpush2.msra.mxu0 0.0
  %1293 = vmatprep.subr.mxu0 0.0
  %1294 = vmatpush2.msra.mxu0 0.0
  %1295 = vmatprep.mubr.f32.mxu0 0.0
  %1296 = vmatmul.mubr.f32.gmra.mxu0 %v1226
  %v1297 = vpop.f32.mrf.mxu0
  %v1298 = vadd.f32 %v1224, %v1297
  %v1299 = vpop.f32.mrf.mxu0
  %1300 = vmatprep.mubr.f32.mxu0 0.0
  %1301 = vmatmul.mubr.f32.gmra.mxu0 %v1229
  %v1302 = vpop.f32.mrf.mxu0
  %v1303 = vadd.f32 %v1224, %v1302
  %v1304 = vpop.f32.mrf.mxu0
  %1305 = vdwg.mxu0
  %v1306 = vadd.f32 %v1132, %v1298
  %v1307 = vadd.f32 %v1133, %v1303
  %v1308 = vsel %vm213, %v1306, 0.0
  %1309 = vadd.xlane.f32.xlu0 %v1308
  %v1310 = vpop.xlane.xlu0 %1309
  %v1311 = vsel %vm213, %v1307, 0.0
  %1312 = vadd.xlane.f32.xlu0 %v1311
  %v1313 = vpop.xlane.xlu0 %1312
  %v1314 = vmul.f32 %v1310, %v1101
  %v1315 = vmul.f32 %v1313, %v1101
  %v1316 = vsub.f32 %v1306, %v1314
  %v1317 = vsub.f32 %v1307, %v1315
  %v1318 = vmul.f32 %v1316, %v1316
  %v1319 = vmul.f32 %v1317, %v1317
  %v1320 = vsel %vm213, %v1318, 0.0
  %1321 = vadd.xlane.f32.xlu0 %v1320
  %v1322 = vpop.xlane.xlu0 %1321
  %v1323 = vsel %vm213, %v1319, 0.0
  %1324 = vadd.xlane.f32.xlu0 %v1323
  %v1325 = vpop.xlane.xlu0 %1324
  %v1326 = vmul.f32 %v1322, %v1101
  %v1327 = vmul.f32 %v1325, %v1101
  %v1328 = vadd.f32 %v1326, 1e-05
  %v1329 = vadd.f32 %v1327, 1e-05
  %v1330 = vrsqrt.pop %v1328
  %v1331 = vrsqrt.pop %v1329
  %v1332 = vmul.f32 %v1316, %v1330
  %v1333 = vmul.f32 %v1317, %v1331
  %v1334 = vlaneseq
  %v1335 = vshrl.u32 %v1334, 7
  %v1336 = vsub.s32 0, %v1335
  %v1337 = vrot.slane %v1085, %v1336
  %v1338 = vmul.f32 %v1332, %v1337
  %v1339 = vmul.f32 %v1333, %v1337
  %v1340 = vlaneseq
  %v1341 = vshrl.u32 %v1340, 7
  %v1342 = vsub.s32 0, %v1341
  %v1343 = vrot.slane %v1086, %v1342
  %v1344 = vadd.f32 %v1338, %v1343
  %v1345 = vadd.f32 %v1339, %v1343
  %v1346 = vld [vmem:[%s2 + $0xf0] sm:$0xff]
  %v1347 = vld [vmem:[%s2 + $0xf8] sm:$0xff]
  %v1348 = vld [vmem:[%s2 + $0x100] sm:$0xff]
  %v1349 = vld [vmem:[%s2 + $0x108] sm:$0xff]
  %v1350 = vld [vmem:[%s2 + $0x110] sm:$0xff]
  %v1351 = vld [vmem:[%s2 + $0x118] sm:$0xff]
  %v1352 = vld [vmem:[%s2 + $0x120] sm:$0xff]
  %v1353 = vld [vmem:[%s2 + $0x128] sm:$0xff]
  %v1354 = vld [vmem:[%s2 + $0x130] sm:$0xff]
  %v1355 = vld [vmem:[%s2 + $0x138] sm:$0xff]
  %v1356 = vld [vmem:[%s2 + $0x140] sm:$0xff]
  %v1357 = vld [vmem:[%s2 + $0x148] sm:$0xff]
  %v1358 = vld [vmem:[%s2 + $0x150] sm:$0xff]
  %v1359 = vld [vmem:[%s2 + $0x158] sm:$0xff]
  %v1360 = vld [vmem:[%s2 + $0x160] sm:$0xff]
  %v1361 = vld [vmem:[%s2 + $0x168] sm:$0xff]
  %v1362 = vld [vmem:[%s2 + $0x170] sm:$0xff]
  %v1363 = vld [vmem:[%s2 + $0x178] sm:$0xff]
  %v1364 = vld [vmem:[%s2 + $0x180] sm:$0xff]
  %v1365 = vld [vmem:[%s2 + $0x188] sm:$0xff]
  %v1366 = vld [vmem:[%s2 + $0x190] sm:$0xff]
  %v1367 = vld [vmem:[%s2 + $0x198] sm:$0xff]
  %v1368 = vld [vmem:[%s2 + $0x1a0] sm:$0xff]
  %v1369 = vld [vmem:[%s2 + $0x1a8] sm:$0xff]
  %s1370 = scalar_lea.vmem %s2, 432
  %v1371 = vld [vmem:[%s1370] ss:$8 sm:$0xf]
  %v1372 = vld [vmem:[%s1370] ss:$8 sm:$0x30]
  %v1373 = vor.u32 %v1371, %v1372
  %v1375 = vlaneseq
  %v1376 = vshrl.u32 %v1375, 7
  %v1377 = vsub.s32 0, %v1376
  %v1378 = vrot.slane %v1373, %v1377
  %v1379 = vlaneseq
  %v1380 = vshrl.u32 %v1379, 7
  %v1381 = vsub.s32 1, %v1380
  %v1382 = vrot.slane %v1373, %v1381
  %v1383 = vlaneseq
  %v1384 = vshrl.u32 %v1383, 7
  %v1385 = vsub.s32 2, %v1384
  %v1386 = vrot.slane %v1373, %v1385
  %v1387 = vlaneseq
  %v1388 = vshrl.u32 %v1387, 7
  %v1389 = vsub.s32 3, %v1388
  %v1390 = vrot.slane %v1373, %v1389
  %v1391 = vlaneseq
  %v1392 = vshrl.u32 %v1391, 7
  %v1393 = vsub.s32 4, %v1392
  %v1394 = vrot.slane %v1373, %v1393
  %v1395 = vlaneseq
  %v1396 = vshrl.u32 %v1395, 7
  %v1397 = vsub.s32 5, %v1396
  %v1398 = vrot.slane %v1373, %v1397
  %v1406 = vsel %vm213, %v1344, 0
  %v1409 = vsel %vm213, %v1345, 0
  %1411 = vmatprep.subr.mxu0 0.0
  %1412 = vmatpush1.msra.mxu0 0.0
  %1413 = vmatprep.subr.mxu0 0.0
  %1414 = vmatpush1.msra.mxu0 0.0
  %1415 = vmatprep.subr.mxu0 0.0
  %1416 = vmatpush1.msra.mxu0 0.0
  %1417 = vmatprep.subr.mxu0 0.0
  %1418 = vmatpush1.msra.mxu0 0.0
  %1419 = vmatprep.subr.mxu0 0.0
  %1420 = vmatpush1.msra.mxu0 0.0
  %1421 = vmatprep.subr.mxu0 0.0
  %1422 = vmatpush1.msra.mxu0 0.0
  %1423 = vmatprep.subr.mxu0 0.0
  %1424 = vmatpush1.msra.mxu0 0.0
  %1425 = vmatprep.subr.mxu0 0.0
  %1426 = vmatpush1.msra.mxu0 0.0
  %1427 = vmatprep.subr.mxu0 0.0
  %1428 = vmatpush1.msra.mxu0 0.0
  %1429 = vmatprep.subr.mxu0 0.0
  %1430 = vmatpush1.msra.mxu0 0.0
  %1431 = vmatprep.subr.mxu0 0.0
  %1432 = vmatpush1.msra.mxu0 0.0
  %1433 = vmatprep.subr.mxu0 0.0
  %1434 = vmatpush1.msra.mxu0 0.0
  %1435 = vmatprep.subr.mxu0 %v1365
  %1436 = vmatpush1.msra.mxu0 %v1364
  %1437 = vmatprep.subr.mxu0 %v1359
  %1438 = vmatpush1.msra.mxu0 %v1358
  %1439 = vmatprep.subr.mxu0 %v1353
  %1440 = vmatpush1.msra.mxu0 %v1352
  %1441 = vmatprep.subr.mxu0 %v1347
  %1442 = vmatpush1.msra.mxu0 %v1346
  %1443 = vmatprep.subr.mxu0 0.0
  %1444 = vmatpush2.msra.mxu0 0.0
  %1445 = vmatprep.subr.mxu0 0.0
  %1446 = vmatpush2.msra.mxu0 0.0
  %1447 = vmatprep.subr.mxu0 0.0
  %1448 = vmatpush2.msra.mxu0 0.0
  %1449 = vmatprep.subr.mxu0 0.0
  %1450 = vmatpush2.msra.mxu0 0.0
  %1451 = vmatprep.subr.mxu0 0.0
  %1452 = vmatpush2.msra.mxu0 0.0
  %1453 = vmatprep.subr.mxu0 0.0
  %1454 = vmatpush2.msra.mxu0 0.0
  %1455 = vmatprep.subr.mxu0 0.0
  %1456 = vmatpush2.msra.mxu0 0.0
  %1457 = vmatprep.subr.mxu0 0.0
  %1458 = vmatpush2.msra.mxu0 0.0
  %1459 = vmatprep.subr.mxu0 0.0
  %1460 = vmatpush2.msra.mxu0 0.0
  %1461 = vmatprep.subr.mxu0 0.0
  %1462 = vmatpush2.msra.mxu0 0.0
  %1463 = vmatprep.subr.mxu0 0.0
  %1464 = vmatpush2.msra.mxu0 0.0
  %1465 = vmatprep.subr.mxu0 0.0
  %1466 = vmatpush2.msra.mxu0 0.0
  %1467 = vmatprep.subr.mxu0 0.0
  %1468 = vmatpush2.msra.mxu0 0.0
  %1469 = vmatprep.subr.mxu0 0.0
  %1470 = vmatpush2.msra.mxu0 0.0
  %1471 = vmatprep.subr.mxu0 0.0
  %1472 = vmatpush2.msra.mxu0 0.0
  %1473 = vmatprep.subr.mxu0 0.0
  %1474 = vmatpush2.msra.mxu0 0.0
  %1475 = vmatprep.mubr.f32.mxu0 0.0
  %1476 = vmatmul.mubr.f32.gmra.mxu0 %v1406
  %v1477 = vpop.f32.mrf.mxu0
  %v1478 = vadd.f32 %v1378, %v1477
  %v1479 = vpop.f32.mrf.mxu0
  %v1480 = vadd.f32 %v1382, %v1479
  %1481 = vmatprep.mubr.f32.mxu0 0.0
  %1482 = vmatmul.mubr.f32.gmra.mxu0 %v1409
  %v1483 = vpop.f32.mrf.mxu0
  %v1484 = vadd.f32 %v1378, %v1483
  %v1485 = vpop.f32.mrf.mxu0
  %v1486 = vadd.f32 %v1382, %v1485
  %1487 = vdwg.mxu0
  %1488 = vmatprep.subr.mxu0 0.0
  %1489 = vmatpush1.msra.mxu0 0.0
  %1490 = vmatprep.subr.mxu0 0.0
  %1491 = vmatpush1.msra.mxu0 0.0
  %1492 = vmatprep.subr.mxu0 0.0
  %1493 = vmatpush1.msra.mxu0 0.0
  %1494 = vmatprep.subr.mxu0 0.0
  %1495 = vmatpush1.msra.mxu0 0.0
  %1496 = vmatprep.subr.mxu0 0.0
  %1497 = vmatpush1.msra.mxu0 0.0
  %1498 = vmatprep.subr.mxu0 0.0
  %1499 = vmatpush1.msra.mxu0 0.0
  %1500 = vmatprep.subr.mxu0 0.0
  %1501 = vmatpush1.msra.mxu0 0.0
  %1502 = vmatprep.subr.mxu0 0.0
  %1503 = vmatpush1.msra.mxu0 0.0
  %1504 = vmatprep.subr.mxu0 0.0
  %1505 = vmatpush1.msra.mxu0 0.0
  %1506 = vmatprep.subr.mxu0 0.0
  %1507 = vmatpush1.msra.mxu0 0.0
  %1508 = vmatprep.subr.mxu0 0.0
  %1509 = vmatpush1.msra.mxu0 0.0
  %1510 = vmatprep.subr.mxu0 0.0
  %1511 = vmatpush1.msra.mxu0 0.0
  %1512 = vmatprep.subr.mxu0 %v1367
  %1513 = vmatpush1.msra.mxu0 %v1366
  %1514 = vmatprep.subr.mxu0 %v1361
  %1515 = vmatpush1.msra.mxu0 %v1360
  %1516 = vmatprep.subr.mxu0 %v1355
  %1517 = vmatpush1.msra.mxu0 %v1354
  %1518 = vmatprep.subr.mxu0 %v1349
  %1519 = vmatpush1.msra.mxu0 %v1348
  %1520 = vmatprep.subr.mxu0 0.0
  %1521 = vmatpush2.msra.mxu0 0.0
  %1522 = vmatprep.subr.mxu0 0.0
  %1523 = vmatpush2.msra.mxu0 0.0
  %1524 = vmatprep.subr.mxu0 0.0
  %1525 = vmatpush2.msra.mxu0 0.0
  %1526 = vmatprep.subr.mxu0 0.0
  %1527 = vmatpush2.msra.mxu0 0.0
  %1528 = vmatprep.subr.mxu0 0.0
  %1529 = vmatpush2.msra.mxu0 0.0
  %1530 = vmatprep.subr.mxu0 0.0
  %1531 = vmatpush2.msra.mxu0 0.0
  %1532 = vmatprep.subr.mxu0 0.0
  %1533 = vmatpush2.msra.mxu0 0.0
  %1534 = vmatprep.subr.mxu0 0.0
  %1535 = vmatpush2.msra.mxu0 0.0
  %1536 = vmatprep.subr.mxu0 0.0
  %1537 = vmatpush2.msra.mxu0 0.0
  %1538 = vmatprep.subr.mxu0 0.0
  %1539 = vmatpush2.msra.mxu0 0.0
  %1540 = vmatprep.subr.mxu0 0.0
  %1541 = vmatpush2.msra.mxu0 0.0
  %1542 = vmatprep.subr.mxu0 0.0
  %1543 = vmatpush2.msra.mxu0 0.0
  %1544 = vmatprep.subr.mxu0 0.0
  %1545 = vmatpush2.msra.mxu0 0.0
  %1546 = vmatprep.subr.mxu0 0.0
  %1547 = vmatpush2.msra.mxu0 0.0
  %1548 = vmatprep.subr.mxu0 0.0
  %1549 = vmatpush2.msra.mxu0 0.0
  %1550 = vmatprep.subr.mxu0 0.0
  %1551 = vmatpush2.msra.mxu0 0.0
  %1552 = vmatprep.mubr.f32.mxu0 0.0
  %1553 = vmatmul.mubr.f32.gmra.mxu0 %v1406
  %v1554 = vpop.f32.mrf.mxu0
  %v1555 = vadd.f32 %v1386, %v1554
  %v1556 = vpop.f32.mrf.mxu0
  %v1557 = vadd.f32 %v1390, %v1556
  %1558 = vmatprep.mubr.f32.mxu0 0.0
  %1559 = vmatmul.mubr.f32.gmra.mxu0 %v1409
  %v1560 = vpop.f32.mrf.mxu0
  %v1561 = vadd.f32 %v1386, %v1560
  %v1562 = vpop.f32.mrf.mxu0
  %v1563 = vadd.f32 %v1390, %v1562
  %1564 = vdwg.mxu0
  %1565 = vmatprep.subr.mxu0 0.0
  %1566 = vmatpush1.msra.mxu0 0.0
  %1567 = vmatprep.subr.mxu0 0.0
  %1568 = vmatpush1.msra.mxu0 0.0
  %1569 = vmatprep.subr.mxu0 0.0
  %1570 = vmatpush1.msra.mxu0 0.0
  %1571 = vmatprep.subr.mxu0 0.0
  %1572 = vmatpush1.msra.mxu0 0.0
  %1573 = vmatprep.subr.mxu0 0.0
  %1574 = vmatpush1.msra.mxu0 0.0
  %1575 = vmatprep.subr.mxu0 0.0
  %1576 = vmatpush1.msra.mxu0 0.0
  %1577 = vmatprep.subr.mxu0 0.0
  %1578 = vmatpush1.msra.mxu0 0.0
  %1579 = vmatprep.subr.mxu0 0.0
  %1580 = vmatpush1.msra.mxu0 0.0
  %1581 = vmatprep.subr.mxu0 0.0
  %1582 = vmatpush1.msra.mxu0 0.0
  %1583 = vmatprep.subr.mxu0 0.0
  %1584 = vmatpush1.msra.mxu0 0.0
  %1585 = vmatprep.subr.mxu0 0.0
  %1586 = vmatpush1.msra.mxu0 0.0
  %1587 = vmatprep.subr.mxu0 0.0
  %1588 = vmatpush1.msra.mxu0 0.0
  %1589 = vmatprep.subr.mxu0 %v1369
  %1590 = vmatpush1.msra.mxu0 %v1368
  %1591 = vmatprep.subr.mxu0 %v1363
  %1592 = vmatpush1.msra.mxu0 %v1362
  %1593 = vmatprep.subr.mxu0 %v1357
  %1594 = vmatpush1.msra.mxu0 %v1356
  %1595 = vmatprep.subr.mxu0 %v1351
  %1596 = vmatpush1.msra.mxu0 %v1350
  %1597 = vmatprep.subr.mxu0 0.0
  %1598 = vmatpush2.msra.mxu0 0.0
  %1599 = vmatprep.subr.mxu0 0.0
  %1600 = vmatpush2.msra.mxu0 0.0
  %1601 = vmatprep.subr.mxu0 0.0
  %1602 = vmatpush2.msra.mxu0 0.0
  %1603 = vmatprep.subr.mxu0 0.0
  %1604 = vmatpush2.msra.mxu0 0.0
  %1605 = vmatprep.subr.mxu0 0.0
  %1606 = vmatpush2.msra.mxu0 0.0
  %1607 = vmatprep.subr.mxu0 0.0
  %1608 = vmatpush2.msra.mxu0 0.0
  %1609 = vmatprep.subr.mxu0 0.0
  %1610 = vmatpush2.msra.mxu0 0.0
  %1611 = vmatprep.subr.mxu0 0.0
  %1612 = vmatpush2.msra.mxu0 0.0
  %1613 = vmatprep.subr.mxu0 0.0
  %1614 = vmatpush2.msra.mxu0 0.0
  %1615 = vmatprep.subr.mxu0 0.0
  %1616 = vmatpush2.msra.mxu0 0.0
  %1617 = vmatprep.subr.mxu0 0.0
  %1618 = vmatpush2.msra.mxu0 0.0
  %1619 = vmatprep.subr.mxu0 0.0
  %1620 = vmatpush2.msra.mxu0 0.0
  %1621 = vmatprep.subr.mxu0 0.0
  %1622 = vmatpush2.msra.mxu0 0.0
  %1623 = vmatprep.subr.mxu0 0.0
  %1624 = vmatpush2.msra.mxu0 0.0
  %1625 = vmatprep.subr.mxu0 0.0
  %1626 = vmatpush2.msra.mxu0 0.0
  %1627 = vmatprep.subr.mxu0 0.0
  %1628 = vmatpush2.msra.mxu0 0.0
  %1629 = vmatprep.mubr.f32.mxu0 0.0
  %1630 = vmatmul.mubr.f32.gmra.mxu0 %v1406
  %v1631 = vpop.f32.mrf.mxu0
  %v1632 = vadd.f32 %v1394, %v1631
  %v1633 = vpop.f32.mrf.mxu0
  %v1634 = vadd.f32 %v1398, %v1633
  %1635 = vmatprep.mubr.f32.mxu0 0.0
  %1636 = vmatmul.mubr.f32.gmra.mxu0 %v1409
  %v1637 = vpop.f32.mrf.mxu0
  %v1638 = vadd.f32 %v1394, %v1637
  %v1639 = vpop.f32.mrf.mxu0
  %v1640 = vadd.f32 %v1398, %v1639
  %1641 = vdwg.mxu0
  %1642 = vmatprep.subr.mxu0 0.0
  %1643 = vmatpush1.xpose.msra.mxu0 0.0
  %1644 = vmatprep.subr.mxu0 0.0
  %1645 = vmatpush1.xpose.msra.mxu0 0.0
  %1646 = vmatprep.subr.mxu0 0.0
  %1647 = vmatpush1.xpose.msra.mxu0 0.0
  %1648 = vmatprep.subr.mxu0 0.0
  %1649 = vmatpush1.xpose.msra.mxu0 0.0
  %1650 = vmatprep.subr.mxu0 0.0
  %1651 = vmatpush1.xpose.msra.mxu0 0.0
  %1652 = vmatprep.subr.mxu0 0.0
  %1653 = vmatpush1.xpose.msra.mxu0 0.0
  %1654 = vmatprep.subr.mxu0 0.0
  %1655 = vmatpush1.xpose.msra.mxu0 0.0
  %1656 = vmatprep.subr.mxu0 0.0
  %1657 = vmatpush1.xpose.msra.mxu0 0.0
  %1658 = vmatprep.subr.mxu0 0.0
  %1659 = vmatpush1.xpose.msra.mxu0 0.0
  %1660 = vmatprep.subr.mxu0 0.0
  %1661 = vmatpush1.xpose.msra.mxu0 0.0
  %1662 = vmatprep.subr.mxu0 0.0
  %1663 = vmatpush1.xpose.msra.mxu0 0.0
  %1664 = vmatprep.subr.mxu0 0.0
  %1665 = vmatpush1.xpose.msra.mxu0 0.0
  %1666 = vmatprep.subr.mxu0 0.0
  %1667 = vmatpush1.xpose.msra.mxu0 0.0
  %1668 = vmatprep.subr.mxu0 0.0
  %1669 = vmatpush1.xpose.msra.mxu0 0.0
  %1670 = vmatprep.subr.mxu0 0.0
  %1671 = vmatpush1.xpose.msra.mxu0 0.0
  %1672 = vmatprep.subr.mxu0 0.0
  %1673 = vmatpush1.xpose.msra.mxu0 %v1555
  %1674 = vmatprep.subr.mxu0 0.0
  %1675 = vmatpush2.xpose.msra.mxu0 0.0
  %1676 = vmatprep.subr.mxu0 0.0
  %1677 = vmatpush2.xpose.msra.mxu0 0.0
  %1678 = vmatprep.subr.mxu0 0.0
  %1679 = vmatpush2.xpose.msra.mxu0 0.0
  %1680 = vmatprep.subr.mxu0 0.0
  %1681 = vmatpush2.xpose.msra.mxu0 0.0
  %1682 = vmatprep.subr.mxu0 0.0
  %1683 = vmatpush2.xpose.msra.mxu0 0.0
  %1684 = vmatprep.subr.mxu0 0.0
  %1685 = vmatpush2.xpose.msra.mxu0 0.0
  %1686 = vmatprep.subr.mxu0 0.0
  %1687 = vmatpush2.xpose.msra.mxu0 0.0
  %1688 = vmatprep.subr.mxu0 0.0
  %1689 = vmatpush2.xpose.msra.mxu0 0.0
  %1690 = vmatprep.subr.mxu0 0.0
  %1691 = vmatpush2.xpose.msra.mxu0 0.0
  %1692 = vmatprep.subr.mxu0 0.0
  %1693 = vmatpush2.xpose.msra.mxu0 0.0
  %1694 = vmatprep.subr.mxu0 0.0
  %1695 = vmatpush2.xpose.msra.mxu0 0.0
  %1696 = vmatprep.subr.mxu0 0.0
  %1697 = vmatpush2.xpose.msra.mxu0 0.0
  %1698 = vmatprep.subr.mxu0 0.0
  %1699 = vmatpush2.xpose.msra.mxu0 0.0
  %1700 = vmatprep.subr.mxu0 0.0
  %1701 = vmatpush2.xpose.msra.mxu0 0.0
  %1702 = vmatprep.subr.mxu0 0.0
  %1703 = vmatpush2.xpose.msra.mxu0 0.0
  %1704 = vmatprep.subr.mxu0 0.0
  %1705 = vmatpush2.xpose.msra.mxu0 0.0
  %1706 = vmatprep.mubr.f32.mxu0 0.0
  %1707 = vmatmul.mubr.f32.gmra.mxu0 %v1478
  %v1708 = vpop.f32.mrf.mxu0
  %v1709 = vadd.f32 0.0, %v1708
  %v1710 = vpop.f32.mrf.mxu0
  %1711 = vdwg.mxu0
  %1712 = vmatprep.subr.mxu0 0.0
  %1713 = vmatpush1.xpose.msra.mxu0 0.0
  %1714 = vmatprep.subr.mxu0 0.0
  %1715 = vmatpush1.xpose.msra.mxu0 0.0
  %1716 = vmatprep.subr.mxu0 0.0
  %1717 = vmatpush1.xpose.msra.mxu0 0.0
  %1718 = vmatprep.subr.mxu0 0.0
  %1719 = vmatpush1.xpose.msra.mxu0 0.0
  %1720 = vmatprep.subr.mxu0 0.0
  %1721 = vmatpush1.xpose.msra.mxu0 0.0
  %1722 = vmatprep.subr.mxu0 0.0
  %1723 = vmatpush1.xpose.msra.mxu0 0.0
  %1724 = vmatprep.subr.mxu0 0.0
  %1725 = vmatpush1.xpose.msra.mxu0 0.0
  %1726 = vmatprep.subr.mxu0 0.0
  %1727 = vmatpush1.xpose.msra.mxu0 0.0
  %1728 = vmatprep.subr.mxu0 0.0
  %1729 = vmatpush1.xpose.msra.mxu0 0.0
  %1730 = vmatprep.subr.mxu0 0.0
  %1731 = vmatpush1.xpose.msra.mxu0 0.0
  %1732 = vmatprep.subr.mxu0 0.0
  %1733 = vmatpush1.xpose.msra.mxu0 0.0
  %1734 = vmatprep.subr.mxu0 0.0
  %1735 = vmatpush1.xpose.msra.mxu0 0.0
  %1736 = vmatprep.subr.mxu0 0.0
  %1737 = vmatpush1.xpose.msra.mxu0 0.0
  %1738 = vmatprep.subr.mxu0 0.0
  %1739 = vmatpush1.xpose.msra.mxu0 0.0
  %1740 = vmatprep.subr.mxu0 0.0
  %1741 = vmatpush1.xpose.msra.mxu0 0.0
  %1742 = vmatprep.subr.mxu0 0.0
  %1743 = vmatpush1.xpose.msra.mxu0 %v1561
  %1744 = vmatprep.subr.mxu0 0.0
  %1745 = vmatpush2.xpose.msra.mxu0 0.0
  %1746 = vmatprep.subr.mxu0 0.0
  %1747 = vmatpush2.xpose.msra.mxu0 0.0
  %1748 = vmatprep.subr.mxu0 0.0
  %1749 = vmatpush2.xpose.msra.mxu0 0.0
  %1750 = vmatprep.subr.mxu0 0.0
  %1751 = vmatpush2.xpose.msra.mxu0 0.0
  %1752 = vmatprep.subr.mxu0 0.0
  %1753 = vmatpush2.xpose.msra.mxu0 0.0
  %1754 = vmatprep.subr.mxu0 0.0
  %1755 = vmatpush2.xpose.msra.mxu0 0.0
  %1756 = vmatprep.subr.mxu0 0.0
  %1757 = vmatpush2.xpose.msra.mxu0 0.0
  %1758 = vmatprep.subr.mxu0 0.0
  %1759 = vmatpush2.xpose.msra.mxu0 0.0
  %1760 = vmatprep.subr.mxu0 0.0
  %1761 = vmatpush2.xpose.msra.mxu0 0.0
  %1762 = vmatprep.subr.mxu0 0.0
  %1763 = vmatpush2.xpose.msra.mxu0 0.0
  %1764 = vmatprep.subr.mxu0 0.0
  %1765 = vmatpush2.xpose.msra.mxu0 0.0
  %1766 = vmatprep.subr.mxu0 0.0
  %1767 = vmatpush2.xpose.msra.mxu0 0.0
  %1768 = vmatprep.subr.mxu0 0.0
  %1769 = vmatpush2.xpose.msra.mxu0 0.0
  %1770 = vmatprep.subr.mxu0 0.0
  %1771 = vmatpush2.xpose.msra.mxu0 0.0
  %1772 = vmatprep.subr.mxu0 0.0
  %1773 = vmatpush2.xpose.msra.mxu0 0.0
  %1774 = vmatprep.subr.mxu0 0.0
  %1775 = vmatpush2.xpose.msra.mxu0 0.0
  %1776 = vmatprep.mubr.f32.mxu0 0.0
  %1777 = vmatmul.mubr.f32.gmra.mxu0 %v1484
  %v1778 = vpop.f32.mrf.mxu0
  %v1779 = vadd.f32 0.0, %v1778
  %v1780 = vpop.f32.mrf.mxu0
  %1781 = vdwg.mxu0
  %v1782 = vsel %vm591, %v1709, -inf
  %1783 = vmax.xlane.f32.xlu0 %v1782
  %v1784 = vpop.xlane.xlu0 %1783
  %v1785 = vsel %vm591, %v1779, -inf
  %1786 = vmax.xlane.f32.xlu0 %v1785
  %v1787 = vpop.xlane.xlu0 %1786
  %v1788 = vsub.f32 %v1709, %v1784
  %v1789 = vsub.f32 %v1779, %v1787
  %v1790 = vmul.f32 %v1788, 1.442695
  %v1791 = vpow.pop %v1790
  %v1792 = vmul.f32 %v1789, 1.442695
  %v1793 = vpow.pop %v1792
  %v1794 = vsel %vm591, %v1791, 0.0
  %1795 = vadd.xlane.f32.xlu0 %v1794
  %v1796 = vpop.xlane.xlu0 %1795
  %v1797 = vsel %vm591, %v1793, 0.0
  %1798 = vadd.xlane.f32.xlu0 %v1797
  %v1799 = vpop.xlane.xlu0 %1798
  %v1800 = vrcp.pop %v1796
  %v1801 = vrcp.pop %v1799
  %v1802 = vmul.f32 %v1791, %v1800
  %v1803 = vmul.f32 %v1793, %v1801
  %1804 = vmatprep.subr.mxu0 0.0
  %1805 = vmatpush1.xpose.msra.mxu0 0.0
  %1806 = vmatprep.subr.mxu0 0.0
  %1807 = vmatpush1.xpose.msra.mxu0 0.0
  %1808 = vmatprep.subr.mxu0 0.0
  %1809 = vmatpush1.xpose.msra.mxu0 0.0
  %1810 = vmatprep.subr.mxu0 0.0
  %1811 = vmatpush1.xpose.msra.mxu0 0.0
  %1812 = vmatprep.subr.mxu0 0.0
  %1813 = vmatpush1.xpose.msra.mxu0 0.0
  %1814 = vmatprep.subr.mxu0 0.0
  %1815 = vmatpush1.xpose.msra.mxu0 0.0
  %1816 = vmatprep.subr.mxu0 0.0
  %1817 = vmatpush1.xpose.msra.mxu0 0.0
  %1818 = vmatprep.subr.mxu0 0.0
  %1819 = vmatpush1.xpose.msra.mxu0 0.0
  %1820 = vmatprep.subr.mxu0 0.0
  %1821 = vmatpush1.xpose.msra.mxu0 0.0
  %1822 = vmatprep.subr.mxu0 0.0
  %1823 = vmatpush1.xpose.msra.mxu0 0.0
  %1824 = vmatprep.subr.mxu0 0.0
  %1825 = vmatpush1.xpose.msra.mxu0 0.0
  %1826 = vmatprep.subr.mxu0 0.0
  %1827 = vmatpush1.xpose.msra.mxu0 0.0
  %1828 = vmatprep.subr.mxu0 0.0
  %1829 = vmatpush1.xpose.msra.mxu0 0.0
  %1830 = vmatprep.subr.mxu0 0.0
  %1831 = vmatpush1.xpose.msra.mxu0 0.0
  %1832 = vmatprep.subr.mxu0 0.0
  %1833 = vmatpush1.xpose.msra.mxu0 0.0
  %1834 = vmatprep.subr.mxu0 0.0
  %1835 = vmatpush1.xpose.msra.mxu0 %v1557
  %1836 = vmatprep.subr.mxu0 0.0
  %1837 = vmatpush2.xpose.msra.mxu0 0.0
  %1838 = vmatprep.subr.mxu0 0.0
  %1839 = vmatpush2.xpose.msra.mxu0 0.0
  %1840 = vmatprep.subr.mxu0 0.0
  %1841 = vmatpush2.xpose.msra.mxu0 0.0
  %1842 = vmatprep.subr.mxu0 0.0
  %1843 = vmatpush2.xpose.msra.mxu0 0.0
  %1844 = vmatprep.subr.mxu0 0.0
  %1845 = vmatpush2.xpose.msra.mxu0 0.0
  %1846 = vmatprep.subr.mxu0 0.0
  %1847 = vmatpush2.xpose.msra.mxu0 0.0
  %1848 = vmatprep.subr.mxu0 0.0
  %1849 = vmatpush2.xpose.msra.mxu0 0.0
  %1850 = vmatprep.subr.mxu0 0.0
  %1851 = vmatpush2.xpose.msra.mxu0 0.0
  %1852 = vmatprep.subr.mxu0 0.0
  %1853 = vmatpush2.xpose.msra.mxu0 0.0
  %1854 = vmatprep.subr.mxu0 0.0
  %1855 = vmatpush2.xpose.msra.mxu0 0.0
  %1856 = vmatprep.subr.mxu0 0.0
  %1857 = vmatpush2.xpose.msra.mxu0 0.0
  %1858 = vmatprep.subr.mxu0 0.0
  %1859 = vmatpush2.xpose.msra.mxu0 0.0
  %1860 = vmatprep.subr.mxu0 0.0
  %1861 = vmatpush2.xpose.msra.mxu0 0.0
  %1862 = vmatprep.subr.mxu0 0.0
  %1863 = vmatpush2.xpose.msra.mxu0 0.0
  %1864 = vmatprep.subr.mxu0 0.0
  %1865 = vmatpush2.xpose.msra.mxu0 0.0
  %1866 = vmatprep.subr.mxu0 0.0
  %1867 = vmatpush2.xpose.msra.mxu0 0.0
  %1868 = vmatprep.mubr.f32.mxu0 0.0
  %1869 = vmatmul.mubr.f32.gmra.mxu0 %v1480
  %v1870 = vpop.f32.mrf.mxu0
  %v1871 = vadd.f32 0.0, %v1870
  %v1872 = vpop.f32.mrf.mxu0
  %1873 = vdwg.mxu0
  %1874 = vmatprep.subr.mxu0 0.0
  %1875 = vmatpush1.xpose.msra.mxu0 0.0
  %1876 = vmatprep.subr.mxu0 0.0
  %1877 = vmatpush1.xpose.msra.mxu0 0.0
  %1878 = vmatprep.subr.mxu0 0.0
  %1879 = vmatpush1.xpose.msra.mxu0 0.0
  %1880 = vmatprep.subr.mxu0 0.0
  %1881 = vmatpush1.xpose.msra.mxu0 0.0
  %1882 = vmatprep.subr.mxu0 0.0
  %1883 = vmatpush1.xpose.msra.mxu0 0.0
  %1884 = vmatprep.subr.mxu0 0.0
  %1885 = vmatpush1.xpose.msra.mxu0 0.0
  %1886 = vmatprep.subr.mxu0 0.0
  %1887 = vmatpush1.xpose.msra.mxu0 0.0
  %1888 = vmatprep.subr.mxu0 0.0
  %1889 = vmatpush1.xpose.msra.mxu0 0.0
  %1890 = vmatprep.subr.mxu0 0.0
  %1891 = vmatpush1.xpose.msra.mxu0 0.0
  %1892 = vmatprep.subr.mxu0 0.0
  %1893 = vmatpush1.xpose.msra.mxu0 0.0
  %1894 = vmatprep.subr.mxu0 0.0
  %1895 = vmatpush1.xpose.msra.mxu0 0.0
  %1896 = vmatprep.subr.mxu0 0.0
  %1897 = vmatpush1.xpose.msra.mxu0 0.0
  %1898 = vmatprep.subr.mxu0 0.0
  %1899 = vmatpush1.xpose.msra.mxu0 0.0
  %1900 = vmatprep.subr.mxu0 0.0
  %1901 = vmatpush1.xpose.msra.mxu0 0.0
  %1902 = vmatprep.subr.mxu0 0.0
  %1903 = vmatpush1.xpose.msra.mxu0 0.0
  %1904 = vmatprep.subr.mxu0 0.0
  %1905 = vmatpush1.xpose.msra.mxu0 %v1563
  %1906 = vmatprep.subr.mxu0 0.0
  %1907 = vmatpush2.xpose.msra.mxu0 0.0
  %1908 = vmatprep.subr.mxu0 0.0
  %1909 = vmatpush2.xpose.msra.mxu0 0.0
  %1910 = vmatprep.subr.mxu0 0.0
  %1911 = vmatpush2.xpose.msra.mxu0 0.0
  %1912 = vmatprep.subr.mxu0 0.0
  %1913 = vmatpush2.xpose.msra.mxu0 0.0
  %1914 = vmatprep.subr.mxu0 0.0
  %1915 = vmatpush2.xpose.msra.mxu0 0.0
  %1916 = vmatprep.subr.mxu0 0.0
  %1917 = vmatpush2.xpose.msra.mxu0 0.0
  %1918 = vmatprep.subr.mxu0 0.0
  %1919 = vmatpush2.xpose.msra.mxu0 0.0
  %1920 = vmatprep.subr.mxu0 0.0
  %1921 = vmatpush2.xpose.msra.mxu0 0.0
  %1922 = vmatprep.subr.mxu0 0.0
  %1923 = vmatpush2.xpose.msra.mxu0 0.0
  %1924 = vmatprep.subr.mxu0 0.0
  %1925 = vmatpush2.xpose.msra.mxu0 0.0
  %1926 = vmatprep.subr.mxu0 0.0
  %1927 = vmatpush2.xpose.msra.mxu0 0.0
  %1928 = vmatprep.subr.mxu0 0.0
  %1929 = vmatpush2.xpose.msra.mxu0 0.0
  %1930 = vmatprep.subr.mxu0 0.0
  %1931 = vmatpush2.xpose.msra.mxu0 0.0
  %1932 = vmatprep.subr.mxu0 0.0
  %1933 = vmatpush2.xpose.msra.mxu0 0.0
  %1934 = vmatprep.subr.mxu0 0.0
  %1935 = vmatpush2.xpose.msra.mxu0 0.0
  %1936 = vmatprep.subr.mxu0 0.0
  %1937 = vmatpush2.xpose.msra.mxu0 0.0
  %1938 = vmatprep.mubr.f32.mxu0 0.0
  %1939 = vmatmul.mubr.f32.gmra.mxu0 %v1486
  %v1940 = vpop.f32.mrf.mxu0
  %v1941 = vadd.f32 0.0, %v1940
  %v1942 = vpop.f32.mrf.mxu0
  %1943 = vdwg.mxu0
  %v1944 = vsel %vm591, %v1871, -inf
  %1945 = vmax.xlane.f32.xlu0 %v1944
  %v1946 = vpop.xlane.xlu0 %1945
  %v1947 = vsel %vm591, %v1941, -inf
  %1948 = vmax.xlane.f32.xlu0 %v1947
  %v1949 = vpop.xlane.xlu0 %1948
  %v1950 = vsub.f32 %v1871, %v1946
  %v1951 = vsub.f32 %v1941, %v1949
  %v1952 = vmul.f32 %v1950, 1.442695
  %v1953 = vpow.pop %v1952
  %v1954 = vmul.f32 %v1951, 1.442695
  %v1955 = vpow.pop %v1954
  %v1956 = vsel %vm591, %v1953, 0.0
  %1957 = vadd.xlane.f32.xlu0 %v1956
  %v1958 = vpop.xlane.xlu0 %1957
  %v1959 = vsel %vm591, %v1955, 0.0
  %1960 = vadd.xlane.f32.xlu0 %v1959
  %v1961 = vpop.xlane.xlu0 %1960
  %v1962 = vrcp.pop %v1958
  %v1963 = vrcp.pop %v1961
  %v1964 = vmul.f32 %v1953, %v1962
  %v1965 = vmul.f32 %v1955, %v1963
  %v1967 = vsel %vm591, %v1964, 0
  %1969 = vmatprep.subr.mxu0 0.0
  %1970 = vmatpush1.msra.mxu0 0.0
  %1971 = vmatprep.subr.mxu0 0.0
  %1972 = vmatpush1.msra.mxu0 0.0
  %1973 = vmatprep.subr.mxu0 0.0
  %1974 = vmatpush1.msra.mxu0 0.0
  %1975 = vmatprep.subr.mxu0 0.0
  %1976 = vmatpush1.msra.mxu0 0.0
  %1977 = vmatprep.subr.mxu0 0.0
  %1978 = vmatpush1.msra.mxu0 0.0
  %1979 = vmatprep.subr.mxu0 0.0
  %1980 = vmatpush1.msra.mxu0 0.0
  %1981 = vmatprep.subr.mxu0 0.0
  %1982 = vmatpush1.msra.mxu0 0.0
  %1983 = vmatprep.subr.mxu0 0.0
  %1984 = vmatpush1.msra.mxu0 0.0
  %1985 = vmatprep.subr.mxu0 0.0
  %1986 = vmatpush1.msra.mxu0 0.0
  %1987 = vmatprep.subr.mxu0 0.0
  %1988 = vmatpush1.msra.mxu0 0.0
  %1989 = vmatprep.subr.mxu0 0.0
  %1990 = vmatpush1.msra.mxu0 0.0
  %1991 = vmatprep.subr.mxu0 0.0
  %1992 = vmatpush1.msra.mxu0 0.0
  %1993 = vmatprep.subr.mxu0 0.0
  %1994 = vmatpush1.msra.mxu0 0.0
  %1995 = vmatprep.subr.mxu0 0.0
  %1996 = vmatpush1.msra.mxu0 0.0
  %1997 = vmatprep.subr.mxu0 0.0
  %1998 = vmatpush1.msra.mxu0 0.0
  %1999 = vmatprep.subr.mxu0 0.0
  %2000 = vmatpush1.msra.mxu0 %v1634
  %2001 = vmatprep.subr.mxu0 0.0
  %2002 = vmatpush2.msra.mxu0 0.0
  %2003 = vmatprep.subr.mxu0 0.0
  %2004 = vmatpush2.msra.mxu0 0.0
  %2005 = vmatprep.subr.mxu0 0.0
  %2006 = vmatpush2.msra.mxu0 0.0
  %2007 = vmatprep.subr.mxu0 0.0
  %2008 = vmatpush2.msra.mxu0 0.0
  %2009 = vmatprep.subr.mxu0 0.0
  %2010 = vmatpush2.msra.mxu0 0.0
  %2011 = vmatprep.subr.mxu0 0.0
  %2012 = vmatpush2.msra.mxu0 0.0
  %2013 = vmatprep.subr.mxu0 0.0
  %2014 = vmatpush2.msra.mxu0 0.0
  %2015 = vmatprep.subr.mxu0 0.0
  %2016 = vmatpush2.msra.mxu0 0.0
  %2017 = vmatprep.subr.mxu0 0.0
  %2018 = vmatpush2.msra.mxu0 0.0
  %2019 = vmatprep.subr.mxu0 0.0
  %2020 = vmatpush2.msra.mxu0 0.0
  %2021 = vmatprep.subr.mxu0 0.0
  %2022 = vmatpush2.msra.mxu0 0.0
  %2023 = vmatprep.subr.mxu0 0.0
  %2024 = vmatpush2.msra.mxu0 0.0
  %2025 = vmatprep.subr.mxu0 0.0
  %2026 = vmatpush2.msra.mxu0 0.0
  %2027 = vmatprep.subr.mxu0 0.0
  %2028 = vmatpush2.msra.mxu0 0.0
  %2029 = vmatprep.subr.mxu0 0.0
  %2030 = vmatpush2.msra.mxu0 0.0
  %2031 = vmatprep.subr.mxu0 0.0
  %2032 = vmatpush2.msra.mxu0 0.0
  %2033 = vmatprep.mubr.f32.mxu0 0.0
  %2034 = vmatmul.mubr.f32.gmra.mxu0 %v1967
  %v2035 = vpop.f32.mrf.mxu0
  %v2036 = vadd.f32 0.0, %v2035
  %v2037 = vpop.f32.mrf.mxu0
  %2038 = vdwg.mxu0
  %v2040 = vsel %vm591, %v1965, 0
  %2042 = vmatprep.subr.mxu0 0.0
  %2043 = vmatpush1.msra.mxu0 0.0
  %2044 = vmatprep.subr.mxu0 0.0
  %2045 = vmatpush1.msra.mxu0 0.0
  %2046 = vmatprep.subr.mxu0 0.0
  %2047 = vmatpush1.msra.mxu0 0.0
  %2048 = vmatprep.subr.mxu0 0.0
  %2049 = vmatpush1.msra.mxu0 0.0
  %2050 = vmatprep.subr.mxu0 0.0
  %2051 = vmatpush1.msra.mxu0 0.0
  %2052 = vmatprep.subr.mxu0 0.0
  %2053 = vmatpush1.msra.mxu0 0.0
  %2054 = vmatprep.subr.mxu0 0.0
  %2055 = vmatpush1.msra.mxu0 0.0
  %2056 = vmatprep.subr.mxu0 0.0
  %2057 = vmatpush1.msra.mxu0 0.0
  %2058 = vmatprep.subr.mxu0 0.0
  %2059 = vmatpush1.msra.mxu0 0.0
  %2060 = vmatprep.subr.mxu0 0.0
  %2061 = vmatpush1.msra.mxu0 0.0
  %2062 = vmatprep.subr.mxu0 0.0
  %2063 = vmatpush1.msra.mxu0 0.0
  %2064 = vmatprep.subr.mxu0 0.0
  %2065 = vmatpush1.msra.mxu0 0.0
  %2066 = vmatprep.subr.mxu0 0.0
  %2067 = vmatpush1.msra.mxu0 0.0
  %2068 = vmatprep.subr.mxu0 0.0
  %2069 = vmatpush1.msra.mxu0 0.0
  %2070 = vmatprep.subr.mxu0 0.0
  %2071 = vmatpush1.msra.mxu0 0.0
  %2072 = vmatprep.subr.mxu0 0.0
  %2073 = vmatpush1.msra.mxu0 %v1640
  %2074 = vmatprep.subr.mxu0 0.0
  %2075 = vmatpush2.msra.mxu0 0.0
  %2076 = vmatprep.subr.mxu0 0.0
  %2077 = vmatpush2.msra.mxu0 0.0
  %2078 = vmatprep.subr.mxu0 0.0
  %2079 = vmatpush2.msra.mxu0 0.0
  %2080 = vmatprep.subr.mxu0 0.0
  %2081 = vmatpush2.msra.mxu0 0.0
  %2082 = vmatprep.subr.mxu0 0.0
  %2083 = vmatpush2.msra.mxu0 0.0
  %2084 = vmatprep.subr.mxu0 0.0
  %2085 = vmatpush2.msra.mxu0 0.0
  %2086 = vmatprep.subr.mxu0 0.0
  %2087 = vmatpush2.msra.mxu0 0.0
  %2088 = vmatprep.subr.mxu0 0.0
  %2089 = vmatpush2.msra.mxu0 0.0
  %2090 = vmatprep.subr.mxu0 0.0
  %2091 = vmatpush2.msra.mxu0 0.0
  %2092 = vmatprep.subr.mxu0 0.0
  %2093 = vmatpush2.msra.mxu0 0.0
  %2094 = vmatprep.subr.mxu0 0.0
  %2095 = vmatpush2.msra.mxu0 0.0
  %2096 = vmatprep.subr.mxu0 0.0
  %2097 = vmatpush2.msra.mxu0 0.0
  %2098 = vmatprep.subr.mxu0 0.0
  %2099 = vmatpush2.msra.mxu0 0.0
  %2100 = vmatprep.subr.mxu0 0.0
  %2101 = vmatpush2.msra.mxu0 0.0
  %2102 = vmatprep.subr.mxu0 0.0
  %2103 = vmatpush2.msra.mxu0 0.0
  %2104 = vmatprep.subr.mxu0 0.0
  %2105 = vmatpush2.msra.mxu0 0.0
  %2106 = vmatprep.mubr.f32.mxu0 0.0
  %2107 = vmatmul.mubr.f32.gmra.mxu0 %v2040
  %v2108 = vpop.f32.mrf.mxu0
  %v2109 = vadd.f32 0.0, %v2108
  %v2110 = vpop.f32.mrf.mxu0
  %2111 = vdwg.mxu0
  %v2113 = vsel %vm591, %v1802, 0
  %2115 = vmatprep.subr.mxu0 0.0
  %2116 = vmatpush1.msra.mxu0 0.0
  %2117 = vmatprep.subr.mxu0 0.0
  %2118 = vmatpush1.msra.mxu0 0.0
  %2119 = vmatprep.subr.mxu0 0.0
  %2120 = vmatpush1.msra.mxu0 0.0
  %2121 = vmatprep.subr.mxu0 0.0
  %2122 = vmatpush1.msra.mxu0 0.0
  %2123 = vmatprep.subr.mxu0 0.0
  %2124 = vmatpush1.msra.mxu0 0.0
  %2125 = vmatprep.subr.mxu0 0.0
  %2126 = vmatpush1.msra.mxu0 0.0
  %2127 = vmatprep.subr.mxu0 0.0
  %2128 = vmatpush1.msra.mxu0 0.0
  %2129 = vmatprep.subr.mxu0 0.0
  %2130 = vmatpush1.msra.mxu0 0.0
  %2131 = vmatprep.subr.mxu0 0.0
  %2132 = vmatpush1.msra.mxu0 0.0
  %2133 = vmatprep.subr.mxu0 0.0
  %2134 = vmatpush1.msra.mxu0 0.0
  %2135 = vmatprep.subr.mxu0 0.0
  %2136 = vmatpush1.msra.mxu0 0.0
  %2137 = vmatprep.subr.mxu0 0.0
  %2138 = vmatpush1.msra.mxu0 0.0
  %2139 = vmatprep.subr.mxu0 0.0
  %2140 = vmatpush1.msra.mxu0 0.0
  %2141 = vmatprep.subr.mxu0 0.0
  %2142 = vmatpush1.msra.mxu0 0.0
  %2143 = vmatprep.subr.mxu0 0.0
  %2144 = vmatpush1.msra.mxu0 0.0
  %2145 = vmatprep.subr.mxu0 0.0
  %2146 = vmatpush1.msra.mxu0 %v1632
  %2147 = vmatprep.subr.mxu0 0.0
  %2148 = vmatpush2.msra.mxu0 0.0
  %2149 = vmatprep.subr.mxu0 0.0
  %2150 = vmatpush2.msra.mxu0 0.0
  %2151 = vmatprep.subr.mxu0 0.0
  %2152 = vmatpush2.msra.mxu0 0.0
  %2153 = vmatprep.subr.mxu0 0.0
  %2154 = vmatpush2.msra.mxu0 0.0
  %2155 = vmatprep.subr.mxu0 0.0
  %2156 = vmatpush2.msra.mxu0 0.0
  %2157 = vmatprep.subr.mxu0 0.0
  %2158 = vmatpush2.msra.mxu0 0.0
  %2159 = vmatprep.subr.mxu0 0.0
  %2160 = vmatpush2.msra.mxu0 0.0
  %2161 = vmatprep.subr.mxu0 0.0
  %2162 = vmatpush2.msra.mxu0 0.0
  %2163 = vmatprep.subr.mxu0 0.0
  %2164 = vmatpush2.msra.mxu0 0.0
  %2165 = vmatprep.subr.mxu0 0.0
  %2166 = vmatpush2.msra.mxu0 0.0
  %2167 = vmatprep.subr.mxu0 0.0
  %2168 = vmatpush2.msra.mxu0 0.0
  %2169 = vmatprep.subr.mxu0 0.0
  %2170 = vmatpush2.msra.mxu0 0.0
  %2171 = vmatprep.subr.mxu0 0.0
  %2172 = vmatpush2.msra.mxu0 0.0
  %2173 = vmatprep.subr.mxu0 0.0
  %2174 = vmatpush2.msra.mxu0 0.0
  %2175 = vmatprep.subr.mxu0 0.0
  %2176 = vmatpush2.msra.mxu0 0.0
  %2177 = vmatprep.subr.mxu0 0.0
  %2178 = vmatpush2.msra.mxu0 0.0
  %2179 = vmatprep.mubr.f32.mxu0 0.0
  %2180 = vmatmul.mubr.f32.gmra.mxu0 %v2113
  %v2181 = vpop.f32.mrf.mxu0
  %v2182 = vadd.f32 %v2036, %v2181
  %v2183 = vpop.f32.mrf.mxu0
  %2184 = vdwg.mxu0
  %v2186 = vsel %vm591, %v1803, 0
  %2188 = vmatprep.subr.mxu0 0.0
  %2189 = vmatpush1.msra.mxu0 0.0
  %2190 = vmatprep.subr.mxu0 0.0
  %2191 = vmatpush1.msra.mxu0 0.0
  %2192 = vmatprep.subr.mxu0 0.0
  %2193 = vmatpush1.msra.mxu0 0.0
  %2194 = vmatprep.subr.mxu0 0.0
  %2195 = vmatpush1.msra.mxu0 0.0
  %2196 = vmatprep.subr.mxu0 0.0
  %2197 = vmatpush1.msra.mxu0 0.0
  %2198 = vmatprep.subr.mxu0 0.0
  %2199 = vmatpush1.msra.mxu0 0.0
  %2200 = vmatprep.subr.mxu0 0.0
  %2201 = vmatpush1.msra.mxu0 0.0
  %2202 = vmatprep.subr.mxu0 0.0
  %2203 = vmatpush1.msra.mxu0 0.0
  %2204 = vmatprep.subr.mxu0 0.0
  %2205 = vmatpush1.msra.mxu0 0.0
  %2206 = vmatprep.subr.mxu0 0.0
  %2207 = vmatpush1.msra.mxu0 0.0
  %2208 = vmatprep.subr.mxu0 0.0
  %2209 = vmatpush1.msra.mxu0 0.0
  %2210 = vmatprep.subr.mxu0 0.0
  %2211 = vmatpush1.msra.mxu0 0.0
  %2212 = vmatprep.subr.mxu0 0.0
  %2213 = vmatpush1.msra.mxu0 0.0
  %2214 = vmatprep.subr.mxu0 0.0
  %2215 = vmatpush1.msra.mxu0 0.0
  %2216 = vmatprep.subr.mxu0 0.0
  %2217 = vmatpush1.msra.mxu0 0.0
  %2218 = vmatprep.subr.mxu0 0.0
  %2219 = vmatpush1.msra.mxu0 %v1638
  %2220 = vmatprep.subr.mxu0 0.0
  %2221 = vmatpush2.msra.mxu0 0.0
  %2222 = vmatprep.subr.mxu0 0.0
  %2223 = vmatpush2.msra.mxu0 0.0
  %2224 = vmatprep.subr.mxu0 0.0
  %2225 = vmatpush2.msra.mxu0 0.0
  %2226 = vmatprep.subr.mxu0 0.0
  %2227 = vmatpush2.msra.mxu0 0.0
  %2228 = vmatprep.subr.mxu0 0.0
  %2229 = vmatpush2.msra.mxu0 0.0
  %2230 = vmatprep.subr.mxu0 0.0
  %2231 = vmatpush2.msra.mxu0 0.0
  %2232 = vmatprep.subr.mxu0 0.0
  %2233 = vmatpush2.msra.mxu0 0.0
  %2234 = vmatprep.subr.mxu0 0.0
  %2235 = vmatpush2.msra.mxu0 0.0
  %2236 = vmatprep.subr.mxu0 0.0
  %2237 = vmatpush2.msra.mxu0 0.0
  %2238 = vmatprep.subr.mxu0 0.0
  %2239 = vmatpush2.msra.mxu0 0.0
  %2240 = vmatprep.subr.mxu0 0.0
  %2241 = vmatpush2.msra.mxu0 0.0
  %2242 = vmatprep.subr.mxu0 0.0
  %2243 = vmatpush2.msra.mxu0 0.0
  %2244 = vmatprep.subr.mxu0 0.0
  %2245 = vmatpush2.msra.mxu0 0.0
  %2246 = vmatprep.subr.mxu0 0.0
  %2247 = vmatpush2.msra.mxu0 0.0
  %2248 = vmatprep.subr.mxu0 0.0
  %2249 = vmatpush2.msra.mxu0 0.0
  %2250 = vmatprep.subr.mxu0 0.0
  %2251 = vmatpush2.msra.mxu0 0.0
  %2252 = vmatprep.mubr.f32.mxu0 0.0
  %2253 = vmatmul.mubr.f32.gmra.mxu0 %v2186
  %v2254 = vpop.f32.mrf.mxu0
  %v2255 = vadd.f32 %v2109, %v2254
  %v2256 = vpop.f32.mrf.mxu0
  %2257 = vdwg.mxu0
  %v2258 = vld [vmem:[%s3 + $0xa8] sm:$0xff]
  %v2259 = vld [vmem:[%s3 + $0xb0] sm:$0xff]
  %v2260 = vld [vmem:[%s3 + $0xb8] sm:$0xff]
  %v2261 = vld [vmem:[%s3 + $0xc0] sm:$0xff]
  %v2262 = vld [vmem:[%s3 + $0xc8] sm:$0xff]
  %v2263 = vld [vmem:[%s3 + $0xd0] sm:$0xff]
  %v2264 = vld [vmem:[%s3 + $0xd8] sm:$0xff]
  %v2265 = vld [vmem:[%s3 + $0xe0] sm:$0xff]
  %v2266 = vld [vmem:[%s3 + $0xe8] sm:$0xff]
  %v2267 = vld [vmem:[%s3 + $0xf0] sm:$0xff]
  %v2268 = vld [vmem:[%s3 + $0xf8] sm:$0xff]
  %v2269 = vld [vmem:[%s3 + $0x100] sm:$0xff]
  %v2270 = vld [vmem:[%s3 + $0x108] sm:$0x1]
  %v2271 = vld [vmem:[%s3 + $0x109] sm:$0x1]
  %v2272 = vld [vmem:[%s3 + $0x10a] sm:$0x1]
  %v2273 = vld [vmem:[%s3 + $0x10b] sm:$0x1]
  %v2274 = vld [vmem:[%s3 + $0x10c] sm:$0x1]
  %v2275 = vld [vmem:[%s3 + $0x10d] sm:$0x1]
  %v2276 = vld [vmem:[%s3 + $0x10e] sm:$0x1]
  %v2277 = vadd.f32 %v1344, %v2182
  %v2278 = vadd.f32 %v1345, %v2255
  %v2279 = vlaneseq
  %v2280 = vshrl.u32 %v2279, 7
  %v2281 = vsub.s32 0, %v2280
  %v2282 = vrot.slane %v2271, %v2281
  %v2283 = vadd.f32 %v2277, %v2282
  %v2284 = vadd.f32 %v2278, %v2282
  %v2285 = vsel %vm213, %v2283, 0.0
  %2286 = vadd.xlane.f32.xlu0 %v2285
  %v2287 = vpop.xlane.xlu0 %2286
  %v2288 = vsel %vm213, %v2284, 0.0
  %2289 = vadd.xlane.f32.xlu0 %v2288
  %v2290 = vpop.xlane.xlu0 %2289
  %v2291 = vmul.f32 %v2287, %v1101
  %v2292 = vmul.f32 %v2290, %v1101
  %v2293 = vsub.f32 %v2283, %v2291
  %v2294 = vsub.f32 %v2284, %v2292
  %v2295 = vmul.f32 %v2293, %v2293
  %v2296 = vmul.f32 %v2294, %v2294
  %v2297 = vsel %vm213, %v2295, 0.0
  %2298 = vadd.xlane.f32.xlu0 %v2297
  %v2299 = vpop.xlane.xlu0 %2298
  %v2300 = vsel %vm213, %v2296, 0.0
  %2301 = vadd.xlane.f32.xlu0 %v2300
  %v2302 = vpop.xlane.xlu0 %2301
  %v2303 = vmul.f32 %v2299, %v1101
  %v2304 = vmul.f32 %v2302, %v1101
  %v2305 = vadd.f32 %v2303, 1e-05
  %v2306 = vadd.f32 %v2304, 1e-05
  %v2307 = vrsqrt.pop %v2305
  %v2308 = vrsqrt.pop %v2306
  %v2309 = vmul.f32 %v2293, %v2307
  %v2310 = vmul.f32 %v2294, %v2308
  %v2311 = vlaneseq
  %v2312 = vshrl.u32 %v2311, 7
  %v2313 = vsub.s32 0, %v2312
  %v2314 = vrot.slane %v2272, %v2313
  %v2315 = vmul.f32 %v2309, %v2314
  %v2316 = vmul.f32 %v2310, %v2314
  %v2317 = vlaneseq
  %v2318 = vshrl.u32 %v2317, 7
  %v2319 = vsub.s32 0, %v2318
  %v2320 = vrot.slane %v2273, %v2319
  %v2321 = vadd.f32 %v2315, %v2320
  %v2322 = vadd.f32 %v2316, %v2320
  %v2323 = vlaneseq
  %v2324 = vshrl.u32 %v2323, 7
  %v2325 = vsub.s32 0, %v2324
  %v2326 = vrot.slane %v2270, %v2325
  %v2328 = vsel %vm213, %v2321, 0
  %v2331 = vsel %vm213, %v2322, 0
  %2333 = vmatprep.subr.mxu0 0.0
  %2334 = vmatpush1.msra.mxu0 0.0
  %2335 = vmatprep.subr.mxu0 0.0
  %2336 = vmatpush1.msra.mxu0 0.0
  %2337 = vmatprep.subr.mxu0 0.0
  %2338 = vmatpush1.msra.mxu0 0.0
  %2339 = vmatprep.subr.mxu0 0.0
  %2340 = vmatpush1.msra.mxu0 0.0
  %2341 = vmatprep.subr.mxu0 0.0
  %2342 = vmatpush1.msra.mxu0 0.0
  %2343 = vmatprep.subr.mxu0 0.0
  %2344 = vmatpush1.msra.mxu0 0.0
  %2345 = vmatprep.subr.mxu0 0.0
  %2346 = vmatpush1.msra.mxu0 0.0
  %2347 = vmatprep.subr.mxu0 0.0
  %2348 = vmatpush1.msra.mxu0 0.0
  %2349 = vmatprep.subr.mxu0 0.0
  %2350 = vmatpush1.msra.mxu0 0.0
  %2351 = vmatprep.subr.mxu0 0.0
  %2352 = vmatpush1.msra.mxu0 0.0
  %2353 = vmatprep.subr.mxu0 0.0
  %2354 = vmatpush1.msra.mxu0 0.0
  %2355 = vmatprep.subr.mxu0 0.0
  %2356 = vmatpush1.msra.mxu0 0.0
  %2357 = vmatprep.subr.mxu0 0.0
  %2358 = vmatpush1.msra.mxu0 %v2261
  %2359 = vmatprep.subr.mxu0 0.0
  %2360 = vmatpush1.msra.mxu0 %v2260
  %2361 = vmatprep.subr.mxu0 0.0
  %2362 = vmatpush1.msra.mxu0 %v2259
  %2363 = vmatprep.subr.mxu0 0.0
  %2364 = vmatpush1.msra.mxu0 %v2258
  %2365 = vmatprep.subr.mxu0 0.0
  %2366 = vmatpush2.msra.mxu0 0.0
  %2367 = vmatprep.subr.mxu0 0.0
  %2368 = vmatpush2.msra.mxu0 0.0
  %2369 = vmatprep.subr.mxu0 0.0
  %2370 = vmatpush2.msra.mxu0 0.0
  %2371 = vmatprep.subr.mxu0 0.0
  %2372 = vmatpush2.msra.mxu0 0.0
  %2373 = vmatprep.subr.mxu0 0.0
  %2374 = vmatpush2.msra.mxu0 0.0
  %2375 = vmatprep.subr.mxu0 0.0
  %2376 = vmatpush2.msra.mxu0 0.0
  %2377 = vmatprep.subr.mxu0 0.0
  %2378 = vmatpush2.msra.mxu0 0.0
  %2379 = vmatprep.subr.mxu0 0.0
  %2380 = vmatpush2.msra.mxu0 0.0
  %2381 = vmatprep.subr.mxu0 0.0
  %2382 = vmatpush2.msra.mxu0 0.0
  %2383 = vmatprep.subr.mxu0 0.0
  %2384 = vmatpush2.msra.mxu0 0.0
  %2385 = vmatprep.subr.mxu0 0.0
  %2386 = vmatpush2.msra.mxu0 0.0
  %2387 = vmatprep.subr.mxu0 0.0
  %2388 = vmatpush2.msra.mxu0 0.0
  %2389 = vmatprep.subr.mxu0 0.0
  %2390 = vmatpush2.msra.mxu0 0.0
  %2391 = vmatprep.subr.mxu0 0.0
  %2392 = vmatpush2.msra.mxu0 0.0
  %2393 = vmatprep.subr.mxu0 0.0
  %2394 = vmatpush2.msra.mxu0 0.0
  %2395 = vmatprep.subr.mxu0 0.0
  %2396 = vmatpush2.msra.mxu0 0.0
  %2397 = vmatprep.mubr.f32.mxu0 0.0
  %2398 = vmatmul.mubr.f32.gmra.mxu0 %v2328
  %v2399 = vpop.f32.mrf.mxu0
  %v2400 = vadd.f32 %v2326, %v2399
  %v2401 = vpop.f32.mrf.mxu0
  %2402 = vmatprep.mubr.f32.mxu0 0.0
  %2403 = vmatmul.mubr.f32.gmra.mxu0 %v2331
  %v2404 = vpop.f32.mrf.mxu0
  %v2405 = vadd.f32 %v2326, %v2404
  %v2406 = vpop.f32.mrf.mxu0
  %2407 = vdwg.mxu0
  %v2408 = vmax.f32 %v2400, 0.0
  %v2409 = vmax.f32 %v2405, 0.0
  %v2410 = vlaneseq
  %v2411 = vshrl.u32 %v2410, 7
  %v2412 = vsub.s32 0, %v2411
  %v2413 = vrot.slane %v2274, %v2412
  %v2415 = vsel %vm56, %v2408, 0
  %v2418 = vsel %vm56, %v2409, 0
  %2420 = vmatprep.subr.mxu0 0.0
  %2421 = vmatpush1.msra.mxu0 0.0
  %2422 = vmatprep.subr.mxu0 0.0
  %2423 = vmatpush1.msra.mxu0 0.0
  %2424 = vmatprep.subr.mxu0 0.0
  %2425 = vmatpush1.msra.mxu0 0.0
  %2426 = vmatprep.subr.mxu0 0.0
  %2427 = vmatpush1.msra.mxu0 0.0
  %2428 = vmatprep.subr.mxu0 0.0
  %2429 = vmatpush1.msra.mxu0 0.0
  %2430 = vmatprep.subr.mxu0 0.0
  %2431 = vmatpush1.msra.mxu0 0.0
  %2432 = vmatprep.subr.mxu0 0.0
  %2433 = vmatpush1.msra.mxu0 0.0
  %2434 = vmatprep.subr.mxu0 0.0
  %2435 = vmatpush1.msra.mxu0 0.0
  %2436 = vmatprep.subr.mxu0 0.0
  %2437 = vmatpush1.msra.mxu0 %v2269
  %2438 = vmatprep.subr.mxu0 0.0
  %2439 = vmatpush1.msra.mxu0 %v2268
  %2440 = vmatprep.subr.mxu0 0.0
  %2441 = vmatpush1.msra.mxu0 %v2267
  %2442 = vmatprep.subr.mxu0 0.0
  %2443 = vmatpush1.msra.mxu0 %v2266
  %2444 = vmatprep.subr.mxu0 0.0
  %2445 = vmatpush1.msra.mxu0 %v2265
  %2446 = vmatprep.subr.mxu0 0.0
  %2447 = vmatpush1.msra.mxu0 %v2264
  %2448 = vmatprep.subr.mxu0 0.0
  %2449 = vmatpush1.msra.mxu0 %v2263
  %2450 = vmatprep.subr.mxu0 0.0
  %2451 = vmatpush1.msra.mxu0 %v2262
  %2452 = vmatprep.subr.mxu0 0.0
  %2453 = vmatpush2.msra.mxu0 0.0
  %2454 = vmatprep.subr.mxu0 0.0
  %2455 = vmatpush2.msra.mxu0 0.0
  %2456 = vmatprep.subr.mxu0 0.0
  %2457 = vmatpush2.msra.mxu0 0.0
  %2458 = vmatprep.subr.mxu0 0.0
  %2459 = vmatpush2.msra.mxu0 0.0
  %2460 = vmatprep.subr.mxu0 0.0
  %2461 = vmatpush2.msra.mxu0 0.0
  %2462 = vmatprep.subr.mxu0 0.0
  %2463 = vmatpush2.msra.mxu0 0.0
  %2464 = vmatprep.subr.mxu0 0.0
  %2465 = vmatpush2.msra.mxu0 0.0
  %2466 = vmatprep.subr.mxu0 0.0
  %2467 = vmatpush2.msra.mxu0 0.0
  %2468 = vmatprep.subr.mxu0 0.0
  %2469 = vmatpush2.msra.mxu0 0.0
  %2470 = vmatprep.subr.mxu0 0.0
  %2471 = vmatpush2.msra.mxu0 0.0
  %2472 = vmatprep.subr.mxu0 0.0
  %2473 = vmatpush2.msra.mxu0 0.0
  %2474 = vmatprep.subr.mxu0 0.0
  %2475 = vmatpush2.msra.mxu0 0.0
  %2476 = vmatprep.subr.mxu0 0.0
  %2477 = vmatpush2.msra.mxu0 0.0
  %2478 = vmatprep.subr.mxu0 0.0
  %2479 = vmatpush2.msra.mxu0 0.0
  %2480 = vmatprep.subr.mxu0 0.0
  %2481 = vmatpush2.msra.mxu0 0.0
  %2482 = vmatprep.subr.mxu0 0.0
  %2483 = vmatpush2.msra.mxu0 0.0
  %2484 = vmatprep.mubr.f32.mxu0 0.0
  %2485 = vmatmul.mubr.f32.gmra.mxu0 %v2415
  %v2486 = vpop.f32.mrf.mxu0
  %v2487 = vadd.f32 %v2413, %v2486
  %v2488 = vpop.f32.mrf.mxu0
  %2489 = vmatprep.mubr.f32.mxu0 0.0
  %2490 = vmatmul.mubr.f32.gmra.mxu0 %v2418
  %v2491 = vpop.f32.mrf.mxu0
  %v2492 = vadd.f32 %v2413, %v2491
  %v2493 = vpop.f32.mrf.mxu0
  %2494 = vdwg.mxu0
  %v2495 = vadd.f32 %v2321, %v2487
  %v2496 = vadd.f32 %v2322, %v2492
  %v2497 = vsel %vm213, %v2495, 0.0
  %2498 = vadd.xlane.f32.xlu0 %v2497
  %v2499 = vpop.xlane.xlu0 %2498
  %v2500 = vsel %vm213, %v2496, 0.0
  %2501 = vadd.xlane.f32.xlu0 %v2500
  %v2502 = vpop.xlane.xlu0 %2501
  %v2503 = vmul.f32 %v2499, %v1101
  %v2504 = vmul.f32 %v2502, %v1101
  %v2505 = vsub.f32 %v2495, %v2503
  %v2506 = vsub.f32 %v2496, %v2504
  %v2507 = vmul.f32 %v2505, %v2505
  %v2508 = vmul.f32 %v2506, %v2506
  %v2509 = vsel %vm213, %v2507, 0.0
  %2510 = vadd.xlane.f32.xlu0 %v2509
  %v2511 = vpop.xlane.xlu0 %2510
  %v2512 = vsel %vm213, %v2508, 0.0
  %2513 = vadd.xlane.f32.xlu0 %v2512
  %v2514 = vpop.xlane.xlu0 %2513
  %v2515 = vmul.f32 %v2511, %v1101
  %v2516 = vmul.f32 %v2514, %v1101
  %v2517 = vadd.f32 %v2515, 1e-05
  %v2518 = vadd.f32 %v2516, 1e-05
  %v2519 = vrsqrt.pop %v2517
  %v2520 = vrsqrt.pop %v2518
  %v2521 = vmul.f32 %v2505, %v2519
  %v2522 = vmul.f32 %v2506, %v2520
  %v2523 = vlaneseq
  %v2524 = vshrl.u32 %v2523, 7
  %v2525 = vsub.s32 0, %v2524
  %v2526 = vrot.slane %v2275, %v2525
  %v2527 = vmul.f32 %v2521, %v2526
  %v2528 = vmul.f32 %v2522, %v2526
  %v2529 = vlaneseq
  %v2530 = vshrl.u32 %v2529, 7
  %v2531 = vsub.s32 0, %v2530
  %v2532 = vrot.slane %v2276, %v2531
  %v2533 = vadd.f32 %v2527, %v2532
  %v2534 = vadd.f32 %v2528, %v2532
  %v2535 = vld [vmem:[%s3 + $0x110] sm:$0x1]
  %v2536 = vld [vmem:[%s3 + $0x111] sm:$0x1]
  %s2537 = sld [smem:[#allocation2]]
  %v2540 = vunpack.c.l.s4 1966171168
  %v2541 = vunpack.c.0.s8 %v2540
  %v2542 = vlaneseq
  %v2543 = vshrl.u32 %v2542, 7
  %v2544 = vsub.s32 %v2541, %v2543
  %v2545 = vrot.slane %v151, %v2544
  %v2546 = vcombine.high %v2545, %v2545
  %v2548 = vunpack.c.l.s4 1966171168
  %v2549 = vunpack.c.0.s8 %v2548
  %v2550 = vlaneseq
  %v2551 = vshrl.u32 %v2550, 7
  %v2552 = vsub.s32 %v2549, %v2551
  %v2553 = vrot.slane %v2545, %v2552
  %v2555 = vunpack.c.l.s4 1966171168
  %v2556 = vunpack.c.0.s8 %v2555
  %v2557 = vlaneseq
  %v2558 = vshrl.u32 %v2557, 7
  %v2559 = vsub.s32 %v2556, %v2558
  %v2560 = vrot.slane %v2546, %v2559
  %s2563 = ssub.s32 %s2537, 1
  %v2564 = vstv %s2563
  %vm2565 = vcmp.eq.s32.totalorder %v31, %v2564
  %v2566 = vsel %vm2565, 1, 0
  %v2567 = vcvt.s32.f32 %v2566
  %v2569 = vsel %vm591, %v2567, 0
  %2571 = vmatprep.subr.mxu0 0.0
  %2572 = vmatpush1.msra.mxu0 0.0
  %2573 = vmatprep.subr.mxu0 0.0
  %2574 = vmatpush1.msra.mxu0 0.0
  %2575 = vmatprep.subr.mxu0 0.0
  %2576 = vmatpush1.msra.mxu0 0.0
  %2577 = vmatprep.subr.mxu0 0.0
  %2578 = vmatpush1.msra.mxu0 0.0
  %2579 = vmatprep.subr.mxu0 0.0
  %2580 = vmatpush1.msra.mxu0 0.0
  %2581 = vmatprep.subr.mxu0 0.0
  %2582 = vmatpush1.msra.mxu0 0.0
  %2583 = vmatprep.subr.mxu0 0.0
  %2584 = vmatpush1.msra.mxu0 0.0
  %2585 = vmatprep.subr.mxu0 0.0
  %2586 = vmatpush1.msra.mxu0 0.0
  %2587 = vmatprep.subr.mxu0 0.0
  %2588 = vmatpush1.msra.mxu0 0.0
  %2589 = vmatprep.subr.mxu0 0.0
  %2590 = vmatpush1.msra.mxu0 0.0
  %2591 = vmatprep.subr.mxu0 0.0
  %2592 = vmatpush1.msra.mxu0 0.0
  %2593 = vmatprep.subr.mxu0 0.0
  %2594 = vmatpush1.msra.mxu0 0.0
  %2595 = vmatprep.subr.mxu0 0.0
  %2596 = vmatpush1.msra.mxu0 0.0
  %2597 = vmatprep.subr.mxu0 0.0
  %2598 = vmatpush1.msra.mxu0 0.0
  %2599 = vmatprep.subr.mxu0 0.0
  %2600 = vmatpush1.msra.mxu0 0.0
  %2601 = vmatprep.subr.mxu0 0.0
  %2602 = vmatpush1.msra.mxu0 %v2533
  %2603 = vmatprep.subr.mxu0 0.0
  %2604 = vmatpush2.msra.mxu0 0.0
  %2605 = vmatprep.subr.mxu0 0.0
  %2606 = vmatpush2.msra.mxu0 0.0
  %2607 = vmatprep.subr.mxu0 0.0
  %2608 = vmatpush2.msra.mxu0 0.0
  %2609 = vmatprep.subr.mxu0 0.0
  %2610 = vmatpush2.msra.mxu0 0.0
  %2611 = vmatprep.subr.mxu0 0.0
  %2612 = vmatpush2.msra.mxu0 0.0
  %2613 = vmatprep.subr.mxu0 0.0
  %2614 = vmatpush2.msra.mxu0 0.0
  %2615 = vmatprep.subr.mxu0 0.0
  %2616 = vmatpush2.msra.mxu0 0.0
  %2617 = vmatprep.subr.mxu0 0.0
  %2618 = vmatpush2.msra.mxu0 0.0
  %2619 = vmatprep.subr.mxu0 0.0
  %2620 = vmatpush2.msra.mxu0 0.0
  %2621 = vmatprep.subr.mxu0 0.0
  %2622 = vmatpush2.msra.mxu0 0.0
  %2623 = vmatprep.subr.mxu0 0.0
  %2624 = vmatpush2.msra.mxu0 0.0
  %2625 = vmatprep.subr.mxu0 0.0
  %2626 = vmatpush2.msra.mxu0 0.0
  %2627 = vmatprep.subr.mxu0 0.0
  %2628 = vmatpush2.msra.mxu0 0.0
  %2629 = vmatprep.subr.mxu0 0.0
  %2630 = vmatpush2.msra.mxu0 0.0
  %2631 = vmatprep.subr.mxu0 0.0
  %2632 = vmatpush2.msra.mxu0 0.0
  %2633 = vmatprep.subr.mxu0 0.0
  %2634 = vmatpush2.msra.mxu0 0.0
  %2635 = vmatprep.mubr.f32.mxu0 0.0
  %2636 = vmatmul.mubr.f32.gmra.mxu0 %v2569
  %v2637 = vpop.f32.mrf.mxu0
  %v2638 = vadd.f32 0.0, %v2637
  %v2639 = vpop.f32.mrf.mxu0
  %2640 = vdwg.mxu0
  %2641 = vmatprep.subr.mxu0 0.0
  %2642 = vmatpush1.msra.mxu0 0.0
  %2643 = vmatprep.subr.mxu0 0.0
  %2644 = vmatpush1.msra.mxu0 0.0
  %2645 = vmatprep.subr.mxu0 0.0
  %2646 = vmatpush1.msra.mxu0 0.0
  %2647 = vmatprep.subr.mxu0 0.0
  %2648 = vmatpush1.msra.mxu0 0.0
  %2649 = vmatprep.subr.mxu0 0.0
  %2650 = vmatpush1.msra.mxu0 0.0
  %2651 = vmatprep.subr.mxu0 0.0
  %2652 = vmatpush1.msra.mxu0 0.0
  %2653 = vmatprep.subr.mxu0 0.0
  %2654 = vmatpush1.msra.mxu0 0.0
  %2655 = vmatprep.subr.mxu0 0.0
  %2656 = vmatpush1.msra.mxu0 0.0
  %2657 = vmatprep.subr.mxu0 0.0
  %2658 = vmatpush1.msra.mxu0 0.0
  %2659 = vmatprep.subr.mxu0 0.0
  %2660 = vmatpush1.msra.mxu0 0.0
  %2661 = vmatprep.subr.mxu0 0.0
  %2662 = vmatpush1.msra.mxu0 0.0
  %2663 = vmatprep.subr.mxu0 0.0
  %2664 = vmatpush1.msra.mxu0 0.0
  %2665 = vmatprep.subr.mxu0 0.0
  %2666 = vmatpush1.msra.mxu0 0.0
  %2667 = vmatprep.subr.mxu0 0.0
  %2668 = vmatpush1.msra.mxu0 0.0
  %2669 = vmatprep.subr.mxu0 0.0
  %2670 = vmatpush1.msra.mxu0 0.0
  %2671 = vmatprep.subr.mxu0 0.0
  %2672 = vmatpush1.msra.mxu0 %v2534
  %2673 = vmatprep.subr.mxu0 0.0
  %2674 = vmatpush2.msra.mxu0 0.0
  %2675 = vmatprep.subr.mxu0 0.0
  %2676 = vmatpush2.msra.mxu0 0.0
  %2677 = vmatprep.subr.mxu0 0.0
  %2678 = vmatpush2.msra.mxu0 0.0
  %2679 = vmatprep.subr.mxu0 0.0
  %2680 = vmatpush2.msra.mxu0 0.0
  %2681 = vmatprep.subr.mxu0 0.0
  %2682 = vmatpush2.msra.mxu0 0.0
  %2683 = vmatprep.subr.mxu0 0.0
  %2684 = vmatpush2.msra.mxu0 0.0
  %2685 = vmatprep.subr.mxu0 0.0
  %2686 = vmatpush2.msra.mxu0 0.0
  %2687 = vmatprep.subr.mxu0 0.0
  %2688 = vmatpush2.msra.mxu0 0.0
  %2689 = vmatprep.subr.mxu0 0.0
  %2690 = vmatpush2.msra.mxu0 0.0
  %2691 = vmatprep.subr.mxu0 0.0
  %2692 = vmatpush2.msra.mxu0 0.0
  %2693 = vmatprep.subr.mxu0 0.0
  %2694 = vmatpush2.msra.mxu0 0.0
  %2695 = vmatprep.subr.mxu0 0.0
  %2696 = vmatpush2.msra.mxu0 0.0
  %2697 = vmatprep.subr.mxu0 0.0
  %2698 = vmatpush2.msra.mxu0 0.0
  %2699 = vmatprep.subr.mxu0 0.0
  %2700 = vmatpush2.msra.mxu0 0.0
  %2701 = vmatprep.subr.mxu0 0.0
  %2702 = vmatpush2.msra.mxu0 0.0
  %2703 = vmatprep.subr.mxu0 0.0
  %2704 = vmatpush2.msra.mxu0 0.0
  %2705 = vmatprep.mubr.f32.mxu0 0.0
  %2706 = vmatmul.mubr.f32.gmra.mxu0 %v2569
  %v2707 = vpop.f32.mrf.mxu0
  %v2708 = vadd.f32 0.0, %v2707
  %v2709 = vpop.f32.mrf.mxu0
  %2710 = vdwg.mxu0
  %p2711 = scmp.eq.s32.totalorder %s2537, 0
  %s2712 = scalar_select %p2711, 1, 0
  %s2713 = scvt.s32.f32 %s2712
  %v2714 = vstv %s2713
  %v2715 = vmul.f32 %v2714, %v2553
  %v2716 = vmul.f32 %v2714, %v2560
  %v2717 = vadd.f32 %v2715, %v2638
  %v2718 = vadd.f32 %v2716, %v2708
  %v2719 = vmul.f32 %v2717, 0.17677669
  %v2720 = vmul.f32 %v2718, 0.17677669
  %v2722 = vsel %vm213, %v2719, 0
  %v2725 = vsel %vm213, %v2533, 0
  %2727 = vmatprep.subr.mxu0 0.0
  %2728 = vmatpush1.xpose.msra.mxu0 0.0
  %2729 = vmatprep.subr.mxu0 0.0
  %2730 = vmatpush1.xpose.msra.mxu0 0.0
  %2731 = vmatprep.subr.mxu0 0.0
  %2732 = vmatpush1.xpose.msra.mxu0 0.0
  %2733 = vmatprep.subr.mxu0 0.0
  %2734 = vmatpush1.xpose.msra.mxu0 0.0
  %2735 = vmatprep.subr.mxu0 0.0
  %2736 = vmatpush1.xpose.msra.mxu0 0.0
  %2737 = vmatprep.subr.mxu0 0.0
  %2738 = vmatpush1.xpose.msra.mxu0 0.0
  %2739 = vmatprep.subr.mxu0 0.0
  %2740 = vmatpush1.xpose.msra.mxu0 0.0
  %2741 = vmatprep.subr.mxu0 0.0
  %2742 = vmatpush1.xpose.msra.mxu0 0.0
  %2743 = vmatprep.subr.mxu0 0.0
  %2744 = vmatpush1.xpose.msra.mxu0 0.0
  %2745 = vmatprep.subr.mxu0 0.0
  %2746 = vmatpush1.xpose.msra.mxu0 0.0
  %2747 = vmatprep.subr.mxu0 0.0
  %2748 = vmatpush1.xpose.msra.mxu0 0.0
  %2749 = vmatprep.subr.mxu0 0.0
  %2750 = vmatpush1.xpose.msra.mxu0 0.0
  %2751 = vmatprep.subr.mxu0 0.0
  %2752 = vmatpush1.xpose.msra.mxu0 0.0
  %2753 = vmatprep.subr.mxu0 0.0
  %2754 = vmatpush1.xpose.msra.mxu0 0.0
  %2755 = vmatprep.subr.mxu0 0.0
  %2756 = vmatpush1.xpose.msra.mxu0 0.0
  %2757 = vmatprep.subr.mxu0 0.0
  %2758 = vmatpush1.xpose.msra.mxu0 %v2725
  %2759 = vmatprep.subr.mxu0 0.0
  %2760 = vmatpush2.xpose.msra.mxu0 0.0
  %2761 = vmatprep.subr.mxu0 0.0
  %2762 = vmatpush2.xpose.msra.mxu0 0.0
  %2763 = vmatprep.subr.mxu0 0.0
  %2764 = vmatpush2.xpose.msra.mxu0 0.0
  %2765 = vmatprep.subr.mxu0 0.0
  %2766 = vmatpush2.xpose.msra.mxu0 0.0
  %2767 = vmatprep.subr.mxu0 0.0
  %2768 = vmatpush2.xpose.msra.mxu0 0.0
  %2769 = vmatprep.subr.mxu0 0.0
  %2770 = vmatpush2.xpose.msra.mxu0 0.0
  %2771 = vmatprep.subr.mxu0 0.0
  %2772 = vmatpush2.xpose.msra.mxu0 0.0
  %2773 = vmatprep.subr.mxu0 0.0
  %2774 = vmatpush2.xpose.msra.mxu0 0.0
  %2775 = vmatprep.subr.mxu0 0.0
  %2776 = vmatpush2.xpose.msra.mxu0 0.0
  %2777 = vmatprep.subr.mxu0 0.0
  %2778 = vmatpush2.xpose.msra.mxu0 0.0
  %2779 = vmatprep.subr.mxu0 0.0
  %2780 = vmatpush2.xpose.msra.mxu0 0.0
  %2781 = vmatprep.subr.mxu0 0.0
  %2782 = vmatpush2.xpose.msra.mxu0 0.0
  %2783 = vmatprep.subr.mxu0 0.0
  %2784 = vmatpush2.xpose.msra.mxu0 0.0
  %2785 = vmatprep.subr.mxu0 0.0
  %2786 = vmatpush2.xpose.msra.mxu0 0.0
  %2787 = vmatprep.subr.mxu0 0.0
  %2788 = vmatpush2.xpose.msra.mxu0 0.0
  %2789 = vmatprep.subr.mxu0 0.0
  %2790 = vmatpush2.xpose.msra.mxu0 0.0
  %2791 = vmatprep.mubr.f32.mxu0 0.0
  %2792 = vmatmul.mubr.f32.gmra.mxu0 %v2722
  %v2793 = vpop.f32.mrf.mxu0
  %v2794 = vadd.f32 0.0, %v2793
  %v2795 = vpop.f32.mrf.mxu0
  %2796 = vdwg.mxu0
  %v2798 = vsel %vm213, %v2720, 0
  %v2801 = vsel %vm213, %v2534, 0
  %2803 = vmatprep.subr.mxu0 0.0
  %2804 = vmatpush1.xpose.msra.mxu0 0.0
  %2805 = vmatprep.subr.mxu0 0.0
  %2806 = vmatpush1.xpose.msra.mxu0 0.0
  %2807 = vmatprep.subr.mxu0 0.0
  %2808 = vmatpush1.xpose.msra.mxu0 0.0
  %2809 = vmatprep.subr.mxu0 0.0
  %2810 = vmatpush1.xpose.msra.mxu0 0.0
  %2811 = vmatprep.subr.mxu0 0.0
  %2812 = vmatpush1.xpose.msra.mxu0 0.0
  %2813 = vmatprep.subr.mxu0 0.0
  %2814 = vmatpush1.xpose.msra.mxu0 0.0
  %2815 = vmatprep.subr.mxu0 0.0
  %2816 = vmatpush1.xpose.msra.mxu0 0.0
  %2817 = vmatprep.subr.mxu0 0.0
  %2818 = vmatpush1.xpose.msra.mxu0 0.0
  %2819 = vmatprep.subr.mxu0 0.0
  %2820 = vmatpush1.xpose.msra.mxu0 0.0
  %2821 = vmatprep.subr.mxu0 0.0
  %2822 = vmatpush1.xpose.msra.mxu0 0.0
  %2823 = vmatprep.subr.mxu0 0.0
  %2824 = vmatpush1.xpose.msra.mxu0 0.0
  %2825 = vmatprep.subr.mxu0 0.0
  %2826 = vmatpush1.xpose.msra.mxu0 0.0
  %2827 = vmatprep.subr.mxu0 0.0
  %2828 = vmatpush1.xpose.msra.mxu0 0.0
  %2829 = vmatprep.subr.mxu0 0.0
  %2830 = vmatpush1.xpose.msra.mxu0 0.0
  %2831 = vmatprep.subr.mxu0 0.0
  %2832 = vmatpush1.xpose.msra.mxu0 0.0
  %2833 = vmatprep.subr.mxu0 0.0
  %2834 = vmatpush1.xpose.msra.mxu0 %v2801
  %2835 = vmatprep.subr.mxu0 0.0
  %2836 = vmatpush2.xpose.msra.mxu0 0.0
  %2837 = vmatprep.subr.mxu0 0.0
  %2838 = vmatpush2.xpose.msra.mxu0 0.0
  %2839 = vmatprep.subr.mxu0 0.0
  %2840 = vmatpush2.xpose.msra.mxu0 0.0
  %2841 = vmatprep.subr.mxu0 0.0
  %2842 = vmatpush2.xpose.msra.mxu0 0.0
  %2843 = vmatprep.subr.mxu0 0.0
  %2844 = vmatpush2.xpose.msra.mxu0 0.0
  %2845 = vmatprep.subr.mxu0 0.0
  %2846 = vmatpush2.xpose.msra.mxu0 0.0
  %2847 = vmatprep.subr.mxu0 0.0
  %2848 = vmatpush2.xpose.msra.mxu0 0.0
  %2849 = vmatprep.subr.mxu0 0.0
  %2850 = vmatpush2.xpose.msra.mxu0 0.0
  %2851 = vmatprep.subr.mxu0 0.0
  %2852 = vmatpush2.xpose.msra.mxu0 0.0
  %2853 = vmatprep.subr.mxu0 0.0
  %2854 = vmatpush2.xpose.msra.mxu0 0.0
  %2855 = vmatprep.subr.mxu0 0.0
  %2856 = vmatpush2.xpose.msra.mxu0 0.0
  %2857 = vmatprep.subr.mxu0 0.0
  %2858 = vmatpush2.xpose.msra.mxu0 0.0
  %2859 = vmatprep.subr.mxu0 0.0
  %2860 = vmatpush2.xpose.msra.mxu0 0.0
  %2861 = vmatprep.subr.mxu0 0.0
  %2862 = vmatpush2.xpose.msra.mxu0 0.0
  %2863 = vmatprep.subr.mxu0 0.0
  %2864 = vmatpush2.xpose.msra.mxu0 0.0
  %2865 = vmatprep.subr.mxu0 0.0
  %2866 = vmatpush2.xpose.msra.mxu0 0.0
  %2867 = vmatprep.mubr.f32.mxu0 0.0
  %2868 = vmatmul.mubr.f32.gmra.mxu0 %v2798
  %v2869 = vpop.f32.mrf.mxu0
  %v2870 = vadd.f32 0.0, %v2869
  %v2871 = vpop.f32.mrf.mxu0
  %2872 = vdwg.mxu0
  %v2873 = vmul.f32 %v2719, %v2553
  %v2874 = vmul.f32 %v2720, %v2560
  %vm2875 = vcmask 253952
  %v2876 = vsel %vm2875, %v2873, 0.0
  %2877 = vadd.xlane.f32.xlu0 %v2876
  %v2878 = vpop.xlane.xlu0 %2877
  %v2879 = vsel %vm2875, %v2874, 0.0
  %2880 = vadd.xlane.f32.xlu0 %v2879
  %v2881 = vpop.xlane.xlu0 %2880
  %vm2882 = vcmask 57344
  %v2883 = vsel %vm2882, %v2794, -inf
  %2884 = vmax.xlane.f32.xlu0 %v2883
  %v2885 = vpop.xlane.xlu0 %2884
  %v2886 = vsel %vm2882, %v2870, -inf
  %2887 = vmax.xlane.f32.xlu0 %v2886
  %v2888 = vpop.xlane.xlu0 %2887
  %v2889 = vmax.f32 %v2885, %v2878
  %v2890 = vmax.f32 %v2888, %v2881
  %v2891 = vsub.f32 %v2878, %v2889
  %v2892 = vsub.f32 %v2881, %v2890
  %v2893 = vmul.f32 %v2891, 1.442695
  %v2894 = vpow.pop %v2893
  %v2895 = vmul.f32 %v2892, 1.442695
  %v2896 = vpow.pop %v2895
  %v2897 = vsub.f32 %v2794, %v2889
  %v2898 = vsub.f32 %v2870, %v2890
  %v2899 = vmul.f32 %v2897, 1.442695
  %v2900 = vpow.pop %v2899
  %v2901 = vmul.f32 %v2898, 1.442695
  %v2902 = vpow.pop %v2901
  %v2903 = vsel %vm2882, %v2900, 0.0
  %2904 = vadd.xlane.f32.xlu0 %v2903
  %v2905 = vpop.xlane.xlu0 %2904
  %v2906 = vsel %vm2882, %v2902, 0.0
  %2907 = vadd.xlane.f32.xlu0 %v2906
  %v2908 = vpop.xlane.xlu0 %2907
  %v2909 = vadd.f32 %v2894, %v2905
  %v2910 = vadd.f32 %v2896, %v2908
  %v2911 = vmul.f32 %v2894, %v2553
  %v2912 = vmul.f32 %v2896, %v2560
  %v2914 = vsel %vm591, %v2900, 0
  %2916 = vmatprep.subr.mxu0 0.0
  %2917 = vmatpush1.msra.mxu0 0.0
  %2918 = vmatprep.subr.mxu0 0.0
  %2919 = vmatpush1.msra.mxu0 0.0
  %2920 = vmatprep.subr.mxu0 0.0
  %2921 = vmatpush1.msra.mxu0 0.0
  %2922 = vmatprep.subr.mxu0 0.0
  %2923 = vmatpush1.msra.mxu0 0.0
  %2924 = vmatprep.subr.mxu0 0.0
  %2925 = vmatpush1.msra.mxu0 0.0
  %2926 = vmatprep.subr.mxu0 0.0
  %2927 = vmatpush1.msra.mxu0 0.0
  %2928 = vmatprep.subr.mxu0 0.0
  %2929 = vmatpush1.msra.mxu0 0.0
  %2930 = vmatprep.subr.mxu0 0.0
  %2931 = vmatpush1.msra.mxu0 0.0
  %2932 = vmatprep.subr.mxu0 0.0
  %2933 = vmatpush1.msra.mxu0 0.0
  %2934 = vmatprep.subr.mxu0 0.0
  %2935 = vmatpush1.msra.mxu0 0.0
  %2936 = vmatprep.subr.mxu0 0.0
  %2937 = vmatpush1.msra.mxu0 0.0
  %2938 = vmatprep.subr.mxu0 0.0
  %2939 = vmatpush1.msra.mxu0 0.0
  %2940 = vmatprep.subr.mxu0 0.0
  %2941 = vmatpush1.msra.mxu0 0.0
  %2942 = vmatprep.subr.mxu0 0.0
  %2943 = vmatpush1.msra.mxu0 0.0
  %2944 = vmatprep.subr.mxu0 0.0
  %2945 = vmatpush1.msra.mxu0 0.0
  %2946 = vmatprep.subr.mxu0 0.0
  %2947 = vmatpush1.msra.mxu0 %v2533
  %2948 = vmatprep.subr.mxu0 0.0
  %2949 = vmatpush2.msra.mxu0 0.0
  %2950 = vmatprep.subr.mxu0 0.0
  %2951 = vmatpush2.msra.mxu0 0.0
  %2952 = vmatprep.subr.mxu0 0.0
  %2953 = vmatpush2.msra.mxu0 0.0
  %2954 = vmatprep.subr.mxu0 0.0
  %2955 = vmatpush2.msra.mxu0 0.0
  %2956 = vmatprep.subr.mxu0 0.0
  %2957 = vmatpush2.msra.mxu0 0.0
  %2958 = vmatprep.subr.mxu0 0.0
  %2959 = vmatpush2.msra.mxu0 0.0
  %2960 = vmatprep.subr.mxu0 0.0
  %2961 = vmatpush2.msra.mxu0 0.0
  %2962 = vmatprep.subr.mxu0 0.0
  %2963 = vmatpush2.msra.mxu0 0.0
  %2964 = vmatprep.subr.mxu0 0.0
  %2965 = vmatpush2.msra.mxu0 0.0
  %2966 = vmatprep.subr.mxu0 0.0
  %2967 = vmatpush2.msra.mxu0 0.0
  %2968 = vmatprep.subr.mxu0 0.0
  %2969 = vmatpush2.msra.mxu0 0.0
  %2970 = vmatprep.subr.mxu0 0.0
  %2971 = vmatpush2.msra.mxu0 0.0
  %2972 = vmatprep.subr.mxu0 0.0
  %2973 = vmatpush2.msra.mxu0 0.0
  %2974 = vmatprep.subr.mxu0 0.0
  %2975 = vmatpush2.msra.mxu0 0.0
  %2976 = vmatprep.subr.mxu0 0.0
  %2977 = vmatpush2.msra.mxu0 0.0
  %2978 = vmatprep.subr.mxu0 0.0
  %2979 = vmatpush2.msra.mxu0 0.0
  %2980 = vmatprep.mubr.f32.mxu0 0.0
  %2981 = vmatmul.mubr.f32.gmra.mxu0 %v2914
  %v2982 = vpop.f32.mrf.mxu0
  %v2983 = vadd.f32 0.0, %v2982
  %v2984 = vpop.f32.mrf.mxu0
  %2985 = vdwg.mxu0
  %v2987 = vsel %vm591, %v2902, 0
  %2989 = vmatprep.subr.mxu0 0.0
  %2990 = vmatpush1.msra.mxu0 0.0
  %2991 = vmatprep.subr.mxu0 0.0
  %2992 = vmatpush1.msra.mxu0 0.0
  %2993 = vmatprep.subr.mxu0 0.0
  %2994 = vmatpush1.msra.mxu0 0.0
  %2995 = vmatprep.subr.mxu0 0.0
  %2996 = vmatpush1.msra.mxu0 0.0
  %2997 = vmatprep.subr.mxu0 0.0
  %2998 = vmatpush1.msra.mxu0 0.0
  %2999 = vmatprep.subr.mxu0 0.0
  %3000 = vmatpush1.msra.mxu0 0.0
  %3001 = vmatprep.subr.mxu0 0.0
  %3002 = vmatpush1.msra.mxu0 0.0
  %3003 = vmatprep.subr.mxu0 0.0
  %3004 = vmatpush1.msra.mxu0 0.0
  %3005 = vmatprep.subr.mxu0 0.0
  %3006 = vmatpush1.msra.mxu0 0.0
  %3007 = vmatprep.subr.mxu0 0.0
  %3008 = vmatpush1.msra.mxu0 0.0
  %3009 = vmatprep.subr.mxu0 0.0
  %3010 = vmatpush1.msra.mxu0 0.0
  %3011 = vmatprep.subr.mxu0 0.0
  %3012 = vmatpush1.msra.mxu0 0.0
  %3013 = vmatprep.subr.mxu0 0.0
  %3014 = vmatpush1.msra.mxu0 0.0
  %3015 = vmatprep.subr.mxu0 0.0
  %3016 = vmatpush1.msra.mxu0 0.0
  %3017 = vmatprep.subr.mxu0 0.0
  %3018 = vmatpush1.msra.mxu0 0.0
  %3019 = vmatprep.subr.mxu0 0.0
  %3020 = vmatpush1.msra.mxu0 %v2534
  %3021 = vmatprep.subr.mxu0 0.0
  %3022 = vmatpush2.msra.mxu0 0.0
  %3023 = vmatprep.subr.mxu0 0.0
  %3024 = vmatpush2.msra.mxu0 0.0
  %3025 = vmatprep.subr.mxu0 0.0
  %3026 = vmatpush2.msra.mxu0 0.0
  %3027 = vmatprep.subr.mxu0 0.0
  %3028 = vmatpush2.msra.mxu0 0.0
  %3029 = vmatprep.subr.mxu0 0.0
  %3030 = vmatpush2.msra.mxu0 0.0
  %3031 = vmatprep.subr.mxu0 0.0
  %3032 = vmatpush2.msra.mxu0 0.0
  %3033 = vmatprep.subr.mxu0 0.0
  %3034 = vmatpush2.msra.mxu0 0.0
  %3035 = vmatprep.subr.mxu0 0.0
  %3036 = vmatpush2.msra.mxu0 0.0
  %3037 = vmatprep.subr.mxu0 0.0
  %3038 = vmatpush2.msra.mxu0 0.0
  %3039 = vmatprep.subr.mxu0 0.0
  %3040 = vmatpush2.msra.mxu0 0.0
  %3041 = vmatprep.subr.mxu0 0.0
  %3042 = vmatpush2.msra.mxu0 0.0
  %3043 = vmatprep.subr.mxu0 0.0
  %3044 = vmatpush2.msra.mxu0 0.0
  %3045 = vmatprep.subr.mxu0 0.0
  %3046 = vmatpush2.msra.mxu0 0.0
  %3047 = vmatprep.subr.mxu0 0.0
  %3048 = vmatpush2.msra.mxu0 0.0
  %3049 = vmatprep.subr.mxu0 0.0
  %3050 = vmatpush2.msra.mxu0 0.0
  %3051 = vmatprep.subr.mxu0 0.0
  %3052 = vmatpush2.msra.mxu0 0.0
  %3053 = vmatprep.mubr.f32.mxu0 0.0
  %3054 = vmatmul.mubr.f32.gmra.mxu0 %v2987
  %v3055 = vpop.f32.mrf.mxu0
  %v3056 = vadd.f32 0.0, %v3055
  %v3057 = vpop.f32.mrf.mxu0
  %3058 = vdwg.mxu0
  %v3059 = vadd.f32 %v2911, %v2983
  %v3060 = vadd.f32 %v2912, %v3056
  %v3061 = vrcp.pop %v2909
  %v3062 = vmul.f32 %v3059, %v3061
  %v3063 = vrcp.pop %v2910
  %v3064 = vmul.f32 %v3060, %v3063
  %v3065 = vrot.slane %v151, 1
  %v3068 = vadd.f32 %v3062, %v151
  %v3069 = vadd.f32 %v3064, %v3065
  %v3072 = vrot.slane %v3069, 7
  %vm3073 = vcmask 1041409
  %v3074 = vsel %vm3073, %v3072, %v3068
  %vm3076 = vcmask 254976
  %v3077 = vsel %vm3076, %v3074, 0.0
  %3078 = vadd.xlane.f32.xlu0 %v3077
  %v3079 = vpop.xlane.xlu0 %3078
  %v3080 = vmul.f32 %v3079, %v1101
  %v3082 = vrot.slane %v3080, 1
  %v3085 = vsub.f32 %v3068, %v3080
  %v3086 = vsub.f32 %v3069, %v3082
  %v3087 = vmul.f32 %v3085, %v3085
  %v3088 = vmul.f32 %v3086, %v3086
  %v3091 = vrot.slane %v3088, 7
  %v3092 = vsel %vm3073, %v3091, %v3087
  %v3094 = vsel %vm3076, %v3092, 0.0
  %3095 = vadd.xlane.f32.xlu0 %v3094
  %v3096 = vpop.xlane.xlu0 %3095
  %v3097 = vmul.f32 %v3096, %v1101
  %v3098 = vadd.f32 %v3097, 1e-05
  %v3099 = vrsqrt.pop %v3098
  %v3101 = vrot.slane %v3099, 1
  %v3104 = vmul.f32 %v3085, %v3099
  %v3105 = vmul.f32 %v3086, %v3101
  %v3106 = vlaneseq
  %v3107 = vshrl.u32 %v3106, 7
  %v3108 = vsub.s32 0, %v3107
  %v3109 = vrot.slane %v2535, %v3108
  %v3110 = vmul.f32 %v3104, %v3109
  %v3111 = vmul.f32 %v3105, %v3109
  %v3112 = vlaneseq
  %v3113 = vshrl.u32 %v3112, 7
  %v3114 = vsub.s32 0, %v3113
  %v3115 = vrot.slane %v2536, %v3114
  %v3116 = vadd.f32 %v3110, %v3115
  %v3117 = vadd.f32 %v3111, %v3115
  %v3120 = vrot.slane %v3117, 7
  %v3121 = vsel %vm3073, %v3120, %v3116
  %v3123 = vmul.f32 %v146, %v3121
  %v3124 = vsel %vm3076, %v3123, 0.0
  %3125 = vadd.xlane.f32.xlu0 %v3124
  %v3126 = vpop.xlane.xlu0 %3125
  %vm3127 = vcmask 1024
  %3128 = vst.msk [vmem:[%s4] sm:$0x3] %vm3127, %v3126
  // Predicated region
  $region18: #{tpu_custom_call.1} parent=0 // pred_check
    _
  $region19: #{tpu_custom_call.1} parent=0 // pred_check_branch
    %3130 = sbr.rel (0) target = $region21
  $region20: #{tpu_custom_call.1} parent=0 // pred_region
    _
  $region21: #{tpu_custom_call.1} parent=0 // pred_fallthru
    _
  // Predicated region
  $region22: #{tpu_custom_call.1} parent=0 // pred_check
    _
  $region23: #{tpu_custom_call.1} parent=0 // pred_check_branch
    %3132 = sbr.rel (0) target = $region25
  $region24: #{tpu_custom_call.1} parent=0 // pred_region
    _
  $region25: #{tpu_custom_call.1} parent=0 // pred_fallthru
    _

</llo_original>
